<compile_context>
chip_gen: v7x
topology: tpu7x:2x2x1
jax: 0.10.0
libtpu: 0.0.40
codegen_flags: <defaults>
</compile_context>

<pallas_src>
import functools

import jax
import jax.numpy as jnp
from jax.experimental import pallas as pl
from jax.experimental.pallas import tpu as pltpu


def _round_up(x, m):
    return ((x + m - 1) // m) * m


def _lane_tile(L, max_tile=1024):
    """Pick a lane tile that divides L and keeps blocks 128-aligned."""
    if L <= max_tile or L % 128 != 0:
        return L
    for t in (1024, 512, 256, 128):
        if L % t == 0:
            return t
    return L


def _silu(z):
    # z * sigmoid(z), in f32; exp runs on the EUP.
    return z * (1.0 / (1.0 + jnp.exp(-z)))


# ---------------------------------------------------------------------------
# Pallas kernels
# ---------------------------------------------------------------------------
def _conv1x1_split_kernel(x_ref, wa_ref, wb_ref, ba_ref, bb_ref, a_ref, b_ref):
    """cv1 fused with chunk(2, dim=1): two (c, Cin) x (Cin, TL) matmuls."""
    x = x_ref[...].astype(jnp.bfloat16)                      # (Cin, TL)
    za = jnp.dot(wa_ref[...], x, preferred_element_type=jnp.float32) + ba_ref[...]
    zb = jnp.dot(wb_ref[...], x, preferred_element_type=jnp.float32) + bb_ref[...]
    a_ref[...] = _silu(za).astype(a_ref.dtype)
    b_ref[...] = _silu(zb).astype(b_ref.dtype)


def _conv1x1_cat_kernel(m_ref, br_ref, wm_ref, wb_ref, bias_ref, o_ref):
    """cv2 fused with the channel concat: out = silu(Wm @ m + Wb @ b + bias)."""
    m = m_ref[...].astype(jnp.bfloat16)                      # (c, TL)
    br = br_ref[...].astype(jnp.bfloat16)                    # (c, TL)
    z = (jnp.dot(wm_ref[...], m, preferred_element_type=jnp.float32)
         + jnp.dot(wb_ref[...], br, preferred_element_type=jnp.float32)
         + bias_ref[...])
    o_ref[...] = _silu(z).astype(o_ref.dtype)


def _bottleneck_kernel(a_ref, mask_ref, w1_ref, b1_ref, w2_ref, b2_ref,
                       o_ref, xp_ref, *, H, W):
    """Bottleneck(c, c, k=((3,3),(3,3)), e=1.0) with shortcut, fully fused.

    Flat padded-width layout: activation is (c, L) with L = H*Wp, Wp = W+2;
    the 2 right-most columns of each row are padding.  The zero-padded image
    is staged in the VMEM scratch `xp_ref` (unwritten scratch == halo zeros),
    and each of the nine 3x3 taps is a contiguous lane window of the scratch,
    so im2col never touches HBM.
    """
    Wp = W + 2
    L = H * Wp
    S = _round_up(Wp + 1, 128)          # 128-aligned store offset into scratch
    c = a_ref.shape[0]

    mask = mask_ref[...]                                     # (1, L): 1 on pixels
    x = a_ref[...].astype(jnp.float32)                       # (c, L)
    xp_ref[...] = jnp.zeros_like(xp_ref)

    def conv3x3_silu(act, w_ref, b_ref):
        # Stage masked activation; zeros elsewhere give the conv halo padding.
        xp_ref[:, S:S + L] = (act * mask).astype(xp_ref.dtype)
        acc = jnp.zeros((c, L), jnp.float32)
        for kh in range(3):
            for kw in range(3):
                off = S + (kh - 1) * Wp + (kw - 1)
                win = xp_ref[:, off:off + L]                 # (c, L) bf16 window
                acc = acc + jnp.dot(w_ref[kh * 3 + kw], win,
                                    preferred_element_type=jnp.float32)
        return _silu(acc + b_ref[...])

    y = conv3x3_silu(x, w1_ref, b1_ref)
    y = conv3x3_silu(y, w2_ref, b2_ref)
    o_ref[...] = (x + y).astype(o_ref.dtype)                 # shortcut add


# ---------------------------------------------------------------------------
# pallas_call wrappers
# ---------------------------------------------------------------------------
def conv1x1_split(xf, *, wa, wb, ba, bb, out_dtype=jnp.bfloat16):
    N, Cin, L = xf.shape
    c = wa.shape[0]
    TL = _lane_tile(L)
    cost = pl.CostEstimate(
        flops=int(2 * N * L * Cin * 2 * c),
        transcendentals=int(N * L * 2 * c),
        bytes_accessed=int(N * Cin * L * 4 + 2 * N * c * L * 2 + 2 * wa.size * 2),
    )
    return pl.pallas_call(
        _conv1x1_split_kernel,
        out_shape=(jax.ShapeDtypeStruct((N, c, L), out_dtype),
                   jax.ShapeDtypeStruct((N, c, L), out_dtype)),
        grid=(N, L // TL),
        in_specs=[
            pl.BlockSpec((None, Cin, TL), lambda n, t: (n, 0, t)),
            pl.BlockSpec((c, Cin), lambda n, t: (0, 0)),
            pl.BlockSpec((c, Cin), lambda n, t: (0, 0)),
            pl.BlockSpec((c, 1), lambda n, t: (0, 0)),
            pl.BlockSpec((c, 1), lambda n, t: (0, 0)),
        ],
        out_specs=(
            pl.BlockSpec((None, c, TL), lambda n, t: (n, 0, t)),
            pl.BlockSpec((None, c, TL), lambda n, t: (n, 0, t)),
        ),
        compiler_params=pltpu.CompilerParams(
            dimension_semantics=("parallel", "parallel")),
        cost_estimate=cost,
    )(xf, wa, wb, ba, bb)


def conv1x1_cat(m, b, *, wm, wb, bias, out_dtype=jnp.float32):
    N, c, L = m.shape
    c2 = wm.shape[0]
    TL = _lane_tile(L)
    cost = pl.CostEstimate(
        flops=int(2 * N * L * 2 * c * c2),
        transcendentals=int(N * L * c2),
        bytes_accessed=int(2 * N * c * L * 2 + N * c2 * L * 4 + 2 * wm.size * 2),
    )
    return pl.pallas_call(
        _conv1x1_cat_kernel,
        out_shape=jax.ShapeDtypeStruct((N, c2, L), out_dtype),
        grid=(N, L // TL),
        in_specs=[
            pl.BlockSpec((None, c, TL), lambda n, t: (n, 0, t)),
            pl.BlockSpec((None, c, TL), lambda n, t: (n, 0, t)),
            pl.BlockSpec((c2, c), lambda n, t: (0, 0)),
            pl.BlockSpec((c2, c), lambda n, t: (0, 0)),
            pl.BlockSpec((c2, 1), lambda n, t: (0, 0)),
        ],
        out_specs=pl.BlockSpec((None, c2, TL), lambda n, t: (n, 0, t)),
        compiler_params=pltpu.CompilerParams(
            dimension_semantics=("parallel", "parallel")),
        cost_estimate=cost,
    )(m, b, wm, wb, bias)


def bottleneck_block(a, mask, *, w1, b1, w2, b2, H, W):
    N, c, L = a.shape
    Wp = W + 2
    S = _round_up(Wp + 1, 128)
    Lc = _round_up(S + L + Wp + 1, 128)   # scratch length (covers all tap windows)
    kernel = functools.partial(_bottleneck_kernel, H=H, W=W)
    cost = pl.CostEstimate(
        flops=int(2 * 2 * 9 * N * L * c * c),
        transcendentals=int(2 * N * L * c),
        bytes_accessed=int(2 * N * c * L * 2 + 2 * w1.size * 2 + mask.size * 4),
    )
    return pl.pallas_call(
        kernel,
        out_shape=jax.ShapeDtypeStruct((N, c, L), a.dtype),
        grid=(N,),
        in_specs=[
            pl.BlockSpec((None, c, L), lambda n: (n, 0, 0)),
            pl.BlockSpec((1, L), lambda n: (0, 0)),
            pl.BlockSpec((9, c, c), lambda n: (0, 0, 0)),
            pl.BlockSpec((c, 1), lambda n: (0, 0)),
            pl.BlockSpec((9, c, c), lambda n: (0, 0, 0)),
            pl.BlockSpec((c, 1), lambda n: (0, 0)),
        ],
        out_specs=pl.BlockSpec((None, c, L), lambda n: (n, 0, 0)),
        scratch_shapes=[pltpu.VMEM((c, Lc), jnp.bfloat16)],
        compiler_params=pltpu.CompilerParams(dimension_semantics=("parallel",)),
        cost_estimate=cost,
    )(a, mask, w1, b1, w2, b2)


# ---------------------------------------------------------------------------
# Parameters (deterministic synthetic, eval-mode BN folded into conv)
# ---------------------------------------------------------------------------
def _fold_bn(w, gamma, beta, mean, var, eps=1e-5):
    scale = gamma / jnp.sqrt(var + eps)
    return w * scale[:, None, None, None], beta - mean * scale


def _init_conv(key, cin, cout, k):
    kw_, kg, kb, km, kv = jax.random.split(key, 5)
    w = 0.1 * jax.random.normal(kw_, (cout, cin, k, k), jnp.float32)   # OIHW
    gamma = 1.0 + 0.1 * jax.random.normal(kg, (cout,), jnp.float32)
    beta = 0.1 * jax.random.normal(kb, (cout,), jnp.float32)
    mean = 0.1 * jax.random.normal(km, (cout,), jnp.float32)
    var = jnp.abs(jax.random.normal(kv, (cout,), jnp.float32)) + 0.5
    return _fold_bn(w, gamma, beta, mean, var)


def init_c2_params(key, c1, c2, n=1, e=0.5):
    c = int(c2 * e)
    keys = jax.random.split(key, 2 + 2 * n)
    return {
        "cv1": _init_conv(keys[0], c1, 2 * c, 1),
        "cv2": _init_conv(keys[1], 2 * c, c2, 1),
        "m": [(_init_conv(keys[2 + 2 * i], c, c, 3),
               _init_conv(keys[3 + 2 * i], c, c, 3)) for i in range(n)],
    }


def prepare_kernel_params(raw):
    """Convert folded OIHW params into the kernel layouts (bf16 weights)."""
    w1, b1 = raw["cv1"]                     # (2c, c1, 1, 1)
    two_c, c1 = w1.shape[0], w1.shape[1]
    c = two_c // 2
    c1p = max(8, _round_up(c1, 8))          # pad Cin for clean MXU contraction
    w1m = jnp.pad(w1[:, :, 0, 0], ((0, 0), (0, c1p - c1)))
    kp = {"cv1": dict(wa=w1m[:c].astype(jnp.bfloat16),
                      wb=w1m[c:].astype(jnp.bfloat16),
                      ba=b1[:c].reshape(c, 1),
                      bb=b1[c:].reshape(c, 1))}
    w2, b2 = raw["cv2"]                     # (c2, 2c, 1, 1)
    w2m = w2[:, :, 0, 0]
    kp["cv2"] = dict(wm=w2m[:, :c].astype(jnp.bfloat16),
                     wb=w2m[:, c:].astype(jnp.bfloat16),
                     bias=b2.reshape(-1, 1))
    kp["m"] = []
    for (wb1_, bb1_), (wb2_, bb2_) in raw["m"]:
        kp["m"].append(dict(
            w1=jnp.transpose(wb1_, (2, 3, 0, 1)).reshape(9, c, c).astype(jnp.bfloat16),
            b1=bb1_.reshape(c, 1),
            w2=jnp.transpose(wb2_, (2, 3, 0, 1)).reshape(9, c, c).astype(jnp.bfloat16),
            b2=bb2_.reshape(c, 1)))
    return kp


# ---------------------------------------------------------------------------
# C2 forward (mirrors the PyTorch module, inference semantics)
# ---------------------------------------------------------------------------
def c2_forward(kparams, x_nchw):
    N, C1, H, W = x_nchw.shape
    Wp = W + 2
    L = H * Wp
    C1p = kparams["cv1"]["wa"].shape[1]

    # NCHW -> channel-padded, width-right-padded, spatially-flattened layout.
    xf = jnp.pad(x_nchw, ((0, 0), (0, C1p - C1), (0, 0), (0, 2))).reshape(N, C1p, L)
    col = jnp.arange(L, dtype=jnp.int32) % Wp
    mask = (col < W).astype(jnp.float32).reshape(1, L)

    a, b = conv1x1_split(xf, **kparams["cv1"])              # cv1 + chunk(2, 1)
    m = a
    for blk in kparams["m"]:                                # n x Bottleneck
        m = bottleneck_block(m, mask, H=H, W=W, **blk)
    out = conv1x1_cat(m, b, **kparams["cv2"])               # cat + cv2
    c2_ch = out.shape[1]
    return out.reshape(N, c2_ch, H, Wp)[..., :W]            # drop width pad


# ---------------------------------------------------------------------------
# Pure-JAX reference (for correctness check)
# ---------------------------------------------------------------------------
def c2_reference(raw, x):
    def conv(x, wb, pad):
        w, b = wb
        y = jax.lax.conv_general_dilated(
            x, w, window_strides=(1, 1), padding=((pad, pad), (pad, pad)),
            dimension_numbers=("NCHW", "OIHW", "NCHW"))
        z = y + b.reshape(1, -1, 1, 1)
        return z * (1.0 / (1.0 + jnp.exp(-z)))

    y = conv(x, raw["cv1"], 0)
    c = y.shape[1] // 2
    a, b = y[:, :c], y[:, c:]
    m = a
    for blk1, blk2 in raw["m"]:
        m = m + conv(conv(m, blk1, 1), blk2, 1)
    return conv(jnp.concatenate([m, b], axis=1), raw["cv2"], 0)


if __name__ == "__main__":
    key = jax.random.PRNGKey(0)
    kx, kp = jax.random.split(key)

    N, c1, c2, H, W, n = 2, 4, 16, 16, 16, 1
    x = jax.random.normal(kx, (N, c1, H, W), jnp.float32)   # NCHW input
    raw = init_c2_params(kp, c1, c2, n=n)
    kparams = prepare_kernel_params(raw)

    out = jax.jit(c2_forward)(kparams, x)
    jax.block_until_ready(out)

    assert out.shape == (N, c2, H, W), out.shape
    ref = c2_reference(raw, x)
    err = float(jnp.max(jnp.abs(out - ref)))
    assert err < 5e-2, f"max abs err vs reference: {err}"
    print("KERNEL_OK")
</pallas_src>

<mosaic_0001>
module attributes {stable_mosaic.version = 11 : i64} {
  func.func @_conv1x1_split_kernel(%arg0: i32, %arg1: i32, %arg2: memref<1x8x288xf32, #tpu.memory_space<vmem>>, %arg3: memref<8x8xbf16, #tpu.memory_space<vmem>>, %arg4: memref<8x8xbf16, #tpu.memory_space<vmem>>, %arg5: memref<8x1xf32, #tpu.memory_space<vmem>>, %arg6: memref<8x1xf32, #tpu.memory_space<vmem>>, %arg7: memref<1x8x288xbf16, #tpu.memory_space<vmem>>, %arg8: memref<1x8x288xbf16, #tpu.memory_space<vmem>>) attributes {dimension_semantics = [#tpu.dimension_semantics<parallel>, #tpu.dimension_semantics<parallel>], iteration_bounds = array<i64: 2, 1>, scalar_prefetch = 0 : i64, scratch_operands = 0 : i64, tpu.core_type = #tpu.core_type<tc>, window_params = [{transform_indices = @transform_0, window_bounds = array<i64: 1, 8, 288>}, {pipeline_mode = #tpu.pipeline_mode<synchronous>, transform_indices = @transform_1, window_bounds = array<i64: 8, 8>}, {pipeline_mode = #tpu.pipeline_mode<synchronous>, transform_indices = @transform_2, window_bounds = array<i64: 8, 8>}, {pipeline_mode = #tpu.pipeline_mode<synchronous>, transform_indices = @transform_3, window_bounds = array<i64: 8, 1>}, {pipeline_mode = #tpu.pipeline_mode<synchronous>, transform_indices = @transform_4, window_bounds = array<i64: 8, 1>}, {transform_indices = @transform_5, window_bounds = array<i64: 1, 8, 288>}, {transform_indices = @transform_6, window_bounds = array<i64: 1, 8, 288>}]} {
    %c0 = arith.constant 0 : index
    %c0_0 = arith.constant 0 : index
    %c0_1 = arith.constant 0 : index
    %0 = vector.load %arg2[%c0, %c0_0, %c0_1] : memref<1x8x288xf32, #tpu.memory_space<vmem>>, vector<1x8x288xf32>
    %1 = vector.shape_cast %0 : vector<1x8x288xf32> to vector<8x288xf32>
    %2 = arith.truncf %1 : vector<8x288xf32> to vector<8x288xbf16>
    %c0_2 = arith.constant 0 : index
    %c0_3 = arith.constant 0 : index
    %3 = vector.load %arg3[%c0_2, %c0_3] : memref<8x8xbf16, #tpu.memory_space<vmem>>, vector<8x8xbf16>
    %cst = arith.constant dense<0.000000e+00> : vector<8x288xf32>
    %4 = tpu.matmul %3, %2, %cst {dimension_numbers = #tpu.dot_dimension_numbers<[1], [0], [0], [1], [0, 0, 1, 1], [], []>} : vector<8x8xbf16>, vector<8x288xbf16>, vector<8x288xf32> -> vector<8x288xf32>
    %c0_4 = arith.constant 0 : index
    %c0_5 = arith.constant 0 : index
    %5 = vector.load %arg5[%c0_4, %c0_5] : memref<8x1xf32, #tpu.memory_space<vmem>>, vector<8x1xf32>
    %6 = vector.broadcast %5 : vector<8x1xf32> to vector<8x288xf32>
    %7 = arith.addf %4, %6 : vector<8x288xf32>
    %c0_6 = arith.constant 0 : index
    %c0_7 = arith.constant 0 : index
    %8 = vector.load %arg4[%c0_6, %c0_7] : memref<8x8xbf16, #tpu.memory_space<vmem>>, vector<8x8xbf16>
    %cst_8 = arith.constant dense<0.000000e+00> : vector<8x288xf32>
    %9 = tpu.matmul %8, %2, %cst_8 {dimension_numbers = #tpu.dot_dimension_numbers<[1], [0], [0], [1], [0, 0, 1, 1], [], []>} : vector<8x8xbf16>, vector<8x288xbf16>, vector<8x288xf32> -> vector<8x288xf32>
    %c0_9 = arith.constant 0 : index
    %c0_10 = arith.constant 0 : index
    %10 = vector.load %arg6[%c0_9, %c0_10] : memref<8x1xf32, #tpu.memory_space<vmem>>, vector<8x1xf32>
    %11 = vector.broadcast %10 : vector<8x1xf32> to vector<8x288xf32>
    %12 = arith.addf %9, %11 : vector<8x288xf32>
    %cst_11 = arith.constant 0.000000e+00 : f32
    %13 = vector.broadcast %cst_11 : f32 to vector<8x288xf32>
    %14 = arith.subf %13, %7 : vector<8x288xf32>
    %15 = math.exp %14 : vector<8x288xf32>
    %cst_12 = arith.constant 1.000000e+00 : f32
    %16 = vector.broadcast %cst_12 : f32 to vector<8x288xf32>
    %17 = arith.addf %16, %15 : vector<8x288xf32>
    %cst_13 = arith.constant 1.000000e+00 : f32
    %18 = vector.broadcast %cst_13 : f32 to vector<8x288xf32>
    %19 = arith.divf %18, %17 : vector<8x288xf32>
    %20 = arith.mulf %7, %19 : vector<8x288xf32>
    %21 = arith.truncf %20 : vector<8x288xf32> to vector<8x288xbf16>
    %c0_14 = arith.constant 0 : index
    %c0_15 = arith.constant 0 : index
    %c0_16 = arith.constant 0 : index
    %22 = vector.load %arg7[%c0_14, %c0_15, %c0_16] : memref<1x8x288xbf16, #tpu.memory_space<vmem>>, vector<1x8x288xbf16>
    %23 = vector.shape_cast %22 : vector<1x8x288xbf16> to vector<8x288xbf16>
    %24 = vector.shape_cast %21 : vector<8x288xbf16> to vector<1x8x288xbf16>
    tpu.vector_store %arg7[%c0_14, %c0_15, %c0_16], %24 {strides = array<i32>} : memref<1x8x288xbf16, #tpu.memory_space<vmem>>, vector<1x8x288xbf16>,
    %cst_17 = arith.constant 0.000000e+00 : f32
    %25 = vector.broadcast %cst_17 : f32 to vector<8x288xf32>
    %26 = arith.subf %25, %12 : vector<8x288xf32>
    %27 = math.exp %26 : vector<8x288xf32>
    %cst_18 = arith.constant 1.000000e+00 : f32
    %28 = vector.broadcast %cst_18 : f32 to vector<8x288xf32>
    %29 = arith.addf %28, %27 : vector<8x288xf32>
    %cst_19 = arith.constant 1.000000e+00 : f32
    %30 = vector.broadcast %cst_19 : f32 to vector<8x288xf32>
    %31 = arith.divf %30, %29 : vector<8x288xf32>
    %32 = arith.mulf %12, %31 : vector<8x288xf32>
    %33 = arith.truncf %32 : vector<8x288xf32> to vector<8x288xbf16>
    %c0_20 = arith.constant 0 : index
    %c0_21 = arith.constant 0 : index
    %c0_22 = arith.constant 0 : index
    %34 = vector.load %arg8[%c0_20, %c0_21, %c0_22] : memref<1x8x288xbf16, #tpu.memory_space<vmem>>, vector<1x8x288xbf16>
    %35 = vector.shape_cast %34 : vector<1x8x288xbf16> to vector<8x288xbf16>
    %36 = vector.shape_cast %33 : vector<8x288xbf16> to vector<1x8x288xbf16>
    tpu.vector_store %arg8[%c0_20, %c0_21, %c0_22], %36 {strides = array<i32>} : memref<1x8x288xbf16, #tpu.memory_space<vmem>>, vector<1x8x288xbf16>,
    return
  }
  func.func @transform_0(%arg0: i32, %arg1: i32) -> (i32, i32, i32) {
    %c0_i32 = arith.constant 0 : i32
    %c0_i32_0 = arith.constant 0 : i32
    return %arg0, %c0_i32, %arg1 : i32, i32, i32
  }
  func.func @transform_1(%arg0: i32, %arg1: i32) -> (i32, i32) {
    %c0_i32 = arith.constant 0 : i32
    %c0_i32_0 = arith.constant 0 : i32
    %c0_i32_1 = arith.constant 0 : i32
    return %c0_i32, %c0_i32_0 : i32, i32
  }
  func.func @transform_2(%arg0: i32, %arg1: i32) -> (i32, i32) {
    %c0_i32 = arith.constant 0 : i32
    %c0_i32_0 = arith.constant 0 : i32
    %c0_i32_1 = arith.constant 0 : i32
    return %c0_i32, %c0_i32_0 : i32, i32
  }
  func.func @transform_3(%arg0: i32, %arg1: i32) -> (i32, i32) {
    %c0_i32 = arith.constant 0 : i32
    %c0_i32_0 = arith.constant 0 : i32
    %c0_i32_1 = arith.constant 0 : i32
    return %c0_i32, %c0_i32_0 : i32, i32
  }
  func.func @transform_4(%arg0: i32, %arg1: i32) -> (i32, i32) {
    %c0_i32 = arith.constant 0 : i32
    %c0_i32_0 = arith.constant 0 : i32
    %c0_i32_1 = arith.constant 0 : i32
    return %c0_i32, %c0_i32_0 : i32, i32
  }
  func.func @transform_5(%arg0: i32, %arg1: i32) -> (i32, i32, i32) {
    %c0_i32 = arith.constant 0 : i32
    %c0_i32_0 = arith.constant 0 : i32
    return %arg0, %c0_i32, %arg1 : i32, i32, i32
  }
  func.func @transform_6(%arg0: i32, %arg1: i32) -> (i32, i32, i32) {
    %c0_i32 = arith.constant 0 : i32
    %c0_i32_0 = arith.constant 0 : i32
    return %arg0, %c0_i32, %arg1 : i32, i32, i32
  }
}

module attributes {stable_mosaic.version = 11 : i64} {
  func.func @_conv1x1_cat_kernel(%arg0: i32, %arg1: i32, %arg2: memref<1x8x288xbf16, #tpu.memory_space<vmem>>, %arg3: memref<1x8x288xbf16, #tpu.memory_space<vmem>>, %arg4: memref<16x8xbf16, #tpu.memory_space<vmem>>, %arg5: memref<16x8xbf16, #tpu.memory_space<vmem>>, %arg6: memref<16x1xf32, #tpu.memory_space<vmem>>, %arg7: memref<1x16x288xf32, #tpu.memory_space<vmem>>) attributes {dimension_semantics = [#tpu.dimension_semantics<parallel>, #tpu.dimension_semantics<parallel>], iteration_bounds = array<i64: 2, 1>, scalar_prefetch = 0 : i64, scratch_operands = 0 : i64, tpu.core_type = #tpu.core_type<tc>, window_params = [{transform_indices = @transform_0, window_bounds = array<i64: 1, 8, 288>}, {transform_indices = @transform_1, window_bounds = array<i64: 1, 8, 288>}, {pipeline_mode = #tpu.pipeline_mode<synchronous>, transform_indices = @transform_2, window_bounds = array<i64: 16, 8>}, {pipeline_mode = #tpu.pipeline_mode<synchronous>, transform_indices = @transform_3, window_bounds = array<i64: 16, 8>}, {pipeline_mode = #tpu.pipeline_mode<synchronous>, transform_indices = @transform_4, window_bounds = array<i64: 16, 1>}, {transform_indices = @transform_5, window_bounds = array<i64: 1, 16, 288>}]} {
    %c0 = arith.constant 0 : index
    %c0_0 = arith.constant 0 : index
    %c0_1 = arith.constant 0 : index
    %0 = vector.load %arg2[%c0, %c0_0, %c0_1] : memref<1x8x288xbf16, #tpu.memory_space<vmem>>, vector<1x8x288xbf16>
    %1 = vector.shape_cast %0 : vector<1x8x288xbf16> to vector<8x288xbf16>
    %c0_2 = arith.constant 0 : index
    %c0_3 = arith.constant 0 : index
    %c0_4 = arith.constant 0 : index
    %2 = vector.load %arg3[%c0_2, %c0_3, %c0_4] : memref<1x8x288xbf16, #tpu.memory_space<vmem>>, vector<1x8x288xbf16>
    %3 = vector.shape_cast %2 : vector<1x8x288xbf16> to vector<8x288xbf16>
    %c0_5 = arith.constant 0 : index
    %c0_6 = arith.constant 0 : index
    %4 = vector.load %arg4[%c0_5, %c0_6] : memref<16x8xbf16, #tpu.memory_space<vmem>>, vector<16x8xbf16>
    %cst = arith.constant dense<0.000000e+00> : vector<16x288xf32>
    %5 = tpu.matmul %4, %1, %cst {dimension_numbers = #tpu.dot_dimension_numbers<[1], [0], [0], [1], [0, 0, 1, 1], [], []>} : vector<16x8xbf16>, vector<8x288xbf16>, vector<16x288xf32> -> vector<16x288xf32>
    %c0_7 = arith.constant 0 : index
    %c0_8 = arith.constant 0 : index
    %6 = vector.load %arg5[%c0_7, %c0_8] : memref<16x8xbf16, #tpu.memory_space<vmem>>, vector<16x8xbf16>
    %cst_9 = arith.constant dense<0.000000e+00> : vector<16x288xf32>
    %7 = tpu.matmul %6, %3, %cst_9 {dimension_numbers = #tpu.dot_dimension_numbers<[1], [0], [0], [1], [0, 0, 1, 1], [], []>} : vector<16x8xbf16>, vector<8x288xbf16>, vector<16x288xf32> -> vector<16x288xf32>
    %8 = arith.addf %5, %7 : vector<16x288xf32>
    %c0_10 = arith.constant 0 : index
    %c0_11 = arith.constant 0 : index
    %9 = vector.load %arg6[%c0_10, %c0_11] : memref<16x1xf32, #tpu.memory_space<vmem>>, vector<16x1xf32>
    %10 = vector.broadcast %9 : vector<16x1xf32> to vector<16x288xf32>
    %11 = arith.addf %8, %10 : vector<16x288xf32>
    %cst_12 = arith.constant 0.000000e+00 : f32
    %12 = vector.broadcast %cst_12 : f32 to vector<16x288xf32>
    %13 = arith.subf %12, %11 : vector<16x288xf32>
    %14 = math.exp %13 : vector<16x288xf32>
    %cst_13 = arith.constant 1.000000e+00 : f32
    %15 = vector.broadcast %cst_13 : f32 to vector<16x288xf32>
    %16 = arith.addf %15, %14 : vector<16x288xf32>
    %cst_14 = arith.constant 1.000000e+00 : f32
    %17 = vector.broadcast %cst_14 : f32 to vector<16x288xf32>
    %18 = arith.divf %17, %16 : vector<16x288xf32>
    %19 = arith.mulf %11, %18 : vector<16x288xf32>
    %c0_15 = arith.constant 0 : index
    %c0_16 = arith.constant 0 : index
    %c0_17 = arith.constant 0 : index
    %20 = vector.load %arg7[%c0_15, %c0_16, %c0_17] : memref<1x16x288xf32, #tpu.memory_space<vmem>>, vector<1x16x288xf32>
    %21 = vector.shape_cast %20 : vector<1x16x288xf32> to vector<16x288xf32>
    %22 = vector.shape_cast %19 : vector<16x288xf32> to vector<1x16x288xf32>
    tpu.vector_store %arg7[%c0_15, %c0_16, %c0_17], %22 {strides = array<i32>} : memref<1x16x288xf32, #tpu.memory_space<vmem>>, vector<1x16x288xf32>,
    return
  }
  func.func @transform_0(%arg0: i32, %arg1: i32) -> (i32, i32, i32) {
    %c0_i32 = arith.constant 0 : i32
    %c0_i32_0 = arith.constant 0 : i32
    return %arg0, %c0_i32, %arg1 : i32, i32, i32
  }
  func.func @transform_1(%arg0: i32, %arg1: i32) -> (i32, i32, i32) {
    %c0_i32 = arith.constant 0 : i32
    %c0_i32_0 = arith.constant 0 : i32
    return %arg0, %c0_i32, %arg1 : i32, i32, i32
  }
  func.func @transform_2(%arg0: i32, %arg1: i32) -> (i32, i32) {
    %c0_i32 = arith.constant 0 : i32
    %c0_i32_0 = arith.constant 0 : i32
    %c0_i32_1 = arith.constant 0 : i32
    return %c0_i32, %c0_i32_0 : i32, i32
  }
  func.func @transform_3(%arg0: i32, %arg1: i32) -> (i32, i32) {
    %c0_i32 = arith.constant 0 : i32
    %c0_i32_0 = arith.constant 0 : i32
    %c0_i32_1 = arith.constant 0 : i32
    return %c0_i32, %c0_i32_0 : i32, i32
  }
  func.func @transform_4(%arg0: i32, %arg1: i32) -> (i32, i32) {
    %c0_i32 = arith.constant 0 : i32
    %c0_i32_0 = arith.constant 0 : i32
    %c0_i32_1 = arith.constant 0 : i32
    return %c0_i32, %c0_i32_0 : i32, i32
  }
  func.func @transform_5(%arg0: i32, %arg1: i32) -> (i32, i32, i32) {
    %c0_i32 = arith.constant 0 : i32
    %c0_i32_0 = arith.constant 0 : i32
    return %arg0, %c0_i32, %arg1 : i32, i32, i32
  }
}

module attributes {stable_mosaic.version = 11 : i64} {
  func.func @_bottleneck_kernel(%arg0: i32, %arg1: memref<1x8x288xbf16, #tpu.memory_space<vmem>>, %arg2: memref<1x288xf32, #tpu.memory_space<vmem>>, %arg3: memref<9x8x8xbf16, #tpu.memory_space<vmem>>, %arg4: memref<8x1xf32, #tpu.memory_space<vmem>>, %arg5: memref<9x8x8xbf16, #tpu.memory_space<vmem>>, %arg6: memref<8x1xf32, #tpu.memory_space<vmem>>, %arg7: memref<1x8x288xbf16, #tpu.memory_space<vmem>>, %arg8: memref<8x512xbf16, #tpu.memory_space<vmem>>) attributes {dimension_semantics = [#tpu.dimension_semantics<parallel>], iteration_bounds = array<i64: 2>, scalar_prefetch = 0 : i64, scratch_operands = 1 : i64, tpu.core_type = #tpu.core_type<tc>, window_params = [{transform_indices = @transform_0, window_bounds = array<i64: 1, 8, 288>}, {pipeline_mode = #tpu.pipeline_mode<synchronous>, transform_indices = @transform_1, window_bounds = array<i64: 1, 288>}, {pipeline_mode = #tpu.pipeline_mode<synchronous>, transform_indices = @transform_2, window_bounds = array<i64: 9, 8, 8>}, {pipeline_mode = #tpu.pipeline_mode<synchronous>, transform_indices = @transform_3, window_bounds = array<i64: 8, 1>}, {pipeline_mode = #tpu.pipeline_mode<synchronous>, transform_indices = @transform_4, window_bounds = array<i64: 9, 8, 8>}, {pipeline_mode = #tpu.pipeline_mode<synchronous>, transform_indices = @transform_5, window_bounds = array<i64: 8, 1>}, {transform_indices = @transform_6, window_bounds = array<i64: 1, 8, 288>}]} {
    %c0 = arith.constant 0 : index
    %c0_0 = arith.constant 0 : index
    %0 = vector.load %arg2[%c0, %c0_0] : memref<1x288xf32, #tpu.memory_space<vmem>>, vector<1x288xf32>
    %c0_1 = arith.constant 0 : index
    %c0_2 = arith.constant 0 : index
    %c0_3 = arith.constant 0 : index
    %1 = vector.load %arg1[%c0_1, %c0_2, %c0_3] : memref<1x8x288xbf16, #tpu.memory_space<vmem>>, vector<1x8x288xbf16>
    %2 = vector.shape_cast %1 : vector<1x8x288xbf16> to vector<8x288xbf16>
    %3 = arith.extf %2 : vector<8x288xbf16> to vector<8x288xf32>
    %cst = arith.constant 0.000000e+00 : bf16
    %4 = vector.broadcast %cst : bf16 to vector<8x512xbf16>
    %c0_4 = arith.constant 0 : index
    %c0_5 = arith.constant 0 : index
    %5 = vector.load %arg8[%c0_4, %c0_5] : memref<8x512xbf16, #tpu.memory_space<vmem>>, vector<8x512xbf16>
    tpu.vector_store %arg8[%c0_4, %c0_5], %4 {strides = array<i32>} : memref<8x512xbf16, #tpu.memory_space<vmem>>, vector<8x512xbf16>,
    %6 = vector.broadcast %0 : vector<1x288xf32> to vector<8x288xf32>
    %7 = arith.mulf %3, %6 : vector<8x288xf32>
    %8 = arith.truncf %7 : vector<8x288xf32> to vector<8x288xbf16>
    %c0_6 = arith.constant 0 : index
    %c128 = arith.constant 128 : index
    %9 = vector.load %arg8[%c0_6, %c128] : memref<8x512xbf16, #tpu.memory_space<vmem>>, vector<8x288xbf16>
    tpu.vector_store %arg8[%c0_6, %c128], %8 {strides = array<i32>} : memref<8x512xbf16, #tpu.memory_space<vmem>>, vector<8x288xbf16>,
    %cst_7 = arith.constant 0.000000e+00 : f32
    %10 = vector.broadcast %cst_7 : f32 to vector<8x288xf32>
    %c0_8 = arith.constant 0 : index
    %c109 = arith.constant 109 : index
    %11 = vector.load %arg8[%c0_8, %c109] : memref<8x512xbf16, #tpu.memory_space<vmem>>, vector<8x288xbf16>
    %c0_9 = arith.constant 0 : index
    %c0_10 = arith.constant 0 : index
    %c0_11 = arith.constant 0 : index
    %12 = vector.load %arg3[%c0_9, %c0_10, %c0_11] : memref<9x8x8xbf16, #tpu.memory_space<vmem>>, vector<1x8x8xbf16>
    %13 = vector.shape_cast %12 : vector<1x8x8xbf16> to vector<8x8xbf16>
    %cst_12 = arith.constant dense<0.000000e+00> : vector<8x288xf32>
    %14 = tpu.matmul %13, %11, %cst_12 {dimension_numbers = #tpu.dot_dimension_numbers<[1], [0], [0], [1], [0, 0, 1, 1], [], []>} : vector<8x8xbf16>, vector<8x288xbf16>, vector<8x288xf32> -> vector<8x288xf32>
    %15 = arith.addf %10, %14 : vector<8x288xf32>
    %c0_13 = arith.constant 0 : index
    %c110 = arith.constant 110 : index
    %16 = vector.load %arg8[%c0_13, %c110] : memref<8x512xbf16, #tpu.memory_space<vmem>>, vector<8x288xbf16>
    %c1 = arith.constant 1 : index
    %c0_14 = arith.constant 0 : index
    %c0_15 = arith.constant 0 : index
    %17 = vector.load %arg3[%c1, %c0_14, %c0_15] : memref<9x8x8xbf16, #tpu.memory_space<vmem>>, vector<1x8x8xbf16>
    %18 = vector.shape_cast %17 : vector<1x8x8xbf16> to vector<8x8xbf16>
    %cst_16 = arith.constant dense<0.000000e+00> : vector<8x288xf32>
    %19 = tpu.matmul %18, %16, %cst_16 {dimension_numbers = #tpu.dot_dimension_numbers<[1], [0], [0], [1], [0, 0, 1, 1], [], []>} : vector<8x8xbf16>, vector<8x288xbf16>, vector<8x288xf32> -> vector<8x288xf32>
    %20 = arith.addf %15, %19 : vector<8x288xf32>
    %c0_17 = arith.constant 0 : index
    %c111 = arith.constant 111 : index
    %21 = vector.load %arg8[%c0_17, %c111] : memref<8x512xbf16, #tpu.memory_space<vmem>>, vector<8x288xbf16>
    %c2 = arith.constant 2 : index
    %c0_18 = arith.constant 0 : index
    %c0_19 = arith.constant 0 : index
    %22 = vector.load %arg3[%c2, %c0_18, %c0_19] : memref<9x8x8xbf16, #tpu.memory_space<vmem>>, vector<1x8x8xbf16>
    %23 = vector.shape_cast %22 : vector<1x8x8xbf16> to vector<8x8xbf16>
    %cst_20 = arith.constant dense<0.000000e+00> : vector<8x288xf32>
    %24 = tpu.matmul %23, %21, %cst_20 {dimension_numbers = #tpu.dot_dimension_numbers<[1], [0], [0], [1], [0, 0, 1, 1], [], []>} : vector<8x8xbf16>, vector<8x288xbf16>, vector<8x288xf32> -> vector<8x288xf32>
    %25 = arith.addf %20, %24 : vector<8x288xf32>
    %c0_21 = arith.constant 0 : index
    %c127 = arith.constant 127 : index
    %26 = vector.load %arg8[%c0_21, %c127] : memref<8x512xbf16, #tpu.memory_space<vmem>>, vector<8x288xbf16>
    %c3 = arith.constant 3 : index
    %c0_22 = arith.constant 0 : index
    %c0_23 = arith.constant 0 : index
    %27 = vector.load %arg3[%c3, %c0_22, %c0_23] : memref<9x8x8xbf16, #tpu.memory_space<vmem>>, vector<1x8x8xbf16>
    %28 = vector.shape_cast %27 : vector<1x8x8xbf16> to vector<8x8xbf16>
    %cst_24 = arith.constant dense<0.000000e+00> : vector<8x288xf32>
    %29 = tpu.matmul %28, %26, %cst_24 {dimension_numbers = #tpu.dot_dimension_numbers<[1], [0], [0], [1], [0, 0, 1, 1], [], []>} : vector<8x8xbf16>, vector<8x288xbf16>, vector<8x288xf32> -> vector<8x288xf32>
    %30 = arith.addf %25, %29 : vector<8x288xf32>
    %c0_25 = arith.constant 0 : index
    %c128_26 = arith.constant 128 : index
    %31 = vector.load %arg8[%c0_25, %c128_26] : memref<8x512xbf16, #tpu.memory_space<vmem>>, vector<8x288xbf16>
    %c4 = arith.constant 4 : index
    %c0_27 = arith.constant 0 : index
    %c0_28 = arith.constant 0 : index
    %32 = vector.load %arg3[%c4, %c0_27, %c0_28] : memref<9x8x8xbf16, #tpu.memory_space<vmem>>, vector<1x8x8xbf16>
    %33 = vector.shape_cast %32 : vector<1x8x8xbf16> to vector<8x8xbf16>
    %cst_29 = arith.constant dense<0.000000e+00> : vector<8x288xf32>
    %34 = tpu.matmul %33, %31, %cst_29 {dimension_numbers = #tpu.dot_dimension_numbers<[1], [0], [0], [1], [0, 0, 1, 1], [], []>} : vector<8x8xbf16>, vector<8x288xbf16>, vector<8x288xf32> -> vector<8x288xf32>
    %35 = arith.addf %30, %34 : vector<8x288xf32>
    %c0_30 = arith.constant 0 : index
    %c129 = arith.constant 129 : index
    %36 = vector.load %arg8[%c0_30, %c129] : memref<8x512xbf16, #tpu.memory_space<vmem>>, vector<8x288xbf16>
    %c5 = arith.constant 5 : index
    %c0_31 = arith.constant 0 : index
    %c0_32 = arith.constant 0 : index
    %37 = vector.load %arg3[%c5, %c0_31, %c0_32] : memref<9x8x8xbf16, #tpu.memory_space<vmem>>, vector<1x8x8xbf16>
    %38 = vector.shape_cast %37 : vector<1x8x8xbf16> to vector<8x8xbf16>
    %cst_33 = arith.constant dense<0.000000e+00> : vector<8x288xf32>
    %39 = tpu.matmul %38, %36, %cst_33 {dimension_numbers = #tpu.dot_dimension_numbers<[1], [0], [0], [1], [0, 0, 1, 1], [], []>} : vector<8x8xbf16>, vector<8x288xbf16>, vector<8x288xf32> -> vector<8x288xf32>
    %40 = arith.addf %35, %39 : vector<8x288xf32>
    %c0_34 = arith.constant 0 : index
    %c145 = arith.constant 145 : index
    %41 = vector.load %arg8[%c0_34, %c145] : memref<8x512xbf16, #tpu.memory_space<vmem>>, vector<8x288xbf16>
    %c6 = arith.constant 6 : index
    %c0_35 = arith.constant 0 : index
    %c0_36 = arith.constant 0 : index
    %42 = vector.load %arg3[%c6, %c0_35, %c0_36] : memref<9x8x8xbf16, #tpu.memory_space<vmem>>, vector<1x8x8xbf16>
    %43 = vector.shape_cast %42 : vector<1x8x8xbf16> to vector<8x8xbf16>
    %cst_37 = arith.constant dense<0.000000e+00> : vector<8x288xf32>
    %44 = tpu.matmul %43, %41, %cst_37 {dimension_numbers = #tpu.dot_dimension_numbers<[1], [0], [0], [1], [0, 0, 1, 1], [], []>} : vector<8x8xbf16>, vector<8x288xbf16>, vector<8x288xf32> -> vector<8x288xf32>
    %45 = arith.addf %40, %44 : vector<8x288xf32>
    %c0_38 = arith.constant 0 : index
    %c146 = arith.constant 146 : index
    %46 = vector.load %arg8[%c0_38, %c146] : memref<8x512xbf16, #tpu.memory_space<vmem>>, vector<8x288xbf16>
    %c7 = arith.constant 7 : index
    %c0_39 = arith.constant 0 : index
    %c0_40 = arith.constant 0 : index
    %47 = vector.load %arg3[%c7, %c0_39, %c0_40] : memref<9x8x8xbf16, #tpu.memory_space<vmem>>, vector<1x8x8xbf16>
    %48 = vector.shape_cast %47 : vector<1x8x8xbf16> to vector<8x8xbf16>
    %cst_41 = arith.constant dense<0.000000e+00> : vector<8x288xf32>
    %49 = tpu.matmul %48, %46, %cst_41 {dimension_numbers = #tpu.dot_dimension_numbers<[1], [0], [0], [1], [0, 0, 1, 1], [], []>} : vector<8x8xbf16>, vector<8x288xbf16>, vector<8x288xf32> -> vector<8x288xf32>
    %50 = arith.addf %45, %49 : vector<8x288xf32>
    %c0_42 = arith.constant 0 : index
    %c147 = arith.constant 147 : index
    %51 = vector.load %arg8[%c0_42, %c147] : memref<8x512xbf16, #tpu.memory_space<vmem>>, vector<8x288xbf16>
    %c8 = arith.constant 8 : index
    %c0_43 = arith.constant 0 : index
    %c0_44 = arith.constant 0 : index
    %52 = vector.load %arg3[%c8, %c0_43, %c0_44] : memref<9x8x8xbf16, #tpu.memory_space<vmem>>, vector<1x8x8xbf16>
    %53 = vector.shape_cast %52 : vector<1x8x8xbf16> to vector<8x8xbf16>
    %cst_45 = arith.constant dense<0.000000e+00> : vector<8x288xf32>
    %54 = tpu.matmul %53, %51, %cst_45 {dimension_numbers = #tpu.dot_dimension_numbers<[1], [0], [0], [1], [0, 0, 1, 1], [], []>} : vector<8x8xbf16>, vector<8x288xbf16>, vector<8x288xf32> -> vector<8x288xf32>
    %55 = arith.addf %50, %54 : vector<8x288xf32>
    %c0_46 = arith.constant 0 : index
    %c0_47 = arith.constant 0 : index
    %56 = vector.load %arg4[%c0_46, %c0_47] : memref<8x1xf32, #tpu.memory_space<vmem>>, vector<8x1xf32>
    %57 = vector.broadcast %56 : vector<8x1xf32> to vector<8x288xf32>
    %58 = arith.addf %55, %57 : vector<8x288xf32>
    %cst_48 = arith.constant 0.000000e+00 : f32
    %59 = vector.broadcast %cst_48 : f32 to vector<8x288xf32>
    %60 = arith.subf %59, %58 : vector<8x288xf32>
    %61 = math.exp %60 : vector<8x288xf32>
    %cst_49 = arith.constant 1.000000e+00 : f32
    %62 = vector.broadcast %cst_49 : f32 to vector<8x288xf32>
    %63 = arith.addf %62, %61 : vector<8x288xf32>
    %cst_50 = arith.constant 1.000000e+00 : f32
    %64 = vector.broadcast %cst_50 : f32 to vector<8x288xf32>
    %65 = arith.divf %64, %63 : vector<8x288xf32>
    %66 = arith.mulf %58, %65 : vector<8x288xf32>
    %67 = vector.broadcast %0 : vector<1x288xf32> to vector<8x288xf32>
    %68 = arith.mulf %66, %67 : vector<8x288xf32>
    %69 = arith.truncf %68 : vector<8x288xf32> to vector<8x288xbf16>
    %c0_51 = arith.constant 0 : index
    %c128_52 = arith.constant 128 : index
    %70 = vector.load %arg8[%c0_51, %c128_52] : memref<8x512xbf16, #tpu.memory_space<vmem>>, vector<8x288xbf16>
    tpu.vector_store %arg8[%c0_51, %c128_52], %69 {strides = array<i32>} : memref<8x512xbf16, #tpu.memory_space<vmem>>, vector<8x288xbf16>,
    %cst_53 = arith.constant 0.000000e+00 : f32
    %71 = vector.broadcast %cst_53 : f32 to vector<8x288xf32>
    %c0_54 = arith.constant 0 : index
    %c109_55 = arith.constant 109 : index
    %72 = vector.load %arg8[%c0_54, %c109_55] : memref<8x512xbf16, #tpu.memory_space<vmem>>, vector<8x288xbf16>
    %c0_56 = arith.constant 0 : index
    %c0_57 = arith.constant 0 : index
    %c0_58 = arith.constant 0 : index
    %73 = vector.load %arg5[%c0_56, %c0_57, %c0_58] : memref<9x8x8xbf16, #tpu.memory_space<vmem>>, vector<1x8x8xbf16>
    %74 = vector.shape_cast %73 : vector<1x8x8xbf16> to vector<8x8xbf16>
    %cst_59 = arith.constant dense<0.000000e+00> : vector<8x288xf32>
    %75 = tpu.matmul %74, %72, %cst_59 {dimension_numbers = #tpu.dot_dimension_numbers<[1], [0], [0], [1], [0, 0, 1, 1], [], []>} : vector<8x8xbf16>, vector<8x288xbf16>, vector<8x288xf32> -> vector<8x288xf32>
    %76 = arith.addf %71, %75 : vector<8x288xf32>
    %c0_60 = arith.constant 0 : index
    %c110_61 = arith.constant 110 : index
    %77 = vector.load %arg8[%c0_60, %c110_61] : memref<8x512xbf16, #tpu.memory_space<vmem>>, vector<8x288xbf16>
    %c1_62 = arith.constant 1 : index
    %c0_63 = arith.constant 0 : index
    %c0_64 = arith.constant 0 : index
    %78 = vector.load %arg5[%c1_62, %c0_63, %c0_64] : memref<9x8x8xbf16, #tpu.memory_space<vmem>>, vector<1x8x8xbf16>
    %79 = vector.shape_cast %78 : vector<1x8x8xbf16> to vector<8x8xbf16>
    %cst_65 = arith.constant dense<0.000000e+00> : vector<8x288xf32>
    %80 = tpu.matmul %79, %77, %cst_65 {dimension_numbers = #tpu.dot_dimension_numbers<[1], [0], [0], [1], [0, 0, 1, 1], [], []>} : vector<8x8xbf16>, vector<8x288xbf16>, vector<8x288xf32> -> vector<8x288xf32>
    %81 = arith.addf %76, %80 : vector<8x288xf32>
    %c0_66 = arith.constant 0 : index
    %c111_67 = arith.constant 111 : index
    %82 = vector.load %arg8[%c0_66, %c111_67] : memref<8x512xbf16, #tpu.memory_space<vmem>>, vector<8x288xbf16>
    %c2_68 = arith.constant 2 : index
    %c0_69 = arith.constant 0 : index
    %c0_70 = arith.constant 0 : index
    %83 = vector.load %arg5[%c2_68, %c0_69, %c0_70] : memref<9x8x8xbf16, #tpu.memory_space<vmem>>, vector<1x8x8xbf16>
    %84 = vector.shape_cast %83 : vector<1x8x8xbf16> to vector<8x8xbf16>
    %cst_71 = arith.constant dense<0.000000e+00> : vector<8x288xf32>
    %85 = tpu.matmul %84, %82, %cst_71 {dimension_numbers = #tpu.dot_dimension_numbers<[1], [0], [0], [1], [0, 0, 1, 1], [], []>} : vector<8x8xbf16>, vector<8x288xbf16>, vector<8x288xf32> -> vector<8x288xf32>
    %86 = arith.addf %81, %85 : vector<8x288xf32>
    %c0_72 = arith.constant 0 : index
    %c127_73 = arith.constant 127 : index
    %87 = vector.load %arg8[%c0_72, %c127_73] : memref<8x512xbf16, #tpu.memory_space<vmem>>, vector<8x288xbf16>
    %c3_74 = arith.constant 3 : index
    %c0_75 = arith.constant 0 : index
    %c0_76 = arith.constant 0 : index
    %88 = vector.load %arg5[%c3_74, %c0_75, %c0_76] : memref<9x8x8xbf16, #tpu.memory_space<vmem>>, vector<1x8x8xbf16>
    %89 = vector.shape_cast %88 : vector<1x8x8xbf16> to vector<8x8xbf16>
    %cst_77 = arith.constant dense<0.000000e+00> : vector<8x288xf32>
    %90 = tpu.matmul %89, %87, %cst_77 {dimension_numbers = #tpu.dot_dimension_numbers<[1], [0], [0], [1], [0, 0, 1, 1], [], []>} : vector<8x8xbf16>, vector<8x288xbf16>, vector<8x288xf32> -> vector<8x288xf32>
    %91 = arith.addf %86, %90 : vector<8x288xf32>
    %c0_78 = arith.constant 0 : index
    %c128_79 = arith.constant 128 : index
    %92 = vector.load %arg8[%c0_78, %c128_79] : memref<8x512xbf16, #tpu.memory_space<vmem>>, vector<8x288xbf16>
    %c4_80 = arith.constant 4 : index
    %c0_81 = arith.constant 0 : index
    %c0_82 = arith.constant 0 : index
    %93 = vector.load %arg5[%c4_80, %c0_81, %c0_82] : memref<9x8x8xbf16, #tpu.memory_space<vmem>>, vector<1x8x8xbf16>
    %94 = vector.shape_cast %93 : vector<1x8x8xbf16> to vector<8x8xbf16>
    %cst_83 = arith.constant dense<0.000000e+00> : vector<8x288xf32>
    %95 = tpu.matmul %94, %92, %cst_83 {dimension_numbers = #tpu.dot_dimension_numbers<[1], [0], [0], [1], [0, 0, 1, 1], [], []>} : vector<8x8xbf16>, vector<8x288xbf16>, vector<8x288xf32> -> vector<8x288xf32>
    %96 = arith.addf %91, %95 : vector<8x288xf32>
    %c0_84 = arith.constant 0 : index
    %c129_85 = arith.constant 129 : index
    %97 = vector.load %arg8[%c0_84, %c129_85] : memref<8x512xbf16, #tpu.memory_space<vmem>>, vector<8x288xbf16>
    %c5_86 = arith.constant 5 : index
    %c0_87 = arith.constant 0 : index
    %c0_88 = arith.constant 0 : index
    %98 = vector.load %arg5[%c5_86, %c0_87, %c0_88] : memref<9x8x8xbf16, #tpu.memory_space<vmem>>, vector<1x8x8xbf16>
    %99 = vector.shape_cast %98 : vector<1x8x8xbf16> to vector<8x8xbf16>
    %cst_89 = arith.constant dense<0.000000e+00> : vector<8x288xf32>
    %100 = tpu.matmul %99, %97, %cst_89 {dimension_numbers = #tpu.dot_dimension_numbers<[1], [0], [0], [1], [0, 0, 1, 1], [], []>} : vector<8x8xbf16>, vector<8x288xbf16>, vector<8x288xf32> -> vector<8x288xf32>
    %101 = arith.addf %96, %100 : vector<8x288xf32>
    %c0_90 = arith.constant 0 : index
    %c145_91 = arith.constant 145 : index
    %102 = vector.load %arg8[%c0_90, %c145_91] : memref<8x512xbf16, #tpu.memory_space<vmem>>, vector<8x288xbf16>
    %c6_92 = arith.constant 6 : index
    %c0_93 = arith.constant 0 : index
    %c0_94 = arith.constant 0 : index
    %103 = vector.load %arg5[%c6_92, %c0_93, %c0_94] : memref<9x8x8xbf16, #tpu.memory_space<vmem>>, vector<1x8x8xbf16>
    %104 = vector.shape_cast %103 : vector<1x8x8xbf16> to vector<8x8xbf16>
    %cst_95 = arith.constant dense<0.000000e+00> : vector<8x288xf32>
    %105 = tpu.matmul %104, %102, %cst_95 {dimension_numbers = #tpu.dot_dimension_numbers<[1], [0], [0], [1], [0, 0, 1, 1], [], []>} : vector<8x8xbf16>, vector<8x288xbf16>, vector<8x288xf32> -> vector<8x288xf32>
    %106 = arith.addf %101, %105 : vector<8x288xf32>
    %c0_96 = arith.constant 0 : index
    %c146_97 = arith.constant 146 : index
    %107 = vector.load %arg8[%c0_96, %c146_97] : memref<8x512xbf16, #tpu.memory_space<vmem>>, vector<8x288xbf16>
    %c7_98 = arith.constant 7 : index
    %c0_99 = arith.constant 0 : index
    %c0_100 = arith.constant 0 : index
    %108 = vector.load %arg5[%c7_98, %c0_99, %c0_100] : memref<9x8x8xbf16, #tpu.memory_space<vmem>>, vector<1x8x8xbf16>
    %109 = vector.shape_cast %108 : vector<1x8x8xbf16> to vector<8x8xbf16>
    %cst_101 = arith.constant dense<0.000000e+00> : vector<8x288xf32>
    %110 = tpu.matmul %109, %107, %cst_101 {dimension_numbers = #tpu.dot_dimension_numbers<[1], [0], [0], [1], [0, 0, 1, 1], [], []>} : vector<8x8xbf16>, vector<8x288xbf16>, vector<8x288xf32> -> vector<8x288xf32>
    %111 = arith.addf %106, %110 : vector<8x288xf32>
    %c0_102 = arith.constant 0 : index
    %c147_103 = arith.constant 147 : index
    %112 = vector.load %arg8[%c0_102, %c147_103] : memref<8x512xbf16, #tpu.memory_space<vmem>>, vector<8x288xbf16>
    %c8_104 = arith.constant 8 : index
    %c0_105 = arith.constant 0 : index
    %c0_106 = arith.constant 0 : index
    %113 = vector.load %arg5[%c8_104, %c0_105, %c0_106] : memref<9x8x8xbf16, #tpu.memory_space<vmem>>, vector<1x8x8xbf16>
    %114 = vector.shape_cast %113 : vector<1x8x8xbf16> to vector<8x8xbf16>
    %cst_107 = arith.constant dense<0.000000e+00> : vector<8x288xf32>
    %115 = tpu.matmul %114, %112, %cst_107 {dimension_numbers = #tpu.dot_dimension_numbers<[1], [0], [0], [1], [0, 0, 1, 1], [], []>} : vector<8x8xbf16>, vector<8x288xbf16>, vector<8x288xf32> -> vector<8x288xf32>
    %116 = arith.addf %111, %115 : vector<8x288xf32>
    %c0_108 = arith.constant 0 : index
    %c0_109 = arith.constant 0 : index
    %117 = vector.load %arg6[%c0_108, %c0_109] : memref<8x1xf32, #tpu.memory_space<vmem>>, vector<8x1xf32>
    %118 = vector.broadcast %117 : vector<8x1xf32> to vector<8x288xf32>
    %119 = arith.addf %116, %118 : vector<8x288xf32>
    %cst_110 = arith.constant 0.000000e+00 : f32
    %120 = vector.broadcast %cst_110 : f32 to vector<8x288xf32>
    %121 = arith.subf %120, %119 : vector<8x288xf32>
    %122 = math.exp %121 : vector<8x288xf32>
    %cst_111 = arith.constant 1.000000e+00 : f32
    %123 = vector.broadcast %cst_111 : f32 to vector<8x288xf32>
    %124 = arith.addf %123, %122 : vector<8x288xf32>
    %cst_112 = arith.constant 1.000000e+00 : f32
    %125 = vector.broadcast %cst_112 : f32 to vector<8x288xf32>
    %126 = arith.divf %125, %124 : vector<8x288xf32>
    %127 = arith.mulf %119, %126 : vector<8x288xf32>
    %128 = arith.addf %3, %127 : vector<8x288xf32>
    %129 = arith.truncf %128 : vector<8x288xf32> to vector<8x288xbf16>
    %c0_113 = arith.constant 0 : index
    %c0_114 = arith.constant 0 : index
    %c0_115 = arith.constant 0 : index
    %130 = vector.load %arg7[%c0_113, %c0_114, %c0_115] : memref<1x8x288xbf16, #tpu.memory_space<vmem>>, vector<1x8x288xbf16>
    %131 = vector.shape_cast %130 : vector<1x8x288xbf16> to vector<8x288xbf16>
    %132 = vector.shape_cast %129 : vector<8x288xbf16> to vector<1x8x288xbf16>
    tpu.vector_store %arg7[%c0_113, %c0_114, %c0_115], %132 {strides = array<i32>} : memref<1x8x288xbf16, #tpu.memory_space<vmem>>, vector<1x8x288xbf16>,
    return
  }
  func.func @transform_0(%arg0: i32) -> (i32, i32, i32) {
    %c0_i32 = arith.constant 0 : i32
    %c0_i32_0 = arith.constant 0 : i32
    %c0_i32_1 = arith.constant 0 : i32
    return %arg0, %c0_i32, %c0_i32_0 : i32, i32, i32
  }
  func.func @transform_1(%arg0: i32) -> (i32, i32) {
    %c0_i32 = arith.constant 0 : i32
    %c0_i32_0 = arith.constant 0 : i32
    %c0_i32_1 = arith.constant 0 : i32
    return %c0_i32, %c0_i32_0 : i32, i32
  }
  func.func @transform_2(%arg0: i32) -> (i32, i32, i32) {
    %c0_i32 = arith.constant 0 : i32
    %c0_i32_0 = arith.constant 0 : i32
    %c0_i32_1 = arith.constant 0 : i32
    %c0_i32_2 = arith.constant 0 : i32
    return %c0_i32, %c0_i32_0, %c0_i32_1 : i32, i32, i32
  }
  func.func @transform_3(%arg0: i32) -> (i32, i32) {
    %c0_i32 = arith.constant 0 : i32
    %c0_i32_0 = arith.constant 0 : i32
    %c0_i32_1 = arith.constant 0 : i32
    return %c0_i32, %c0_i32_0 : i32, i32
  }
  func.func @transform_4(%arg0: i32) -> (i32, i32, i32) {
    %c0_i32 = arith.constant 0 : i32
    %c0_i32_0 = arith.constant 0 : i32
    %c0_i32_1 = arith.constant 0 : i32
    %c0_i32_2 = arith.constant 0 : i32
    return %c0_i32, %c0_i32_0, %c0_i32_1 : i32, i32, i32
  }
  func.func @transform_5(%arg0: i32) -> (i32, i32) {
    %c0_i32 = arith.constant 0 : i32
    %c0_i32_0 = arith.constant 0 : i32
    %c0_i32_1 = arith.constant 0 : i32
    return %c0_i32, %c0_i32_0 : i32, i32
  }
  func.func @transform_6(%arg0: i32) -> (i32, i32, i32) {
    %c0_i32 = arith.constant 0 : i32
    %c0_i32_0 = arith.constant 0 : i32
    %c0_i32_1 = arith.constant 0 : i32
    return %arg0, %c0_i32, %c0_i32_0 : i32, i32, i32
  }
}

</mosaic_0001>

<llo_original>
// kernel: c2_forward.5
$region0: #{c2_forward.5}
  #allocation0 [shape = 'u32[]', space=smem, size = 0x4, offset = 0x4, fixed_abs, tag = 'smem constant byte address 0x4 - core index']
  #allocation1 [shape = 'u32[144,128]{1,0:T(1,128)}', space=vmem, size = 0x12000, scoped, tag = 'internal scratch']
  %s0 = inlined_call_operand.vmem [shape: bf16[2,8,288], index: 0, kind: input, shape index: {}]
  %s1 = inlined_call_operand.vmem [shape: bf16[2,8,288], index: 1, kind: input, shape index: {}]
  %s2 = inlined_call_operand.vmem [shape: bf16[16,8], index: 2, kind: input, shape index: {}]
  %s3 = inlined_call_operand.vmem [shape: bf16[16,8], index: 3, kind: input, shape index: {}]
  %s4 = inlined_call_operand.vmem [shape: f32[16,1], index: 4, kind: input, shape index: {}]
  %s5 = inlined_call_operand.vmem [shape: f32[2,16,288], index: 5, kind: output, shape index: {}]
  %s6 = sld [smem:[#allocation0]]
  $region53: #{c2_forward.5} parent=0
    _
  %s8 = ssub.s32 1, %s6
  %s9 = scalar_select 0, %s8, %s6
  loop: start=0, step=1, limit=4
  $region2: #{c2_forward.5} parent=0 // loop_pre_header
    _
  $region3: #{c2_forward.5} parent=0 // loop_header
    %s11 = sphi 0, %s15
    %p12 = scmp.ge.s32.totalorder %s11, 4
    %s18 = sphi 0, %s30
    %s19 = sphi 0, %s26
    %s20 = sphi 0, %s18
    %s21 = sphi 0, %s19
    %s22 = sphi 0, %s20
    %s23 = sphi 0, %s21
    %s35 = sphi 0, %s37
    %s38 = sphi 0, %s35
    %s39 = sphi 0, %s38
    %s55 = sphi 0, %s39
    %s63 = sphi 0, %s65
    %s66 = sphi 0, %s63
    %s67 = sphi 0, %s66
    %s83 = sphi 0, %s67
    %s87 = sphi 0, %s87
    %s89 = sphi 0, %s87
    %s90 = sphi 0, %s89
    %s104 = sphi 0, %s90
    %s108 = sphi 0, %s108
    %s110 = sphi 0, %s108
    %s111 = sphi 0, %s110
    %s125 = sphi 0, %s111
    %s129 = sphi 0, %s129
    %s131 = sphi 0, %s129
    %s132 = sphi 0, %s131
    %s146 = sphi 0, %s132
    %s154 = sphi 0, %s156
    %s157 = sphi 0, %s154
    %s158 = sphi 0, %s157
    %s174 = sphi 0, %s158
  $region4: #{c2_forward.5} parent=0 // loop_header_branch
    %14 = sbr.rel (%p12) target = $region8
  $region5: #{c2_forward.5} parent=0 // loop_body
    %s16 = ssub.s32 %s11, 1
    %s17 = ssub.s32 %s11, 2
    %s24 = sadd.s32 1, %s19
    %p25 = scmp.ge.s32.totalorder %s24, 1
    %s26 = scalar_select %p25, 0, %s24
    %s27 = sadd.s32 1, %s18
    %s28 = scalar_select %p25, %s27, %s18
    %p29 = scmp.ge.s32.totalorder %s28, 2
    %s30 = scalar_select %p29, 0, %s28
    %s31 = ssub.s32 %s18, %s30
    %s32 = ssub.s32 %s19, %s26
    %s33 = sor.u32 %s31, %s32
    %p34 = scmp.eq.s32.totalorder %s33, 0
    %s36 = sadd.s32 %s35, 1
    %s37 = scalar_select %p34, %s35, %s36
    %p40 = pneg %p34
    %p41 = scmp.eq.s32.totalorder %s11, 1
    %p42 = por %p40, %p41
    %p43 = scmp.ne.s32.totalorder %s35, %s38
    %p44 = scmp.eq.s32.totalorder %s11, 0
    %p45 = por %p43, %p44
    %p46 = scmp.ne.s32.totalorder %s35, %s38
    %p47 = scmp.eq.s32.totalorder %s16, 1
    %p48 = por %p46, %p47
    %p49 = scmp.ne.s32.totalorder %s38, %s39
    %p50 = scmp.eq.s32.totalorder %s16, 0
    %p51 = por %p49, %p50
    %p52 = scmp.ne.s32.totalorder %s38, %s39
    %p53 = scmp.eq.s32.totalorder %s17, 1
    %p54 = por %p52, %p53
    %p56 = scmp.ne.s32.totalorder %s39, %s55
    %p57 = scmp.eq.s32.totalorder %s17, 0
    %p58 = por %p56, %p57
    %s59 = ssub.s32 %s18, %s30
    %s60 = ssub.s32 %s19, %s26
    %s61 = sor.u32 %s59, %s60
    %p62 = scmp.eq.s32.totalorder %s61, 0
    %s64 = sadd.s32 %s63, 1
    %s65 = scalar_select %p62, %s63, %s64
    %p68 = pneg %p62
    %p69 = scmp.eq.s32.totalorder %s11, 1
    %p70 = por %p68, %p69
    %p71 = scmp.ne.s32.totalorder %s63, %s66
    %p72 = scmp.eq.s32.totalorder %s11, 0
    %p73 = por %p71, %p72
    %p74 = scmp.ne.s32.totalorder %s63, %s66
    %p75 = scmp.eq.s32.totalorder %s16, 1
    %p76 = por %p74, %p75
    %p77 = scmp.ne.s32.totalorder %s66, %s67
    %p78 = scmp.eq.s32.totalorder %s16, 0
    %p79 = por %p77, %p78
    %p80 = scmp.ne.s32.totalorder %s66, %s67
    %p81 = scmp.eq.s32.totalorder %s17, 1
    %p82 = por %p80, %p81
    %p84 = scmp.ne.s32.totalorder %s67, %s83
    %p85 = scmp.eq.s32.totalorder %s17, 0
    %p86 = por %p84, %p85
    %s88 = sadd.s32 %s87, 1
    %p91 = scmp.eq.s32.totalorder %s11, 1
    %p92 = scmp.ne.s32.totalorder %s87, %s89
    %p93 = scmp.eq.s32.totalorder %s11, 0
    %p94 = por %p92, %p93
    %p95 = scmp.ne.s32.totalorder %s87, %s89
    %p96 = scmp.eq.s32.totalorder %s16, 1
    %p97 = por %p95, %p96
    %p98 = scmp.ne.s32.totalorder %s89, %s90
    %p99 = scmp.eq.s32.totalorder %s16, 0
    %p100 = por %p98, %p99
    %p101 = scmp.ne.s32.totalorder %s89, %s90
    %p102 = scmp.eq.s32.totalorder %s17, 1
    %p103 = por %p101, %p102
    %p105 = scmp.ne.s32.totalorder %s90, %s104
    %p106 = scmp.eq.s32.totalorder %s17, 0
    %p107 = por %p105, %p106
    %s109 = sadd.s32 %s108, 1
    %p112 = scmp.eq.s32.totalorder %s11, 1
    %p113 = scmp.ne.s32.totalorder %s108, %s110
    %p114 = scmp.eq.s32.totalorder %s11, 0
    %p115 = por %p113, %p114
    %p116 = scmp.ne.s32.totalorder %s108, %s110
    %p117 = scmp.eq.s32.totalorder %s16, 1
    %p118 = por %p116, %p117
    %p119 = scmp.ne.s32.totalorder %s110, %s111
    %p120 = scmp.eq.s32.totalorder %s16, 0
    %p121 = por %p119, %p120
    %p122 = scmp.ne.s32.totalorder %s110, %s111
    %p123 = scmp.eq.s32.totalorder %s17, 1
    %p124 = por %p122, %p123
    %p126 = scmp.ne.s32.totalorder %s111, %s125
    %p127 = scmp.eq.s32.totalorder %s17, 0
    %p128 = por %p126, %p127
    %s130 = sadd.s32 %s129, 1
    %p133 = scmp.eq.s32.totalorder %s11, 1
    %p134 = scmp.ne.s32.totalorder %s129, %s131
    %p135 = scmp.eq.s32.totalorder %s11, 0
    %p136 = por %p134, %p135
    %p137 = scmp.ne.s32.totalorder %s129, %s131
    %p138 = scmp.eq.s32.totalorder %s16, 1
    %p139 = por %p137, %p138
    %p140 = scmp.ne.s32.totalorder %s131, %s132
    %p141 = scmp.eq.s32.totalorder %s16, 0
    %p142 = por %p140, %p141
    %p143 = scmp.ne.s32.totalorder %s131, %s132
    %p144 = scmp.eq.s32.totalorder %s17, 1
    %p145 = por %p143, %p144
    %p147 = scmp.ne.s32.totalorder %s132, %s146
    %p148 = scmp.eq.s32.totalorder %s17, 0
    %p149 = por %p147, %p148
    %s150 = ssub.s32 %s18, %s30
    %s151 = ssub.s32 %s19, %s26
    %s152 = sor.u32 %s150, %s151
    %p153 = scmp.eq.s32.totalorder %s152, 0
    %s155 = sadd.s32 %s154, 1
    %s156 = scalar_select %p153, %s154, %s155
    %p159 = pneg %p153
    %p160 = scmp.eq.s32.totalorder %s11, 1
    %p161 = por %p159, %p160
    %p162 = scmp.ne.s32.totalorder %s154, %s157
    %p163 = scmp.eq.s32.totalorder %s11, 0
    %p164 = por %p162, %p163
    %p165 = scmp.ne.s32.totalorder %s154, %s157
    %p166 = scmp.eq.s32.totalorder %s16, 1
    %p167 = por %p165, %p166
    %p168 = scmp.ne.s32.totalorder %s157, %s158
    %p169 = scmp.eq.s32.totalorder %s16, 0
    %p170 = por %p168, %p169
    %p171 = scmp.ne.s32.totalorder %s157, %s158
    %p172 = scmp.eq.s32.totalorder %s17, 1
    %p173 = por %p171, %p172
    %p175 = scmp.ne.s32.totalorder %s158, %s174
    %p176 = scmp.eq.s32.totalorder %s17, 0
    %p177 = por %p175, %p176
    %p178 = scmp.le.s32.totalorder 1, %s11
    %p179 = scmp.lt.s32.totalorder %s11, 3
    %p180 = pnand %p178, %p179
    %p181 = pneg %p180
    // Predicated region
    $region9: #{c2_forward.5} parent=5 // pred_check
      _
    $region10: #{c2_forward.5} parent=5 // pred_check_branch
      %183 = sbr.rel (%p180) target = $region12
    $region11: #{c2_forward.5} parent=5 // pred_region
      %s184 = ssub.s32 %s11, 1
      // Predicated region
      $region13: #{c2_forward.5} parent=11 // pred_check
        %p185 = pneg %p100
      $region14: #{c2_forward.5} parent=11 // pred_check_branch
        %187 = sbr.rel (%p185) target = $region16
      $region15: #{c2_forward.5} parent=11 // pred_region
        _
      $region16: #{c2_forward.5} parent=11 // pred_fallthru
        _
      // Predicated region
      $region17: #{c2_forward.5} parent=11 // pred_check
        %p188 = pneg %p121
      $region18: #{c2_forward.5} parent=11 // pred_check_branch
        %190 = sbr.rel (%p188) target = $region20
      $region19: #{c2_forward.5} parent=11 // pred_region
        _
      $region20: #{c2_forward.5} parent=11 // pred_fallthru
        _
      // Predicated region
      $region21: #{c2_forward.5} parent=11 // pred_check
        %p191 = pneg %p142
      $region22: #{c2_forward.5} parent=11 // pred_check_branch
        %193 = sbr.rel (%p191) target = $region24
      $region23: #{c2_forward.5} parent=11 // pred_region
        _
      $region24: #{c2_forward.5} parent=11 // pred_fallthru
        _
    $region12: #{c2_forward.5} parent=5 // pred_fallthru
      _
    %p194 = scmp.lt.s32.totalorder %s11, 2
    // Predicated region
    $region25: #{c2_forward.5} parent=5 // pred_check
      %p195 = pneg %p194
    $region26: #{c2_forward.5} parent=5 // pred_check_branch
      %197 = sbr.rel (%p195) target = $region28
    $region27: #{c2_forward.5} parent=5 // pred_region
      // Predicated region
      $region29: #{c2_forward.5} parent=27 // pred_check
        %p198 = pneg %p45
      $region30: #{c2_forward.5} parent=27 // pred_check_branch
        %200 = sbr.rel (%p198) target = $region32
      $region31: #{c2_forward.5} parent=27 // pred_region
        %s201 = smul.u32 3, %s19
        %p202 = scmp.lt.s32.totalorder %s18, 1
        %s203 = scalar_select %p202, %s18, 1
        %p204 = scmp.lt.s32.totalorder %s201, 2
        %s205 = scalar_select %p204, %s201, 2
        %s206 = smul.addr %s203, 3
        %s207 = sadd.s32 %s205, %s206
        %s208 = smul.addr %s207, 4
        %s209 = scalar_lea.vmem %s0, %s208
        %s210 = smul.u32 3, %s19
      $region32: #{c2_forward.5} parent=27 // pred_fallthru
        _
      // Predicated region
      $region33: #{c2_forward.5} parent=27 // pred_check
        %p211 = pneg %p73
      $region34: #{c2_forward.5} parent=27 // pred_check_branch
        %213 = sbr.rel (%p211) target = $region36
      $region35: #{c2_forward.5} parent=27 // pred_region
        %s214 = smul.u32 3, %s19
        %p215 = scmp.lt.s32.totalorder %s18, 1
        %s216 = scalar_select %p215, %s18, 1
        %p217 = scmp.lt.s32.totalorder %s214, 2
        %s218 = scalar_select %p217, %s214, 2
        %s219 = smul.addr %s216, 3
        %s220 = sadd.s32 %s218, %s219
        %s221 = smul.addr %s220, 4
        %s222 = scalar_lea.vmem %s1, %s221
        %s223 = smul.u32 3, %s19
      $region36: #{c2_forward.5} parent=27 // pred_fallthru
        _
    $region28: #{c2_forward.5} parent=5 // pred_fallthru
      _
    %p224 = scmp.le.s32.totalorder 1, %s11
    %p225 = scmp.lt.s32.totalorder %s11, 3
    %p226 = pnand %p224, %p225
    %p227 = pneg %p226
    // Predicated region
    $region37: #{c2_forward.5} parent=5 // pred_check
      _
    $region38: #{c2_forward.5} parent=5 // pred_check_branch
      %229 = sbr.rel (%p226) target = $region40
    $region39: #{c2_forward.5} parent=5 // pred_region
      %s230 = ssub.s32 %s11, 1
      %s231 = smul.u32 3, %s21
      %p232 = scmp.lt.s32.totalorder %s20, 1
      %s233 = scalar_select %p232, %s20, 1
      %p234 = scmp.lt.s32.totalorder %s231, 2
      %s235 = scalar_select %p234, %s231, 2
      %s236 = smul.addr %s233, 3
      %s237 = sadd.s32 %s235, %s236
      %s238 = smul.addr %s237, 4
      %s239 = scalar_lea.vmem %s0, %s238
      %p240 = pneg %p51
      %p241 = pneg %p48
      %s242 = smul.u32 3, %s21
      %p243 = scmp.lt.s32.totalorder %s20, 1
      %s244 = scalar_select %p243, %s20, 1
      %p245 = scmp.lt.s32.totalorder %s242, 2
      %s246 = scalar_select %p245, %s242, 2
      %s247 = smul.addr %s244, 3
      %s248 = sadd.s32 %s246, %s247
      %s249 = smul.addr %s248, 4
      %s250 = scalar_lea.vmem %s1, %s249
      %p251 = pneg %p79
      %p252 = pneg %p76
      %p253 = pneg %p100
      %p254 = pneg %p97
      %p255 = pneg %p121
      %p256 = pneg %p118
      %p257 = pneg %p142
      %p258 = pneg %p139
      %p259 = pneg %p170
      %p260 = pneg %p167
      %s261 = smul.u32 3, %s21
      %p262 = scmp.lt.s32.totalorder %s20, 1
      %s263 = scalar_select %p262, %s20, 1
      %p264 = scmp.lt.s32.totalorder %s261, 2
      %s265 = scalar_select %p264, %s261, 2
      %s266 = smul.addr %s263, 6
      %s267 = sadd.s32 %s265, %s266
      %s268 = smul.addr %s267, 8
      %s269 = scalar_lea.vmem %s5, %s268
      %s270 = smul.u32 3, %s21
      %p271 = scmp.lt.s32.totalorder %s20, 1
      %s272 = scalar_select %p271, %s20, 1
      %p273 = scmp.lt.s32.totalorder %s270, 2
      %s274 = scalar_select %p273, %s270, 2
      %s275 = smul.addr %s272, 3
      %s276 = sadd.s32 %s274, %s275
      %s277 = smul.addr %s276, 4
      %s278 = scalar_lea.vmem %s0, %s277
      %s279 = smul.u32 3, %s21
      %s280 = smul.u32 3, %s21
      %p281 = scmp.lt.s32.totalorder %s20, 1
      %s282 = scalar_select %p281, %s20, 1
      %p283 = scmp.lt.s32.totalorder %s280, 2
      %s284 = scalar_select %p283, %s280, 2
      %s285 = smul.addr %s282, 3
      %s286 = sadd.s32 %s284, %s285
      %s287 = smul.addr %s286, 4
      %s288 = scalar_lea.vmem %s1, %s287
      %s289 = smul.u32 3, %s21
      %s290 = smul.u32 3, %s21
      %p291 = scmp.lt.s32.totalorder %s20, 1
      %s292 = scalar_select %p291, %s20, 1
      %p293 = scmp.lt.s32.totalorder %s290, 2
      %s294 = scalar_select %p293, %s290, 2
      %s295 = smul.addr %s292, 6
      %s296 = sadd.s32 %s294, %s295
      %s297 = smul.addr %s296, 8
      %s298 = scalar_lea.vmem %s5, %s297
      %s299 = smul.u32 3, %s21
      %v301 = vld [vmem:[%s278] sm:$0xff]
      %v302 = vld [vmem:[%s278 + $0x8] sm:$0xf]
      %v303 = vld [vmem:[%s288] sm:$0xff]
      %v304 = vld [vmem:[%s288 + $0x8] sm:$0xf]
      %v305 = vld [vmem:[%s2] sm:$0xf]
      %v306 = vld [vmem:[%s2 + $0x4] sm:$0xf]
      %v307 = vld [vmem:[%s3] sm:$0xf]
      %v308 = vld [vmem:[%s3 + $0x4] sm:$0xf]
      %v311 = vunpack.c.l.b16 %v307
      %v312 = vunpack.c.l.b16 %v308
      %v313 = vpack.c.b16 %v312, %v311
      %v316 = vunpack.c.l.b16 %v303
      %v317 = vunpack.c.h.b16 %v303
      %v318 = vunpack.c.l.b16 %v304
      %v319 = vpack.c.b16 %v316, %v316
      %v320 = vpack.c.b16 %v317, %v317
      %v321 = vpack.c.b16 %v318, %v318
      %vm322 = vcmask 64512
      %v324 = vsel %vm322, %v313, 0
      %vm326 = vcmask 1043456
      %v328 = vsel %vm326, %v319, 0
      %v331 = vsel %vm326, %v320, 0
      %v334 = vsel %vm326, %v321, 0
      %336 = vmatprep.subr.bf16.mxu0 %v331
      %337 = vmatpush1.bf16.msra.mxu0 %v328
      %338 = vmatprep.subr.bf16.mxu0 0
      %339 = vmatpush1.bf16.msra.mxu0 0
      %340 = vmatprep.subr.bf16.mxu0 0
      %341 = vmatpush1.bf16.msra.mxu0 0
      %342 = vmatprep.subr.bf16.mxu0 0
      %343 = vmatpush1.bf16.msra.mxu0 0
      %344 = vmatprep.subr.bf16.mxu0 0
      %345 = vmatpush1.bf16.msra.mxu0 0
      %346 = vmatprep.subr.bf16.mxu0 0
      %347 = vmatpush1.bf16.msra.mxu0 0
      %348 = vmatprep.subr.bf16.mxu0 0
      %349 = vmatpush1.bf16.msra.mxu0 0
      %350 = vmatprep.subr.bf16.mxu0 0
      %351 = vmatpush1.bf16.msra.mxu0 0
      %352 = vmatprep.subr.bf16.mxu0 0
      %353 = vmatpush1.bf16.msra.mxu0 0
      %354 = vmatprep.subr.bf16.mxu0 0
      %355 = vmatpush1.bf16.msra.mxu0 0
      %356 = vmatprep.subr.bf16.mxu0 0
      %357 = vmatpush1.bf16.msra.mxu0 0
      %358 = vmatprep.subr.bf16.mxu0 0
      %359 = vmatpush1.bf16.msra.mxu0 0
      %360 = vmatprep.subr.bf16.mxu0 0
      %361 = vmatpush1.bf16.msra.mxu0 0
      %362 = vmatprep.subr.bf16.mxu0 0
      %363 = vmatpush1.bf16.msra.mxu0 0
      %364 = vmatprep.subr.bf16.mxu0 0
      %365 = vmatpush1.bf16.msra.mxu0 0
      %366 = vmatprep.subr.bf16.mxu0 0
      %367 = vmatpush1.bf16.msra.mxu0 0
      %368 = vmatprep.mubr.bf16.mxu0 0
      %369 = vmatmul.mubr.bf16.gmra.mrb[0].mxu0 %v324
      %v370 = vpop.f32.mrb[0].mxu0
      %v371 = vadd.f32 0.0, %v370
      %v372 = vpop.f32.mrb[0].mxu0
      %v373 = vadd.f32 0.0, %v372
      %v374 = vpop.f32.mrb[0].mxu0
      %v375 = vadd.f32 0.0, %v374
      %v376 = vpop.f32.mrb[0].mxu0
      %v377 = vadd.f32 0.0, %v376
      %378 = vdwg.mxu0
      %379 = vmatprep.subr.bf16.mxu0 0
      %380 = vmatpush1.bf16.msra.mxu0 %v334
      %381 = vmatprep.subr.bf16.mxu0 0
      %382 = vmatpush1.bf16.msra.mxu0 0
      %383 = vmatprep.subr.bf16.mxu0 0
      %384 = vmatpush1.bf16.msra.mxu0 0
      %385 = vmatprep.subr.bf16.mxu0 0
      %386 = vmatpush1.bf16.msra.mxu0 0
      %387 = vmatprep.subr.bf16.mxu0 0
      %388 = vmatpush1.bf16.msra.mxu0 0
      %389 = vmatprep.subr.bf16.mxu0 0
      %390 = vmatpush1.bf16.msra.mxu0 0
      %391 = vmatprep.subr.bf16.mxu0 0
      %392 = vmatpush1.bf16.msra.mxu0 0
      %393 = vmatprep.subr.bf16.mxu0 0
      %394 = vmatpush1.bf16.msra.mxu0 0
      %395 = vmatprep.subr.bf16.mxu0 0
      %396 = vmatpush1.bf16.msra.mxu0 0
      %397 = vmatprep.subr.bf16.mxu0 0
      %398 = vmatpush1.bf16.msra.mxu0 0
      %399 = vmatprep.subr.bf16.mxu0 0
      %400 = vmatpush1.bf16.msra.mxu0 0
      %401 = vmatprep.subr.bf16.mxu0 0
      %402 = vmatpush1.bf16.msra.mxu0 0
      %403 = vmatprep.subr.bf16.mxu0 0
      %404 = vmatpush1.bf16.msra.mxu0 0
      %405 = vmatprep.subr.bf16.mxu0 0
      %406 = vmatpush1.bf16.msra.mxu0 0
      %407 = vmatprep.subr.bf16.mxu0 0
      %408 = vmatpush1.bf16.msra.mxu0 0
      %409 = vmatprep.subr.bf16.mxu0 0
      %410 = vmatpush1.bf16.msra.mxu0 0
      %411 = vmatprep.mubr.bf16.mxu0 0
      %412 = vmatmul.mubr.bf16.gmra.mrb[0].mxu0 %v324
      %v413 = vpop.f32.mrb[0].mxu0
      %v414 = vadd.f32 0.0, %v413
      %v415 = vpop.f32.mrb[0].mxu0
      %v416 = vpop.f32.mrb[0].mxu0
      %v417 = vadd.f32 0.0, %v416
      %v418 = vpop.f32.mrb[0].mxu0
      %419 = vdwg.mxu0
      %v422 = vunpack.c.l.b16 %v305
      %v423 = vunpack.c.l.b16 %v306
      %v424 = vpack.c.b16 %v423, %v422
      %v427 = vunpack.c.l.b16 %v301
      %v428 = vunpack.c.h.b16 %v301
      %v429 = vunpack.c.l.b16 %v302
      %v430 = vpack.c.b16 %v427, %v427
      %v431 = vpack.c.b16 %v428, %v428
      %v432 = vpack.c.b16 %v429, %v429
      %v434 = vsel %vm322, %v424, 0
      %v437 = vsel %vm326, %v430, 0
      %v440 = vsel %vm326, %v431, 0
      %v443 = vsel %vm326, %v432, 0
      %445 = vmatprep.subr.bf16.mxu0 %v440
      %446 = vmatpush1.bf16.msra.mxu0 %v437
      %447 = vmatprep.subr.bf16.mxu0 0
      %448 = vmatpush1.bf16.msra.mxu0 0
      %449 = vmatprep.subr.bf16.mxu0 0
      %450 = vmatpush1.bf16.msra.mxu0 0
      %451 = vmatprep.subr.bf16.mxu0 0
      %452 = vmatpush1.bf16.msra.mxu0 0
      %453 = vmatprep.subr.bf16.mxu0 0
      %454 = vmatpush1.bf16.msra.mxu0 0
      %455 = vmatprep.subr.bf16.mxu0 0
      %456 = vmatpush1.bf16.msra.mxu0 0
      %457 = vmatprep.subr.bf16.mxu0 0
      %458 = vmatpush1.bf16.msra.mxu0 0
      %459 = vmatprep.subr.bf16.mxu0 0
      %460 = vmatpush1.bf16.msra.mxu0 0
      %461 = vmatprep.subr.bf16.mxu0 0
      %462 = vmatpush1.bf16.msra.mxu0 0
      %463 = vmatprep.subr.bf16.mxu0 0
      %464 = vmatpush1.bf16.msra.mxu0 0
      %465 = vmatprep.subr.bf16.mxu0 0
      %466 = vmatpush1.bf16.msra.mxu0 0
      %467 = vmatprep.subr.bf16.mxu0 0
      %468 = vmatpush1.bf16.msra.mxu0 0
      %469 = vmatprep.subr.bf16.mxu0 0
      %470 = vmatpush1.bf16.msra.mxu0 0
      %471 = vmatprep.subr.bf16.mxu0 0
      %472 = vmatpush1.bf16.msra.mxu0 0
      %473 = vmatprep.subr.bf16.mxu0 0
      %474 = vmatpush1.bf16.msra.mxu0 0
      %475 = vmatprep.subr.bf16.mxu0 0
      %476 = vmatpush1.bf16.msra.mxu0 0
      %477 = vmatprep.mubr.bf16.mxu0 0
      %478 = vmatmul.mubr.bf16.gmra.mrb[0].mxu0 %v434
      %v479 = vpop.f32.mrb[0].mxu0
      %v480 = vadd.f32 %v371, %v479
      %v481 = vpop.f32.mrb[0].mxu0
      %v482 = vadd.f32 %v373, %v481
      %v483 = vpop.f32.mrb[0].mxu0
      %v484 = vadd.f32 %v375, %v483
      %v485 = vpop.f32.mrb[0].mxu0
      %v486 = vadd.f32 %v377, %v485
      %487 = vdwg.mxu0
      %488 = vmatprep.subr.bf16.mxu0 0
      %489 = vmatpush1.bf16.msra.mxu0 %v443
      %490 = vmatprep.subr.bf16.mxu0 0
      %491 = vmatpush1.bf16.msra.mxu0 0
      %492 = vmatprep.subr.bf16.mxu0 0
      %493 = vmatpush1.bf16.msra.mxu0 0
      %494 = vmatprep.subr.bf16.mxu0 0
      %495 = vmatpush1.bf16.msra.mxu0 0
      %496 = vmatprep.subr.bf16.mxu0 0
      %497 = vmatpush1.bf16.msra.mxu0 0
      %498 = vmatprep.subr.bf16.mxu0 0
      %499 = vmatpush1.bf16.msra.mxu0 0
      %500 = vmatprep.subr.bf16.mxu0 0
      %501 = vmatpush1.bf16.msra.mxu0 0
      %502 = vmatprep.subr.bf16.mxu0 0
      %503 = vmatpush1.bf16.msra.mxu0 0
      %504 = vmatprep.subr.bf16.mxu0 0
      %505 = vmatpush1.bf16.msra.mxu0 0
      %506 = vmatprep.subr.bf16.mxu0 0
      %507 = vmatpush1.bf16.msra.mxu0 0
      %508 = vmatprep.subr.bf16.mxu0 0
      %509 = vmatpush1.bf16.msra.mxu0 0
      %510 = vmatprep.subr.bf16.mxu0 0
      %511 = vmatpush1.bf16.msra.mxu0 0
      %512 = vmatprep.subr.bf16.mxu0 0
      %513 = vmatpush1.bf16.msra.mxu0 0
      %514 = vmatprep.subr.bf16.mxu0 0
      %515 = vmatpush1.bf16.msra.mxu0 0
      %516 = vmatprep.subr.bf16.mxu0 0
      %517 = vmatpush1.bf16.msra.mxu0 0
      %518 = vmatprep.subr.bf16.mxu0 0
      %519 = vmatpush1.bf16.msra.mxu0 0
      %520 = vmatprep.mubr.bf16.mxu0 0
      %521 = vmatmul.mubr.bf16.gmra.mrb[0].mxu0 %v434
      %v522 = vpop.f32.mrb[0].mxu0
      %v523 = vadd.f32 %v414, %v522
      %v524 = vpop.f32.mrb[0].mxu0
      %v525 = vpop.f32.mrb[0].mxu0
      %v526 = vadd.f32 %v417, %v525
      %v527 = vpop.f32.mrb[0].mxu0
      %528 = vdwg.mxu0
      %v529 = vld [vmem:[%s4] sm:$0xff]
      %v530 = vld [vmem:[%s4 + $0x8] sm:$0xff]
      %532 = vset.pattern.permute.xlu0 0
      %533 = vperm.xlu0 %532, %v529
      %v534 = vpop.permute.xlu0 %533
      %537 = vset.pattern.permute.xlu0 0
      %538 = vperm.xlu0 %537, %v530
      %v539 = vpop.permute.xlu0 %538
      %v541 = vadd.f32 %v480, %v534
      %v542 = vadd.f32 %v482, %v534
      %v543 = vadd.f32 %v523, %v534
      %v544 = vadd.f32 %v484, %v539
      %v545 = vadd.f32 %v486, %v539
      %v546 = vadd.f32 %v526, %v539
      %v547 = vsub.f32 0.0, %v541
      %v548 = vsub.f32 0.0, %v542
      %v549 = vsub.f32 0.0, %v543
      %v550 = vsub.f32 0.0, %v544
      %v551 = vsub.f32 0.0, %v545
      %v552 = vsub.f32 0.0, %v546
      %v553 = vmul.f32 %v547, 1.442695
      %v554 = vpow.pop %v553
      %v555 = vmul.f32 %v548, 1.442695
      %v556 = vpow.pop %v555
      %v557 = vmul.f32 %v549, 1.442695
      %v558 = vpow.pop %v557
      %v559 = vmul.f32 %v550, 1.442695
      %v560 = vpow.pop %v559
      %v561 = vmul.f32 %v551, 1.442695
      %v562 = vpow.pop %v561
      %v563 = vmul.f32 %v552, 1.442695
      %v564 = vpow.pop %v563
      %v565 = vadd.f32 %v554, 1.0
      %v566 = vadd.f32 %v556, 1.0
      %v567 = vadd.f32 %v558, 1.0
      %v568 = vadd.f32 %v560, 1.0
      %v569 = vadd.f32 %v562, 1.0
      %v570 = vadd.f32 %v564, 1.0
      %v571 = vrcp.pop %v565
      %v572 = vmul.f32 1.0, %v571
      %v573 = vrcp.pop %v566
      %v574 = vmul.f32 1.0, %v573
      %v575 = vrcp.pop %v567
      %v576 = vmul.f32 1.0, %v575
      %v577 = vrcp.pop %v568
      %v578 = vmul.f32 1.0, %v577
      %v579 = vrcp.pop %v569
      %v580 = vmul.f32 1.0, %v579
      %v581 = vrcp.pop %v570
      %v582 = vmul.f32 1.0, %v581
      %v583 = vmul.f32 %v541, %v572
      %v584 = vmul.f32 %v542, %v574
      %v585 = vmul.f32 %v543, %v576
      %v586 = vmul.f32 %v544, %v578
      %v587 = vmul.f32 %v545, %v580
      %v588 = vmul.f32 %v546, %v582
      %589 = vst [vmem:[%s298] sm:$0xff] %v583
      %590 = vst [vmem:[%s298 + $0x8] sm:$0xff] %v584
      %vm591 = vcmask 261120
      %592 = vst.msk [vmem:[%s298 + $0x10] sm:$0xff] %vm591, %v585
      %593 = vst [vmem:[%s298 + $0x18] sm:$0xff] %v586
      %594 = vst [vmem:[%s298 + $0x20] sm:$0xff] %v587
      %595 = vst.msk [vmem:[%s298 + $0x28] sm:$0xff] %vm591, %v588
      %s596 = smul.u32 3, %s21
      %p597 = scmp.lt.s32.totalorder %s20, 1
      %s598 = scalar_select %p597, %s20, 1
      %p599 = scmp.lt.s32.totalorder %s596, 2
      %s600 = scalar_select %p599, %s596, 2
      %s601 = smul.addr %s598, 6
      %s602 = sadd.s32 %s600, %s601
      %s603 = smul.addr %s602, 8
      %s604 = scalar_lea.vmem %s5, %s603
      // Predicated region
      $region41: #{c2_forward.5} parent=39 // pred_check
        %p605 = pneg %p167
      $region42: #{c2_forward.5} parent=39 // pred_check_branch
        %607 = sbr.rel (%p605) target = $region44
      $region43: #{c2_forward.5} parent=39 // pred_region
        %s608 = smul.u32 3, %s21
      $region44: #{c2_forward.5} parent=39 // pred_fallthru
        _
    $region40: #{c2_forward.5} parent=5 // pred_fallthru
      _
    %p609 = scmp.le.s32.totalorder 2, %s11
    // Predicated region
    $region45: #{c2_forward.5} parent=5 // pred_check
      %p610 = pneg %p609
    $region46: #{c2_forward.5} parent=5 // pred_check_branch
      %612 = sbr.rel (%p610) target = $region48
    $region47: #{c2_forward.5} parent=5 // pred_region
      %s613 = ssub.s32 %s11, 2
      // Predicated region
      $region49: #{c2_forward.5} parent=47 // pred_check
        %p614 = pneg %p173
      $region50: #{c2_forward.5} parent=47 // pred_check_branch
        %616 = sbr.rel (%p614) target = $region52
      $region51: #{c2_forward.5} parent=47 // pred_region
        %s617 = smul.u32 3, %s23
        %p618 = scmp.lt.s32.totalorder %s22, 1
        %s619 = scalar_select %p618, %s22, 1
        %p620 = scmp.lt.s32.totalorder %s617, 2
        %s621 = scalar_select %p620, %s617, 2
        %s622 = smul.addr %s619, 6
        %s623 = sadd.s32 %s621, %s622
        %s624 = smul.addr %s623, 8
        %s625 = scalar_lea.vmem %s5, %s624
      $region52: #{c2_forward.5} parent=47 // pred_fallthru
        _
    $region48: #{c2_forward.5} parent=5 // pred_fallthru
      _
  $region6: #{c2_forward.5} parent=0 // loop_footer
    %s15 = sadd.s32 1, %s11
  $region7: #{c2_forward.5} parent=0 // loop_footer_branch
    %10 = sbr.rel target = $region3
  $region8: #{c2_forward.5} parent=0 // loop_exit
    _

// kernel: c2_forward.3
$region0: #{c2_forward.3}
  #allocation0 [shape = 'u32[]', space=smem, size = 0x4, offset = 0x4, fixed_abs, tag = 'smem constant byte address 0x4 - core index']
  #allocation1 [shape = 'u32[144,128]{1,0:T(1,128)}', space=vmem, size = 0x12000, scoped, tag = 'internal scratch']
  %s0 = inlined_call_operand.vmem [shape: f32[2,8,288], index: 0, kind: input, shape index: {}]
  %s1 = inlined_call_operand.vmem [shape: bf16[8,8], index: 1, kind: input, shape index: {}]
  %s2 = inlined_call_operand.vmem [shape: bf16[8,8], index: 2, kind: input, shape index: {}]
  %s3 = inlined_call_operand.vmem [shape: f32[8,1], index: 3, kind: input, shape index: {}]
  %s4 = inlined_call_operand.vmem [shape: f32[8,1], index: 4, kind: input, shape index: {}]
  %s5 = inlined_call_operand.vmem [shape: bf16[2,8,288], index: 5, kind: output, shape index: {0}]
  %s6 = inlined_call_operand.vmem [shape: bf16[2,8,288], index: 6, kind: output, shape index: {1}]
  %7 = xla_tuple %s5, %s6
  %s8 = sld [smem:[#allocation0]]
  $region61: #{c2_forward.3} parent=0
    _
  %s10 = ssub.s32 1, %s8
  %s11 = scalar_select 0, %s10, %s8
  loop: start=0, step=1, limit=4
  $region2: #{c2_forward.3} parent=0 // loop_pre_header
    _
  $region3: #{c2_forward.3} parent=0 // loop_header
    %s13 = sphi 0, %s17
    %p14 = scmp.ge.s32.totalorder %s13, 4
    %s20 = sphi 0, %s32
    %s21 = sphi 0, %s28
    %s22 = sphi 0, %s20
    %s23 = sphi 0, %s21
    %s24 = sphi 0, %s22
    %s25 = sphi 0, %s23
    %s37 = sphi 0, %s39
    %s40 = sphi 0, %s37
    %s41 = sphi 0, %s40
    %s57 = sphi 0, %s41
    %s61 = sphi 0, %s61
    %s63 = sphi 0, %s61
    %s64 = sphi 0, %s63
    %s78 = sphi 0, %s64
    %s82 = sphi 0, %s82
    %s84 = sphi 0, %s82
    %s85 = sphi 0, %s84
    %s99 = sphi 0, %s85
    %s103 = sphi 0, %s103
    %s105 = sphi 0, %s103
    %s106 = sphi 0, %s105
    %s120 = sphi 0, %s106
    %s124 = sphi 0, %s124
    %s126 = sphi 0, %s124
    %s127 = sphi 0, %s126
    %s141 = sphi 0, %s127
    %s149 = sphi 0, %s151
    %s152 = sphi 0, %s149
    %s153 = sphi 0, %s152
    %s169 = sphi 0, %s153
    %s177 = sphi 0, %s179
    %s180 = sphi 0, %s177
    %s181 = sphi 0, %s180
    %s197 = sphi 0, %s181
  $region4: #{c2_forward.3} parent=0 // loop_header_branch
    %16 = sbr.rel (%p14) target = $region8
  $region5: #{c2_forward.3} parent=0 // loop_body
    %s18 = ssub.s32 %s13, 1
    %s19 = ssub.s32 %s13, 2
    %s26 = sadd.s32 1, %s21
    %p27 = scmp.ge.s32.totalorder %s26, 1
    %s28 = scalar_select %p27, 0, %s26
    %s29 = sadd.s32 1, %s20
    %s30 = scalar_select %p27, %s29, %s20
    %p31 = scmp.ge.s32.totalorder %s30, 2
    %s32 = scalar_select %p31, 0, %s30
    %s33 = ssub.s32 %s20, %s32
    %s34 = ssub.s32 %s21, %s28
    %s35 = sor.u32 %s33, %s34
    %p36 = scmp.eq.s32.totalorder %s35, 0
    %s38 = sadd.s32 %s37, 1
    %s39 = scalar_select %p36, %s37, %s38
    %p42 = pneg %p36
    %p43 = scmp.eq.s32.totalorder %s13, 1
    %p44 = por %p42, %p43
    %p45 = scmp.ne.s32.totalorder %s37, %s40
    %p46 = scmp.eq.s32.totalorder %s13, 0
    %p47 = por %p45, %p46
    %p48 = scmp.ne.s32.totalorder %s37, %s40
    %p49 = scmp.eq.s32.totalorder %s18, 1
    %p50 = por %p48, %p49
    %p51 = scmp.ne.s32.totalorder %s40, %s41
    %p52 = scmp.eq.s32.totalorder %s18, 0
    %p53 = por %p51, %p52
    %p54 = scmp.ne.s32.totalorder %s40, %s41
    %p55 = scmp.eq.s32.totalorder %s19, 1
    %p56 = por %p54, %p55
    %p58 = scmp.ne.s32.totalorder %s41, %s57
    %p59 = scmp.eq.s32.totalorder %s19, 0
    %p60 = por %p58, %p59
    %s62 = sadd.s32 %s61, 1
    %p65 = scmp.eq.s32.totalorder %s13, 1
    %p66 = scmp.ne.s32.totalorder %s61, %s63
    %p67 = scmp.eq.s32.totalorder %s13, 0
    %p68 = por %p66, %p67
    %p69 = scmp.ne.s32.totalorder %s61, %s63
    %p70 = scmp.eq.s32.totalorder %s18, 1
    %p71 = por %p69, %p70
    %p72 = scmp.ne.s32.totalorder %s63, %s64
    %p73 = scmp.eq.s32.totalorder %s18, 0
    %p74 = por %p72, %p73
    %p75 = scmp.ne.s32.totalorder %s63, %s64
    %p76 = scmp.eq.s32.totalorder %s19, 1
    %p77 = por %p75, %p76
    %p79 = scmp.ne.s32.totalorder %s64, %s78
    %p80 = scmp.eq.s32.totalorder %s19, 0
    %p81 = por %p79, %p80
    %s83 = sadd.s32 %s82, 1
    %p86 = scmp.eq.s32.totalorder %s13, 1
    %p87 = scmp.ne.s32.totalorder %s82, %s84
    %p88 = scmp.eq.s32.totalorder %s13, 0
    %p89 = por %p87, %p88
    %p90 = scmp.ne.s32.totalorder %s82, %s84
    %p91 = scmp.eq.s32.totalorder %s18, 1
    %p92 = por %p90, %p91
    %p93 = scmp.ne.s32.totalorder %s84, %s85
    %p94 = scmp.eq.s32.totalorder %s18, 0
    %p95 = por %p93, %p94
    %p96 = scmp.ne.s32.totalorder %s84, %s85
    %p97 = scmp.eq.s32.totalorder %s19, 1
    %p98 = por %p96, %p97
    %p100 = scmp.ne.s32.totalorder %s85, %s99
    %p101 = scmp.eq.s32.totalorder %s19, 0
    %p102 = por %p100, %p101
    %s104 = sadd.s32 %s103, 1
    %p107 = scmp.eq.s32.totalorder %s13, 1
    %p108 = scmp.ne.s32.totalorder %s103, %s105
    %p109 = scmp.eq.s32.totalorder %s13, 0
    %p110 = por %p108, %p109
    %p111 = scmp.ne.s32.totalorder %s103, %s105
    %p112 = scmp.eq.s32.totalorder %s18, 1
    %p113 = por %p111, %p112
    %p114 = scmp.ne.s32.totalorder %s105, %s106
    %p115 = scmp.eq.s32.totalorder %s18, 0
    %p116 = por %p114, %p115
    %p117 = scmp.ne.s32.totalorder %s105, %s106
    %p118 = scmp.eq.s32.totalorder %s19, 1
    %p119 = por %p117, %p118
    %p121 = scmp.ne.s32.totalorder %s106, %s120
    %p122 = scmp.eq.s32.totalorder %s19, 0
    %p123 = por %p121, %p122
    %s125 = sadd.s32 %s124, 1
    %p128 = scmp.eq.s32.totalorder %s13, 1
    %p129 = scmp.ne.s32.totalorder %s124, %s126
    %p130 = scmp.eq.s32.totalorder %s13, 0
    %p131 = por %p129, %p130
    %p132 = scmp.ne.s32.totalorder %s124, %s126
    %p133 = scmp.eq.s32.totalorder %s18, 1
    %p134 = por %p132, %p133
    %p135 = scmp.ne.s32.totalorder %s126, %s127
    %p136 = scmp.eq.s32.totalorder %s18, 0
    %p137 = por %p135, %p136
    %p138 = scmp.ne.s32.totalorder %s126, %s127
    %p139 = scmp.eq.s32.totalorder %s19, 1
    %p140 = por %p138, %p139
    %p142 = scmp.ne.s32.totalorder %s127, %s141
    %p143 = scmp.eq.s32.totalorder %s19, 0
    %p144 = por %p142, %p143
    %s145 = ssub.s32 %s20, %s32
    %s146 = ssub.s32 %s21, %s28
    %s147 = sor.u32 %s145, %s146
    %p148 = scmp.eq.s32.totalorder %s147, 0
    %s150 = sadd.s32 %s149, 1
    %s151 = scalar_select %p148, %s149, %s150
    %p154 = pneg %p148
    %p155 = scmp.eq.s32.totalorder %s13, 1
    %p156 = por %p154, %p155
    %p157 = scmp.ne.s32.totalorder %s149, %s152
    %p158 = scmp.eq.s32.totalorder %s13, 0
    %p159 = por %p157, %p158
    %p160 = scmp.ne.s32.totalorder %s149, %s152
    %p161 = scmp.eq.s32.totalorder %s18, 1
    %p162 = por %p160, %p161
    %p163 = scmp.ne.s32.totalorder %s152, %s153
    %p164 = scmp.eq.s32.totalorder %s18, 0
    %p165 = por %p163, %p164
    %p166 = scmp.ne.s32.totalorder %s152, %s153
    %p167 = scmp.eq.s32.totalorder %s19, 1
    %p168 = por %p166, %p167
    %p170 = scmp.ne.s32.totalorder %s153, %s169
    %p171 = scmp.eq.s32.totalorder %s19, 0
    %p172 = por %p170, %p171
    %s173 = ssub.s32 %s20, %s32
    %s174 = ssub.s32 %s21, %s28
    %s175 = sor.u32 %s173, %s174
    %p176 = scmp.eq.s32.totalorder %s175, 0
    %s178 = sadd.s32 %s177, 1
    %s179 = scalar_select %p176, %s177, %s178
    %p182 = pneg %p176
    %p183 = scmp.eq.s32.totalorder %s13, 1
    %p184 = por %p182, %p183
    %p185 = scmp.ne.s32.totalorder %s177, %s180
    %p186 = scmp.eq.s32.totalorder %s13, 0
    %p187 = por %p185, %p186
    %p188 = scmp.ne.s32.totalorder %s177, %s180
    %p189 = scmp.eq.s32.totalorder %s18, 1
    %p190 = por %p188, %p189
    %p191 = scmp.ne.s32.totalorder %s180, %s181
    %p192 = scmp.eq.s32.totalorder %s18, 0
    %p193 = por %p191, %p192
    %p194 = scmp.ne.s32.totalorder %s180, %s181
    %p195 = scmp.eq.s32.totalorder %s19, 1
    %p196 = por %p194, %p195
    %p198 = scmp.ne.s32.totalorder %s181, %s197
    %p199 = scmp.eq.s32.totalorder %s19, 0
    %p200 = por %p198, %p199
    %p201 = scmp.le.s32.totalorder 1, %s13
    %p202 = scmp.lt.s32.totalorder %s13, 3
    %p203 = pnand %p201, %p202
    %p204 = pneg %p203
    // Predicated region
    $region9: #{c2_forward.3} parent=5 // pred_check
      _
    $region10: #{c2_forward.3} parent=5 // pred_check_branch
      %206 = sbr.rel (%p203) target = $region12
    $region11: #{c2_forward.3} parent=5 // pred_region
      %s207 = ssub.s32 %s13, 1
      // Predicated region
      $region13: #{c2_forward.3} parent=11 // pred_check
        %p208 = pneg %p74
      $region14: #{c2_forward.3} parent=11 // pred_check_branch
        %210 = sbr.rel (%p208) target = $region16
      $region15: #{c2_forward.3} parent=11 // pred_region
        _
      $region16: #{c2_forward.3} parent=11 // pred_fallthru
        _
      // Predicated region
      $region17: #{c2_forward.3} parent=11 // pred_check
        %p211 = pneg %p95
      $region18: #{c2_forward.3} parent=11 // pred_check_branch
        %213 = sbr.rel (%p211) target = $region20
      $region19: #{c2_forward.3} parent=11 // pred_region
        _
      $region20: #{c2_forward.3} parent=11 // pred_fallthru
        _
      // Predicated region
      $region21: #{c2_forward.3} parent=11 // pred_check
        %p214 = pneg %p116
      $region22: #{c2_forward.3} parent=11 // pred_check_branch
        %216 = sbr.rel (%p214) target = $region24
      $region23: #{c2_forward.3} parent=11 // pred_region
        _
      $region24: #{c2_forward.3} parent=11 // pred_fallthru
        _
      // Predicated region
      $region25: #{c2_forward.3} parent=11 // pred_check
        %p217 = pneg %p137
      $region26: #{c2_forward.3} parent=11 // pred_check_branch
        %219 = sbr.rel (%p217) target = $region28
      $region27: #{c2_forward.3} parent=11 // pred_region
        _
      $region28: #{c2_forward.3} parent=11 // pred_fallthru
        _
    $region12: #{c2_forward.3} parent=5 // pred_fallthru
      _
    %p220 = scmp.lt.s32.totalorder %s13, 2
    // Predicated region
    $region29: #{c2_forward.3} parent=5 // pred_check
      %p221 = pneg %p220
    $region30: #{c2_forward.3} parent=5 // pred_check_branch
      %223 = sbr.rel (%p221) target = $region32
    $region31: #{c2_forward.3} parent=5 // pred_region
      // Predicated region
      $region33: #{c2_forward.3} parent=31 // pred_check
        %p224 = pneg %p47
      $region34: #{c2_forward.3} parent=31 // pred_check_branch
        %226 = sbr.rel (%p224) target = $region36
      $region35: #{c2_forward.3} parent=31 // pred_region
        %s227 = smul.u32 3, %s21
        %p228 = scmp.lt.s32.totalorder %s20, 1
        %s229 = scalar_select %p228, %s20, 1
        %p230 = scmp.lt.s32.totalorder %s227, 2
        %s231 = scalar_select %p230, %s227, 2
        %s232 = smul.addr %s229, 3
        %s233 = sadd.s32 %s231, %s232
        %s234 = smul.addr %s233, 8
        %s235 = scalar_lea.vmem %s0, %s234
        %s236 = smul.u32 3, %s21
      $region36: #{c2_forward.3} parent=31 // pred_fallthru
        _
    $region32: #{c2_forward.3} parent=5 // pred_fallthru
      _
    %p237 = scmp.le.s32.totalorder 1, %s13
    %p238 = scmp.lt.s32.totalorder %s13, 3
    %p239 = pnand %p237, %p238
    %p240 = pneg %p239
    // Predicated region
    $region37: #{c2_forward.3} parent=5 // pred_check
      _
    $region38: #{c2_forward.3} parent=5 // pred_check_branch
      %242 = sbr.rel (%p239) target = $region40
    $region39: #{c2_forward.3} parent=5 // pred_region
      %s243 = ssub.s32 %s13, 1
      %s244 = smul.u32 3, %s23
      %p245 = scmp.lt.s32.totalorder %s22, 1
      %s246 = scalar_select %p245, %s22, 1
      %p247 = scmp.lt.s32.totalorder %s244, 2
      %s248 = scalar_select %p247, %s244, 2
      %s249 = smul.addr %s246, 3
      %s250 = sadd.s32 %s248, %s249
      %s251 = smul.addr %s250, 8
      %s252 = scalar_lea.vmem %s0, %s251
      %p253 = pneg %p53
      %p254 = pneg %p50
      %p255 = pneg %p74
      %p256 = pneg %p71
      %p257 = pneg %p95
      %p258 = pneg %p92
      %p259 = pneg %p116
      %p260 = pneg %p113
      %p261 = pneg %p137
      %p262 = pneg %p134
      %p263 = pneg %p165
      %p264 = pneg %p162
      %s265 = smul.u32 3, %s23
      %p266 = scmp.lt.s32.totalorder %s22, 1
      %s267 = scalar_select %p266, %s22, 1
      %p268 = scmp.lt.s32.totalorder %s265, 2
      %s269 = scalar_select %p268, %s265, 2
      %s270 = smul.addr %s267, 3
      %s271 = sadd.s32 %s269, %s270
      %s272 = smul.addr %s271, 4
      %s273 = scalar_lea.vmem %s5, %s272
      %p274 = pneg %p193
      %p275 = pneg %p190
      %s276 = smul.u32 3, %s23
      %p277 = scmp.lt.s32.totalorder %s22, 1
      %s278 = scalar_select %p277, %s22, 1
      %p279 = scmp.lt.s32.totalorder %s276, 2
      %s280 = scalar_select %p279, %s276, 2
      %s281 = smul.addr %s278, 3
      %s282 = sadd.s32 %s280, %s281
      %s283 = smul.addr %s282, 4
      %s284 = scalar_lea.vmem %s6, %s283
      %s285 = smul.u32 3, %s23
      %p286 = scmp.lt.s32.totalorder %s22, 1
      %s287 = scalar_select %p286, %s22, 1
      %p288 = scmp.lt.s32.totalorder %s285, 2
      %s289 = scalar_select %p288, %s285, 2
      %s290 = smul.addr %s287, 3
      %s291 = sadd.s32 %s289, %s290
      %s292 = smul.addr %s291, 8
      %s293 = scalar_lea.vmem %s0, %s292
      %s294 = smul.u32 3, %s23
      %s295 = smul.u32 3, %s23
      %p296 = scmp.lt.s32.totalorder %s22, 1
      %s297 = scalar_select %p296, %s22, 1
      %p298 = scmp.lt.s32.totalorder %s295, 2
      %s299 = scalar_select %p298, %s295, 2
      %s300 = smul.addr %s297, 3
      %s301 = sadd.s32 %s299, %s300
      %s302 = smul.addr %s301, 4
      %s303 = scalar_lea.vmem %s5, %s302
      %s304 = smul.u32 3, %s23
      %s305 = smul.u32 3, %s23
      %p306 = scmp.lt.s32.totalorder %s22, 1
      %s307 = scalar_select %p306, %s22, 1
      %p308 = scmp.lt.s32.totalorder %s305, 2
      %s309 = scalar_select %p308, %s305, 2
      %s310 = smul.addr %s307, 3
      %s311 = sadd.s32 %s309, %s310
      %s312 = smul.addr %s311, 4
      %s313 = scalar_lea.vmem %s6, %s312
      %s314 = smul.u32 3, %s23
      %v316 = vld [vmem:[%s293] sm:$0xff]
      %v317 = vld [vmem:[%s293 + $0x8] sm:$0xff]
      %v318 = vld [vmem:[%s293 + $0x10] sm:$0xff]
      %v319 = vpack.c.bf16 %v316, %v316
      %v320 = vpack.c.bf16 %v317, %v317
      %v321 = vpack.c.bf16 %v318, %v318
      %v322 = vld [vmem:[%s1] sm:$0xf]
      %v323 = vld [vmem:[%s3] sm:$0xff]
      %325 = vset.pattern.permute.xlu0 0
      %326 = vperm.xlu0 %325, %v323
      %v327 = vpop.permute.xlu0 %326
      %vm329 = vcmask 64512
      %v331 = vsel %vm329, %v322, 0
      %vm333 = vcmask 1043456
      %v335 = vsel %vm333, %v319, 0
      %v338 = vsel %vm333, %v320, 0
      %v341 = vsel %vm333, %v321, 0
      %343 = vmatprep.subr.bf16.mxu0 %v338
      %344 = vmatpush1.bf16.msra.mxu0 %v335
      %345 = vmatprep.subr.bf16.mxu0 0
      %346 = vmatpush1.bf16.msra.mxu0 0
      %347 = vmatprep.subr.bf16.mxu0 0
      %348 = vmatpush1.bf16.msra.mxu0 0
      %349 = vmatprep.subr.bf16.mxu0 0
      %350 = vmatpush1.bf16.msra.mxu0 0
      %351 = vmatprep.subr.bf16.mxu0 0
      %352 = vmatpush1.bf16.msra.mxu0 0
      %353 = vmatprep.subr.bf16.mxu0 0
      %354 = vmatpush1.bf16.msra.mxu0 0
      %355 = vmatprep.subr.bf16.mxu0 0
      %356 = vmatpush1.bf16.msra.mxu0 0
      %357 = vmatprep.subr.bf16.mxu0 0
      %358 = vmatpush1.bf16.msra.mxu0 0
      %359 = vmatprep.subr.bf16.mxu0 0
      %360 = vmatpush1.bf16.msra.mxu0 0
      %361 = vmatprep.subr.bf16.mxu0 0
      %362 = vmatpush1.bf16.msra.mxu0 0
      %363 = vmatprep.subr.bf16.mxu0 0
      %364 = vmatpush1.bf16.msra.mxu0 0
      %365 = vmatprep.subr.bf16.mxu0 0
      %366 = vmatpush1.bf16.msra.mxu0 0
      %367 = vmatprep.subr.bf16.mxu0 0
      %368 = vmatpush1.bf16.msra.mxu0 0
      %369 = vmatprep.subr.bf16.mxu0 0
      %370 = vmatpush1.bf16.msra.mxu0 0
      %371 = vmatprep.subr.bf16.mxu0 0
      %372 = vmatpush1.bf16.msra.mxu0 0
      %373 = vmatprep.subr.bf16.mxu0 0
      %374 = vmatpush1.bf16.msra.mxu0 0
      %375 = vmatprep.mubr.bf16.mxu0 0
      %376 = vmatmul.mubr.bf16.gmra.mrb[0].mxu0 %v331
      %v377 = vpop.f32.mrb[0].mxu0
      %v378 = vadd.f32 %v327, %v377
      %v379 = vpop.f32.mrb[0].mxu0
      %v380 = vadd.f32 %v327, %v379
      %v381 = vpop.f32.mrb[0].mxu0
      %v382 = vpop.f32.mrb[0].mxu0
      %383 = vdwg.mxu0
      %384 = vmatprep.subr.bf16.mxu0 0
      %385 = vmatpush1.bf16.msra.mxu0 %v341
      %386 = vmatprep.subr.bf16.mxu0 0
      %387 = vmatpush1.bf16.msra.mxu0 0
      %388 = vmatprep.subr.bf16.mxu0 0
      %389 = vmatpush1.bf16.msra.mxu0 0
      %390 = vmatprep.subr.bf16.mxu0 0
      %391 = vmatpush1.bf16.msra.mxu0 0
      %392 = vmatprep.subr.bf16.mxu0 0
      %393 = vmatpush1.bf16.msra.mxu0 0
      %394 = vmatprep.subr.bf16.mxu0 0
      %395 = vmatpush1.bf16.msra.mxu0 0
      %396 = vmatprep.subr.bf16.mxu0 0
      %397 = vmatpush1.bf16.msra.mxu0 0
      %398 = vmatprep.subr.bf16.mxu0 0
      %399 = vmatpush1.bf16.msra.mxu0 0
      %400 = vmatprep.subr.bf16.mxu0 0
      %401 = vmatpush1.bf16.msra.mxu0 0
      %402 = vmatprep.subr.bf16.mxu0 0
      %403 = vmatpush1.bf16.msra.mxu0 0
      %404 = vmatprep.subr.bf16.mxu0 0
      %405 = vmatpush1.bf16.msra.mxu0 0
      %406 = vmatprep.subr.bf16.mxu0 0
      %407 = vmatpush1.bf16.msra.mxu0 0
      %408 = vmatprep.subr.bf16.mxu0 0
      %409 = vmatpush1.bf16.msra.mxu0 0
      %410 = vmatprep.subr.bf16.mxu0 0
      %411 = vmatpush1.bf16.msra.mxu0 0
      %412 = vmatprep.subr.bf16.mxu0 0
      %413 = vmatpush1.bf16.msra.mxu0 0
      %414 = vmatprep.subr.bf16.mxu0 0
      %415 = vmatpush1.bf16.msra.mxu0 0
      %416 = vmatprep.mubr.bf16.mxu0 0
      %417 = vmatmul.mubr.bf16.gmra.mrb[0].mxu0 %v331
      %v418 = vpop.f32.mrb[0].mxu0
      %v419 = vadd.f32 %v327, %v418
      %v420 = vpop.f32.mrb[0].mxu0
      %v421 = vpop.f32.mrb[0].mxu0
      %v422 = vpop.f32.mrb[0].mxu0
      %423 = vdwg.mxu0
      %v424 = vld [vmem:[%s2] sm:$0xf]
      %v425 = vld [vmem:[%s4] sm:$0xff]
      %427 = vset.pattern.permute.xlu0 0
      %428 = vperm.xlu0 %427, %v425
      %v429 = vpop.permute.xlu0 %428
      %v432 = vsel %vm329, %v424, 0
      %434 = vmatprep.subr.bf16.mxu0 %v338
      %435 = vmatpush1.bf16.msra.mxu0 %v335
      %436 = vmatprep.subr.bf16.mxu0 0
      %437 = vmatpush1.bf16.msra.mxu0 0
      %438 = vmatprep.subr.bf16.mxu0 0
      %439 = vmatpush1.bf16.msra.mxu0 0
      %440 = vmatprep.subr.bf16.mxu0 0
      %441 = vmatpush1.bf16.msra.mxu0 0
      %442 = vmatprep.subr.bf16.mxu0 0
      %443 = vmatpush1.bf16.msra.mxu0 0
      %444 = vmatprep.subr.bf16.mxu0 0
      %445 = vmatpush1.bf16.msra.mxu0 0
      %446 = vmatprep.subr.bf16.mxu0 0
      %447 = vmatpush1.bf16.msra.mxu0 0
      %448 = vmatprep.subr.bf16.mxu0 0
      %449 = vmatpush1.bf16.msra.mxu0 0
      %450 = vmatprep.subr.bf16.mxu0 0
      %451 = vmatpush1.bf16.msra.mxu0 0
      %452 = vmatprep.subr.bf16.mxu0 0
      %453 = vmatpush1.bf16.msra.mxu0 0
      %454 = vmatprep.subr.bf16.mxu0 0
      %455 = vmatpush1.bf16.msra.mxu0 0
      %456 = vmatprep.subr.bf16.mxu0 0
      %457 = vmatpush1.bf16.msra.mxu0 0
      %458 = vmatprep.subr.bf16.mxu0 0
      %459 = vmatpush1.bf16.msra.mxu0 0
      %460 = vmatprep.subr.bf16.mxu0 0
      %461 = vmatpush1.bf16.msra.mxu0 0
      %462 = vmatprep.subr.bf16.mxu0 0
      %463 = vmatpush1.bf16.msra.mxu0 0
      %464 = vmatprep.subr.bf16.mxu0 0
      %465 = vmatpush1.bf16.msra.mxu0 0
      %466 = vmatprep.mubr.bf16.mxu0 0
      %467 = vmatmul.mubr.bf16.gmra.mrb[0].mxu0 %v432
      %v468 = vpop.f32.mrb[0].mxu0
      %v469 = vadd.f32 %v429, %v468
      %v470 = vpop.f32.mrb[0].mxu0
      %v471 = vadd.f32 %v429, %v470
      %v472 = vpop.f32.mrb[0].mxu0
      %v473 = vpop.f32.mrb[0].mxu0
      %474 = vdwg.mxu0
      %475 = vmatprep.subr.bf16.mxu0 0
      %476 = vmatpush1.bf16.msra.mxu0 %v341
      %477 = vmatprep.subr.bf16.mxu0 0
      %478 = vmatpush1.bf16.msra.mxu0 0
      %479 = vmatprep.subr.bf16.mxu0 0
      %480 = vmatpush1.bf16.msra.mxu0 0
      %481 = vmatprep.subr.bf16.mxu0 0
      %482 = vmatpush1.bf16.msra.mxu0 0
      %483 = vmatprep.subr.bf16.mxu0 0
      %484 = vmatpush1.bf16.msra.mxu0 0
      %485 = vmatprep.subr.bf16.mxu0 0
      %486 = vmatpush1.bf16.msra.mxu0 0
      %487 = vmatprep.subr.bf16.mxu0 0
      %488 = vmatpush1.bf16.msra.mxu0 0
      %489 = vmatprep.subr.bf16.mxu0 0
      %490 = vmatpush1.bf16.msra.mxu0 0
      %491 = vmatprep.subr.bf16.mxu0 0
      %492 = vmatpush1.bf16.msra.mxu0 0
      %493 = vmatprep.subr.bf16.mxu0 0
      %494 = vmatpush1.bf16.msra.mxu0 0
      %495 = vmatprep.subr.bf16.mxu0 0
      %496 = vmatpush1.bf16.msra.mxu0 0
      %497 = vmatprep.subr.bf16.mxu0 0
      %498 = vmatpush1.bf16.msra.mxu0 0
      %499 = vmatprep.subr.bf16.mxu0 0
      %500 = vmatpush1.bf16.msra.mxu0 0
      %501 = vmatprep.subr.bf16.mxu0 0
      %502 = vmatpush1.bf16.msra.mxu0 0
      %503 = vmatprep.subr.bf16.mxu0 0
      %504 = vmatpush1.bf16.msra.mxu0 0
      %505 = vmatprep.subr.bf16.mxu0 0
      %506 = vmatpush1.bf16.msra.mxu0 0
      %507 = vmatprep.mubr.bf16.mxu0 0
      %508 = vmatmul.mubr.bf16.gmra.mrb[0].mxu0 %v432
      %v509 = vpop.f32.mrb[0].mxu0
      %v510 = vadd.f32 %v429, %v509
      %v511 = vpop.f32.mrb[0].mxu0
      %v512 = vpop.f32.mrb[0].mxu0
      %v513 = vpop.f32.mrb[0].mxu0
      %514 = vdwg.mxu0
      %v515 = vsub.f32 0.0, %v378
      %v516 = vsub.f32 0.0, %v380
      %v517 = vsub.f32 0.0, %v419
      %v518 = vmul.f32 %v515, 1.442695
      %v519 = vpow.pop %v518
      %v520 = vmul.f32 %v516, 1.442695
      %v521 = vpow.pop %v520
      %v522 = vmul.f32 %v517, 1.442695
      %v523 = vpow.pop %v522
      %v524 = vadd.f32 %v519, 1.0
      %v525 = vadd.f32 %v521, 1.0
      %v526 = vadd.f32 %v523, 1.0
      %v527 = vrcp.pop %v524
      %v528 = vmul.f32 1.0, %v527
      %v529 = vrcp.pop %v525
      %v530 = vmul.f32 1.0, %v529
      %v531 = vrcp.pop %v526
      %v532 = vmul.f32 1.0, %v531
      %v533 = vmul.f32 %v378, %v528
      %v534 = vmul.f32 %v380, %v530
      %v535 = vmul.f32 %v419, %v532
      %v536 = vpack.c.bf16 %v533, %v533
      %v537 = vpack.c.bf16 %v534, %v534
      %v538 = vpack.c.bf16 %v535, %v535
      %v542 = vunpack.c.l.b16 %v536
      %v543 = vunpack.c.l.b16 %v537
      %v544 = vunpack.c.l.b16 %v538
      %v545 = vpack.c.b16 %v543, %v542
      %v546 = vpack.c.b16 %v544, %v544
      %549 = vst [vmem:[%s303] sm:$0xff] %v545
      %vm550 = vcmask 257024
      %551 = vst.msk [vmem:[%s303 + $0x8] sm:$0xf] %vm550, %v546
      %v552 = vsub.f32 0.0, %v469
      %v553 = vsub.f32 0.0, %v471
      %v554 = vsub.f32 0.0, %v510
      %v555 = vmul.f32 %v552, 1.442695
      %v556 = vpow.pop %v555
      %v557 = vmul.f32 %v553, 1.442695
      %v558 = vpow.pop %v557
      %v559 = vmul.f32 %v554, 1.442695
      %v560 = vpow.pop %v559
      %v561 = vadd.f32 %v556, 1.0
      %v562 = vadd.f32 %v558, 1.0
      %v563 = vadd.f32 %v560, 1.0
      %v564 = vrcp.pop %v561
      %v565 = vmul.f32 1.0, %v564
      %v566 = vrcp.pop %v562
      %v567 = vmul.f32 1.0, %v566
      %v568 = vrcp.pop %v563
      %v569 = vmul.f32 1.0, %v568
      %v570 = vmul.f32 %v469, %v565
      %v571 = vmul.f32 %v471, %v567
      %v572 = vmul.f32 %v510, %v569
      %v573 = vpack.c.bf16 %v570, %v570
      %v574 = vpack.c.bf16 %v571, %v571
      %v575 = vpack.c.bf16 %v572, %v572
      %v579 = vunpack.c.l.b16 %v573
      %v580 = vunpack.c.l.b16 %v574
      %v581 = vunpack.c.l.b16 %v575
      %v582 = vpack.c.b16 %v580, %v579
      %v583 = vpack.c.b16 %v581, %v581
      %586 = vst [vmem:[%s313] sm:$0xff] %v582
      %587 = vst.msk [vmem:[%s313 + $0x8] sm:$0xf] %vm550, %v583
      %s588 = smul.u32 3, %s23
      %p589 = scmp.lt.s32.totalorder %s22, 1
      %s590 = scalar_select %p589, %s22, 1
      %p591 = scmp.lt.s32.totalorder %s588, 2
      %s592 = scalar_select %p591, %s588, 2
      %s593 = smul.addr %s590, 3
      %s594 = sadd.s32 %s592, %s593
      %s595 = smul.addr %s594, 4
      %s596 = scalar_lea.vmem %s5, %s595
      %s597 = smul.u32 3, %s23
      %p598 = scmp.lt.s32.totalorder %s22, 1
      %s599 = scalar_select %p598, %s22, 1
      %p600 = scmp.lt.s32.totalorder %s597, 2
      %s601 = scalar_select %p600, %s597, 2
      %s602 = smul.addr %s599, 3
      %s603 = sadd.s32 %s601, %s602
      %s604 = smul.addr %s603, 4
      %s605 = scalar_lea.vmem %s6, %s604
      // Predicated region
      $region41: #{c2_forward.3} parent=39 // pred_check
        %p606 = pneg %p162
      $region42: #{c2_forward.3} parent=39 // pred_check_branch
        %608 = sbr.rel (%p606) target = $region44
      $region43: #{c2_forward.3} parent=39 // pred_region
        %s609 = smul.u32 3, %s23
      $region44: #{c2_forward.3} parent=39 // pred_fallthru
        _
      // Predicated region
      $region45: #{c2_forward.3} parent=39 // pred_check
        %p610 = pneg %p190
      $region46: #{c2_forward.3} parent=39 // pred_check_branch
        %612 = sbr.rel (%p610) target = $region48
      $region47: #{c2_forward.3} parent=39 // pred_region
        %s613 = smul.u32 3, %s23
      $region48: #{c2_forward.3} parent=39 // pred_fallthru
        _
    $region40: #{c2_forward.3} parent=5 // pred_fallthru
      _
    %p614 = scmp.le.s32.totalorder 2, %s13
    // Predicated region
    $region49: #{c2_forward.3} parent=5 // pred_check
      %p615 = pneg %p614
    $region50: #{c2_forward.3} parent=5 // pred_check_branch
      %617 = sbr.rel (%p615) target = $region52
    $region51: #{c2_forward.3} parent=5 // pred_region
      %s618 = ssub.s32 %s13, 2
      // Predicated region
      $region53: #{c2_forward.3} parent=51 // pred_check
        %p619 = pneg %p168
      $region54: #{c2_forward.3} parent=51 // pred_check_branch
        %621 = sbr.rel (%p619) target = $region56
      $region55: #{c2_forward.3} parent=51 // pred_region
        %s622 = smul.u32 3, %s25
        %p623 = scmp.lt.s32.totalorder %s24, 1
        %s624 = scalar_select %p623, %s24, 1
        %p625 = scmp.lt.s32.totalorder %s622, 2
        %s626 = scalar_select %p625, %s622, 2
        %s627 = smul.addr %s624, 3
        %s628 = sadd.s32 %s626, %s627
        %s629 = smul.addr %s628, 4
        %s630 = scalar_lea.vmem %s5, %s629
      $region56: #{c2_forward.3} parent=51 // pred_fallthru
        _
      // Predicated region
      $region57: #{c2_forward.3} parent=51 // pred_check
        %p631 = pneg %p196
      $region58: #{c2_forward.3} parent=51 // pred_check_branch
        %633 = sbr.rel (%p631) target = $region60
      $region59: #{c2_forward.3} parent=51 // pred_region
        %s634 = smul.u32 3, %s25
        %p635 = scmp.lt.s32.totalorder %s24, 1
        %s636 = scalar_select %p635, %s24, 1
        %p637 = scmp.lt.s32.totalorder %s634, 2
        %s638 = scalar_select %p637, %s634, 2
        %s639 = smul.addr %s636, 3
        %s640 = sadd.s32 %s638, %s639
        %s641 = smul.addr %s640, 4
        %s642 = scalar_lea.vmem %s6, %s641
      $region60: #{c2_forward.3} parent=51 // pred_fallthru
        _
    $region52: #{c2_forward.3} parent=5 // pred_fallthru
      _
  $region6: #{c2_forward.3} parent=0 // loop_footer
    %s17 = sadd.s32 1, %s13
  $region7: #{c2_forward.3} parent=0 // loop_footer_branch
    %12 = sbr.rel target = $region3
  $region8: #{c2_forward.3} parent=0 // loop_exit
    _

// kernel: c2_forward.4
$region0: #{c2_forward.4}
  #allocation0 [shape = 'u32[]', space=smem, size = 0x4, offset = 0x4, fixed_abs, tag = 'smem constant byte address 0x4 - core index']
  #allocation1 [shape = 'u32[144,128]{1,0:T(1,128)}', space=vmem, size = 0x12000, scoped, tag = 'internal scratch']
  #allocation2 [shape = 'bf16[8,512]{1,0:T(8,128)(2,1)}', space=vmem, size = 0x2000, scoped, tag = 'scratch operand']
  %s0 = inlined_call_operand.vmem [shape: bf16[2,8,288], index: 0, kind: input, shape index: {}]
  %s1 = inlined_call_operand.vmem [shape: f32[1,288], index: 1, kind: input, shape index: {}]
  %s2 = inlined_call_operand.vmem [shape: bf16[9,8,8], index: 2, kind: input, shape index: {}]
  %s3 = inlined_call_operand.vmem [shape: f32[8,1], index: 3, kind: input, shape index: {}]
  %s4 = inlined_call_operand.vmem [shape: bf16[9,8,8], index: 4, kind: input, shape index: {}]
  %s5 = inlined_call_operand.vmem [shape: f32[8,1], index: 5, kind: input, shape index: {}]
  %s6 = inlined_call_operand.vmem [shape: bf16[2,8,288], index: 6, kind: output, shape index: {}]
  %s7 = sld [smem:[#allocation0]]
  $region57: #{c2_forward.4} parent=0
    _
  %s9 = ssub.s32 1, %s7
  %s10 = scalar_select 0, %s9, %s7
  loop: start=0, step=1, limit=4
  $region2: #{c2_forward.4} parent=0 // loop_pre_header
    _
  $region3: #{c2_forward.4} parent=0 // loop_header
    %s12 = sphi 0, %s16
    %p13 = scmp.ge.s32.totalorder %s12, 4
    %s22 = sphi 0, %s24
    %s25 = sphi 0, %s22
    %s26 = sphi 0, %s25
    %s42 = sphi 0, %s26
    %s46 = sphi 0, %s46
    %s48 = sphi 0, %s46
    %s49 = sphi 0, %s48
    %s63 = sphi 0, %s49
    %s67 = sphi 0, %s67
    %s69 = sphi 0, %s67
    %s70 = sphi 0, %s69
    %s84 = sphi 0, %s70
    %s88 = sphi 0, %s88
    %s90 = sphi 0, %s88
    %s91 = sphi 0, %s90
    %s105 = sphi 0, %s91
    %s109 = sphi 0, %s109
    %s111 = sphi 0, %s109
    %s112 = sphi 0, %s111
    %s126 = sphi 0, %s112
    %s130 = sphi 0, %s130
    %s132 = sphi 0, %s130
    %s133 = sphi 0, %s132
    %s147 = sphi 0, %s133
    %s153 = sphi 0, %s155
    %s156 = sphi 0, %s153
    %s157 = sphi 0, %s156
    %s173 = sphi 0, %s157
  $region4: #{c2_forward.4} parent=0 // loop_header_branch
    %15 = sbr.rel (%p13) target = $region8
  $region5: #{c2_forward.4} parent=0 // loop_body
    %s17 = ssub.s32 %s12, 1
    %s18 = ssub.s32 %s12, 2
    %s19 = sadd.s32 %s12, 1
    %s20 = ssub.s32 %s12, %s19
    %p21 = scmp.eq.s32.totalorder %s20, 0
    %s23 = sadd.s32 %s22, 1
    %s24 = scalar_select %p21, %s22, %s23
    %p27 = pneg %p21
    %p28 = scmp.eq.s32.totalorder %s12, 1
    %p29 = por %p27, %p28
    %p30 = scmp.ne.s32.totalorder %s22, %s25
    %p31 = scmp.eq.s32.totalorder %s12, 0
    %p32 = por %p30, %p31
    %p33 = scmp.ne.s32.totalorder %s22, %s25
    %p34 = scmp.eq.s32.totalorder %s17, 1
    %p35 = por %p33, %p34
    %p36 = scmp.ne.s32.totalorder %s25, %s26
    %p37 = scmp.eq.s32.totalorder %s17, 0
    %p38 = por %p36, %p37
    %p39 = scmp.ne.s32.totalorder %s25, %s26
    %p40 = scmp.eq.s32.totalorder %s18, 1
    %p41 = por %p39, %p40
    %p43 = scmp.ne.s32.totalorder %s26, %s42
    %p44 = scmp.eq.s32.totalorder %s18, 0
    %p45 = por %p43, %p44
    %s47 = sadd.s32 %s46, 1
    %p50 = scmp.eq.s32.totalorder %s12, 1
    %p51 = scmp.ne.s32.totalorder %s46, %s48
    %p52 = scmp.eq.s32.totalorder %s12, 0
    %p53 = por %p51, %p52
    %p54 = scmp.ne.s32.totalorder %s46, %s48
    %p55 = scmp.eq.s32.totalorder %s17, 1
    %p56 = por %p54, %p55
    %p57 = scmp.ne.s32.totalorder %s48, %s49
    %p58 = scmp.eq.s32.totalorder %s17, 0
    %p59 = por %p57, %p58
    %p60 = scmp.ne.s32.totalorder %s48, %s49
    %p61 = scmp.eq.s32.totalorder %s18, 1
    %p62 = por %p60, %p61
    %p64 = scmp.ne.s32.totalorder %s49, %s63
    %p65 = scmp.eq.s32.totalorder %s18, 0
    %p66 = por %p64, %p65
    %s68 = sadd.s32 %s67, 1
    %p71 = scmp.eq.s32.totalorder %s12, 1
    %p72 = scmp.ne.s32.totalorder %s67, %s69
    %p73 = scmp.eq.s32.totalorder %s12, 0
    %p74 = por %p72, %p73
    %p75 = scmp.ne.s32.totalorder %s67, %s69
    %p76 = scmp.eq.s32.totalorder %s17, 1
    %p77 = por %p75, %p76
    %p78 = scmp.ne.s32.totalorder %s69, %s70
    %p79 = scmp.eq.s32.totalorder %s17, 0
    %p80 = por %p78, %p79
    %p81 = scmp.ne.s32.totalorder %s69, %s70
    %p82 = scmp.eq.s32.totalorder %s18, 1
    %p83 = por %p81, %p82
    %p85 = scmp.ne.s32.totalorder %s70, %s84
    %p86 = scmp.eq.s32.totalorder %s18, 0
    %p87 = por %p85, %p86
    %s89 = sadd.s32 %s88, 1
    %p92 = scmp.eq.s32.totalorder %s12, 1
    %p93 = scmp.ne.s32.totalorder %s88, %s90
    %p94 = scmp.eq.s32.totalorder %s12, 0
    %p95 = por %p93, %p94
    %p96 = scmp.ne.s32.totalorder %s88, %s90
    %p97 = scmp.eq.s32.totalorder %s17, 1
    %p98 = por %p96, %p97
    %p99 = scmp.ne.s32.totalorder %s90, %s91
    %p100 = scmp.eq.s32.totalorder %s17, 0
    %p101 = por %p99, %p100
    %p102 = scmp.ne.s32.totalorder %s90, %s91
    %p103 = scmp.eq.s32.totalorder %s18, 1
    %p104 = por %p102, %p103
    %p106 = scmp.ne.s32.totalorder %s91, %s105
    %p107 = scmp.eq.s32.totalorder %s18, 0
    %p108 = por %p106, %p107
    %s110 = sadd.s32 %s109, 1
    %p113 = scmp.eq.s32.totalorder %s12, 1
    %p114 = scmp.ne.s32.totalorder %s109, %s111
    %p115 = scmp.eq.s32.totalorder %s12, 0
    %p116 = por %p114, %p115
    %p117 = scmp.ne.s32.totalorder %s109, %s111
    %p118 = scmp.eq.s32.totalorder %s17, 1
    %p119 = por %p117, %p118
    %p120 = scmp.ne.s32.totalorder %s111, %s112
    %p121 = scmp.eq.s32.totalorder %s17, 0
    %p122 = por %p120, %p121
    %p123 = scmp.ne.s32.totalorder %s111, %s112
    %p124 = scmp.eq.s32.totalorder %s18, 1
    %p125 = por %p123, %p124
    %p127 = scmp.ne.s32.totalorder %s112, %s126
    %p128 = scmp.eq.s32.totalorder %s18, 0
    %p129 = por %p127, %p128
    %s131 = sadd.s32 %s130, 1
    %p134 = scmp.eq.s32.totalorder %s12, 1
    %p135 = scmp.ne.s32.totalorder %s130, %s132
    %p136 = scmp.eq.s32.totalorder %s12, 0
    %p137 = por %p135, %p136
    %p138 = scmp.ne.s32.totalorder %s130, %s132
    %p139 = scmp.eq.s32.totalorder %s17, 1
    %p140 = por %p138, %p139
    %p141 = scmp.ne.s32.totalorder %s132, %s133
    %p142 = scmp.eq.s32.totalorder %s17, 0
    %p143 = por %p141, %p142
    %p144 = scmp.ne.s32.totalorder %s132, %s133
    %p145 = scmp.eq.s32.totalorder %s18, 1
    %p146 = por %p144, %p145
    %p148 = scmp.ne.s32.totalorder %s133, %s147
    %p149 = scmp.eq.s32.totalorder %s18, 0
    %p150 = por %p148, %p149
    %s151 = ssub.s32 %s12, %s19
    %p152 = scmp.eq.s32.totalorder %s151, 0
    %s154 = sadd.s32 %s153, 1
    %s155 = scalar_select %p152, %s153, %s154
    %p158 = pneg %p152
    %p159 = scmp.eq.s32.totalorder %s12, 1
    %p160 = por %p158, %p159
    %p161 = scmp.ne.s32.totalorder %s153, %s156
    %p162 = scmp.eq.s32.totalorder %s12, 0
    %p163 = por %p161, %p162
    %p164 = scmp.ne.s32.totalorder %s153, %s156
    %p165 = scmp.eq.s32.totalorder %s17, 1
    %p166 = por %p164, %p165
    %p167 = scmp.ne.s32.totalorder %s156, %s157
    %p168 = scmp.eq.s32.totalorder %s17, 0
    %p169 = por %p167, %p168
    %p170 = scmp.ne.s32.totalorder %s156, %s157
    %p171 = scmp.eq.s32.totalorder %s18, 1
    %p172 = por %p170, %p171
    %p174 = scmp.ne.s32.totalorder %s157, %s173
    %p175 = scmp.eq.s32.totalorder %s18, 0
    %p176 = por %p174, %p175
    %p177 = scmp.le.s32.totalorder 1, %s12
    %p178 = scmp.lt.s32.totalorder %s12, 3
    %p179 = pnand %p177, %p178
    %p180 = pneg %p179
    // Predicated region
    $region9: #{c2_forward.4} parent=5 // pred_check
      _
    $region10: #{c2_forward.4} parent=5 // pred_check_branch
      %182 = sbr.rel (%p179) target = $region12
    $region11: #{c2_forward.4} parent=5 // pred_region
      %s183 = ssub.s32 %s12, 1
      // Predicated region
      $region13: #{c2_forward.4} parent=11 // pred_check
        %p184 = pneg %p59
      $region14: #{c2_forward.4} parent=11 // pred_check_branch
        %186 = sbr.rel (%p184) target = $region16
      $region15: #{c2_forward.4} parent=11 // pred_region
        _
      $region16: #{c2_forward.4} parent=11 // pred_fallthru
        _
      // Predicated region
      $region17: #{c2_forward.4} parent=11 // pred_check
        %p187 = pneg %p80
      $region18: #{c2_forward.4} parent=11 // pred_check_branch
        %189 = sbr.rel (%p187) target = $region20
      $region19: #{c2_forward.4} parent=11 // pred_region
        _
      $region20: #{c2_forward.4} parent=11 // pred_fallthru
        _
      // Predicated region
      $region21: #{c2_forward.4} parent=11 // pred_check
        %p190 = pneg %p101
      $region22: #{c2_forward.4} parent=11 // pred_check_branch
        %192 = sbr.rel (%p190) target = $region24
      $region23: #{c2_forward.4} parent=11 // pred_region
        _
      $region24: #{c2_forward.4} parent=11 // pred_fallthru
        _
      // Predicated region
      $region25: #{c2_forward.4} parent=11 // pred_check
        %p193 = pneg %p122
      $region26: #{c2_forward.4} parent=11 // pred_check_branch
        %195 = sbr.rel (%p193) target = $region28
      $region27: #{c2_forward.4} parent=11 // pred_region
        _
      $region28: #{c2_forward.4} parent=11 // pred_fallthru
        _
      // Predicated region
      $region29: #{c2_forward.4} parent=11 // pred_check
        %p196 = pneg %p143
      $region30: #{c2_forward.4} parent=11 // pred_check_branch
        %198 = sbr.rel (%p196) target = $region32
      $region31: #{c2_forward.4} parent=11 // pred_region
        _
      $region32: #{c2_forward.4} parent=11 // pred_fallthru
        _
    $region12: #{c2_forward.4} parent=5 // pred_fallthru
      _
    %p199 = scmp.lt.s32.totalorder %s12, 2
    // Predicated region
    $region33: #{c2_forward.4} parent=5 // pred_check
      %p200 = pneg %p199
    $region34: #{c2_forward.4} parent=5 // pred_check_branch
      %202 = sbr.rel (%p200) target = $region36
    $region35: #{c2_forward.4} parent=5 // pred_region
      // Predicated region
      $region37: #{c2_forward.4} parent=35 // pred_check
        %p203 = pneg %p32
      $region38: #{c2_forward.4} parent=35 // pred_check_branch
        %205 = sbr.rel (%p203) target = $region40
      $region39: #{c2_forward.4} parent=35 // pred_region
        %p206 = scmp.lt.s32.totalorder %s12, 1
        %s207 = scalar_select %p206, %s12, 1
        %s208 = smul.addr %s207, 3
        %s209 = smul.addr %s208, 4
        %s210 = scalar_lea.vmem %s0, %s209
      $region40: #{c2_forward.4} parent=35 // pred_fallthru
        _
    $region36: #{c2_forward.4} parent=5 // pred_fallthru
      _
    %p211 = scmp.le.s32.totalorder 1, %s12
    %p212 = scmp.lt.s32.totalorder %s12, 3
    %p213 = pnand %p211, %p212
    %p214 = pneg %p213
    // Predicated region
    $region41: #{c2_forward.4} parent=5 // pred_check
      _
    $region42: #{c2_forward.4} parent=5 // pred_check_branch
      %216 = sbr.rel (%p213) target = $region44
    $region43: #{c2_forward.4} parent=5 // pred_region
      %s217 = ssub.s32 %s12, 1
      %p218 = scmp.lt.s32.totalorder %s17, 1
      %s219 = scalar_select %p218, %s17, 1
      %s220 = smul.addr %s219, 3
      %s221 = smul.addr %s220, 4
      %s222 = scalar_lea.vmem %s0, %s221
      %p223 = pneg %p38
      %p224 = pneg %p35
      %p225 = pneg %p59
      %p226 = pneg %p56
      %p227 = pneg %p80
      %p228 = pneg %p77
      %p229 = pneg %p101
      %p230 = pneg %p98
      %p231 = pneg %p122
      %p232 = pneg %p119
      %p233 = pneg %p143
      %p234 = pneg %p140
      %p235 = pneg %p169
      %p236 = pneg %p166
      %p237 = scmp.lt.s32.totalorder %s17, 1
      %s238 = scalar_select %p237, %s17, 1
      %s239 = smul.addr %s238, 3
      %s240 = smul.addr %s239, 4
      %s241 = scalar_lea.vmem %s6, %s240
      %p242 = scmp.lt.s32.totalorder %s17, 1
      %s243 = scalar_select %p242, %s17, 1
      %s244 = smul.addr %s243, 3
      %s245 = smul.addr %s244, 4
      %s246 = scalar_lea.vmem %s0, %s245
      %p247 = scmp.lt.s32.totalorder %s17, 1
      %s248 = scalar_select %p247, %s17, 1
      %s249 = smul.addr %s248, 3
      %s250 = smul.addr %s249, 4
      %s251 = scalar_lea.vmem %s6, %s250
      %v253 = vld [vmem:[%s1] sm:$0x7]
      %v254 = vld [vmem:[%s246] sm:$0xff]
      %v255 = vld [vmem:[%s246 + $0x8] sm:$0xf]
      %v256 = vunpack.c.l.bf16 %v254
      %v257 = vunpack.c.h.bf16 %v254
      %v258 = vunpack.c.l.bf16 %v255
      %259 = vst [vmem:[#allocation2] sm:$0xff] 0
      %260 = vst [vmem:[#allocation2 + $0x8] sm:$0xff] 0
      %v262 = vlaneseq
      %v263 = vshrl.u32 %v262, 7
      %v264 = vsub.s32 0, %v263
      %v265 = vrot.slane %v253, %v264
      %v266 = vlaneseq
      %v267 = vshrl.u32 %v266, 7
      %v268 = vsub.s32 1, %v267
      %v269 = vrot.slane %v253, %v268
      %v270 = vlaneseq
      %v271 = vshrl.u32 %v270, 7
      %v272 = vsub.s32 2, %v271
      %v273 = vrot.slane %v253, %v272
      %v277 = vmul.f32 %v256, %v265
      %v278 = vmul.f32 %v257, %v269
      %v279 = vmul.f32 %v258, %v273
      %v280 = vpack.c.bf16 %v277, %v277
      %v281 = vpack.c.bf16 %v278, %v278
      %v282 = vpack.c.bf16 %v279, %v279
      %v286 = vunpack.c.l.b16 %v280
      %v287 = vunpack.c.l.b16 %v281
      %v288 = vunpack.c.l.b16 %v282
      %v289 = vpack.c.b16 %v287, %v286
      %v290 = vpack.c.b16 %v288, %v288
      %293 = vst [vmem:[#allocation2 + $0x4] sm:$0xff] %v289
      %vm294 = vcmask 257024
      %295 = vst.msk [vmem:[#allocation2 + $0xc] sm:$0xf] %vm294, %v290
      %v296 = vld [vmem:[#allocation2] sm:$0xff]
      %v297 = vld [vmem:[#allocation2 + $0x8] sm:$0xff]
      %v298 = vld [vmem:[%s2] sm:$0xf]
      %s299 = scalar_lea.vmem %s2, 4
      %v300 = vld [vmem:[%s299] sm:$0xf]
      %v303 = vunpack.c.l.b16 %v296
      %v304 = vunpack.c.h.b16 %v296
      %v305 = vunpack.c.l.b16 %v297
      %v306 = vunpack.c.h.b16 %v297
      %v307 = vpack.c.b16 %v303, %v303
      %v308 = vpack.c.b16 %v304, %v304
      %v309 = vpack.c.b16 %v305, %v305
      %v310 = vpack.c.b16 %v306, %v306
      %311 = vrot.lane.b32.xlu0 %v307, 18
      %v312 = vpop.permute.xlu0 %311
      %313 = vrot.lane.b32.xlu0 %v308, 18
      %v314 = vpop.permute.xlu0 %313
      %315 = vrot.lane.b32.xlu0 %v309, 18
      %v316 = vpop.permute.xlu0 %315
      %317 = vrot.lane.b32.xlu0 %v310, 18
      %v318 = vpop.permute.xlu0 %317
      %vm319 = vcmask 146432
      %v320 = vsel %vm319, %v312, %v314
      %v321 = vsel %vm319, %v314, %v316
      %v322 = vsel %vm319, %v316, %v318
      %vm323 = vcmask 64512
      %v325 = vsel %vm323, %v300, 0
      %vm327 = vcmask 1043456
      %v329 = vsel %vm327, %v320, 0
      %v332 = vsel %vm327, %v321, 0
      %v335 = vsel %vm327, %v322, 0
      %337 = vmatprep.subr.bf16.mxu0 %v332
      %338 = vmatpush1.bf16.msra.mxu0 %v329
      %339 = vmatprep.subr.bf16.mxu0 0
      %340 = vmatpush1.bf16.msra.mxu0 0
      %341 = vmatprep.subr.bf16.mxu0 0
      %342 = vmatpush1.bf16.msra.mxu0 0
      %343 = vmatprep.subr.bf16.mxu0 0
      %344 = vmatpush1.bf16.msra.mxu0 0
      %345 = vmatprep.subr.bf16.mxu0 0
      %346 = vmatpush1.bf16.msra.mxu0 0
      %347 = vmatprep.subr.bf16.mxu0 0
      %348 = vmatpush1.bf16.msra.mxu0 0
      %349 = vmatprep.subr.bf16.mxu0 0
      %350 = vmatpush1.bf16.msra.mxu0 0
      %351 = vmatprep.subr.bf16.mxu0 0
      %352 = vmatpush1.bf16.msra.mxu0 0
      %353 = vmatprep.subr.bf16.mxu0 0
      %354 = vmatpush1.bf16.msra.mxu0 0
      %355 = vmatprep.subr.bf16.mxu0 0
      %356 = vmatpush1.bf16.msra.mxu0 0
      %357 = vmatprep.subr.bf16.mxu0 0
      %358 = vmatpush1.bf16.msra.mxu0 0
      %359 = vmatprep.subr.bf16.mxu0 0
      %360 = vmatpush1.bf16.msra.mxu0 0
      %361 = vmatprep.subr.bf16.mxu0 0
      %362 = vmatpush1.bf16.msra.mxu0 0
      %363 = vmatprep.subr.bf16.mxu0 0
      %364 = vmatpush1.bf16.msra.mxu0 0
      %365 = vmatprep.subr.bf16.mxu0 0
      %366 = vmatpush1.bf16.msra.mxu0 0
      %367 = vmatprep.subr.bf16.mxu0 0
      %368 = vmatpush1.bf16.msra.mxu0 0
      %369 = vmatprep.mubr.bf16.mxu0 0
      %370 = vmatmul.mubr.bf16.gmra.mrb[0].mxu0 %v325
      %v371 = vpop.f32.mrb[0].mxu0
      %v372 = vadd.f32 0.0, %v371
      %v373 = vpop.f32.mrb[0].mxu0
      %v374 = vadd.f32 0.0, %v373
      %v375 = vpop.f32.mrb[0].mxu0
      %v376 = vpop.f32.mrb[0].mxu0
      %377 = vdwg.mxu0
      %378 = vmatprep.subr.bf16.mxu0 0
      %379 = vmatpush1.bf16.msra.mxu0 %v335
      %380 = vmatprep.subr.bf16.mxu0 0
      %381 = vmatpush1.bf16.msra.mxu0 0
      %382 = vmatprep.subr.bf16.mxu0 0
      %383 = vmatpush1.bf16.msra.mxu0 0
      %384 = vmatprep.subr.bf16.mxu0 0
      %385 = vmatpush1.bf16.msra.mxu0 0
      %386 = vmatprep.subr.bf16.mxu0 0
      %387 = vmatpush1.bf16.msra.mxu0 0
      %388 = vmatprep.subr.bf16.mxu0 0
      %389 = vmatpush1.bf16.msra.mxu0 0
      %390 = vmatprep.subr.bf16.mxu0 0
      %391 = vmatpush1.bf16.msra.mxu0 0
      %392 = vmatprep.subr.bf16.mxu0 0
      %393 = vmatpush1.bf16.msra.mxu0 0
      %394 = vmatprep.subr.bf16.mxu0 0
      %395 = vmatpush1.bf16.msra.mxu0 0
      %396 = vmatprep.subr.bf16.mxu0 0
      %397 = vmatpush1.bf16.msra.mxu0 0
      %398 = vmatprep.subr.bf16.mxu0 0
      %399 = vmatpush1.bf16.msra.mxu0 0
      %400 = vmatprep.subr.bf16.mxu0 0
      %401 = vmatpush1.bf16.msra.mxu0 0
      %402 = vmatprep.subr.bf16.mxu0 0
      %403 = vmatpush1.bf16.msra.mxu0 0
      %404 = vmatprep.subr.bf16.mxu0 0
      %405 = vmatpush1.bf16.msra.mxu0 0
      %406 = vmatprep.subr.bf16.mxu0 0
      %407 = vmatpush1.bf16.msra.mxu0 0
      %408 = vmatprep.subr.bf16.mxu0 0
      %409 = vmatpush1.bf16.msra.mxu0 0
      %410 = vmatprep.mubr.bf16.mxu0 0
      %411 = vmatmul.mubr.bf16.gmra.mrb[0].mxu0 %v325
      %v412 = vpop.f32.mrb[0].mxu0
      %v413 = vadd.f32 0.0, %v412
      %v414 = vpop.f32.mrb[0].mxu0
      %v415 = vpop.f32.mrb[0].mxu0
      %v416 = vpop.f32.mrb[0].mxu0
      %417 = vdwg.mxu0
      %418 = vrot.lane.b32.xlu0 %v307, 19
      %v419 = vpop.permute.xlu0 %418
      %420 = vrot.lane.b32.xlu0 %v308, 19
      %v421 = vpop.permute.xlu0 %420
      %422 = vrot.lane.b32.xlu0 %v309, 19
      %v423 = vpop.permute.xlu0 %422
      %424 = vrot.lane.b32.xlu0 %v310, 19
      %v425 = vpop.permute.xlu0 %424
      %vm426 = vcmask 154624
      %v427 = vsel %vm426, %v419, %v421
      %v428 = vsel %vm426, %v421, %v423
      %v429 = vsel %vm426, %v423, %v425
      %v431 = vsel %vm323, %v298, 0
      %v434 = vsel %vm327, %v427, 0
      %v437 = vsel %vm327, %v428, 0
      %v440 = vsel %vm327, %v429, 0
      %442 = vmatprep.subr.bf16.mxu0 %v437
      %443 = vmatpush1.bf16.msra.mxu0 %v434
      %444 = vmatprep.subr.bf16.mxu0 0
      %445 = vmatpush1.bf16.msra.mxu0 0
      %446 = vmatprep.subr.bf16.mxu0 0
      %447 = vmatpush1.bf16.msra.mxu0 0
      %448 = vmatprep.subr.bf16.mxu0 0
      %449 = vmatpush1.bf16.msra.mxu0 0
      %450 = vmatprep.subr.bf16.mxu0 0
      %451 = vmatpush1.bf16.msra.mxu0 0
      %452 = vmatprep.subr.bf16.mxu0 0
      %453 = vmatpush1.bf16.msra.mxu0 0
      %454 = vmatprep.subr.bf16.mxu0 0
      %455 = vmatpush1.bf16.msra.mxu0 0
      %456 = vmatprep.subr.bf16.mxu0 0
      %457 = vmatpush1.bf16.msra.mxu0 0
      %458 = vmatprep.subr.bf16.mxu0 0
      %459 = vmatpush1.bf16.msra.mxu0 0
      %460 = vmatprep.subr.bf16.mxu0 0
      %461 = vmatpush1.bf16.msra.mxu0 0
      %462 = vmatprep.subr.bf16.mxu0 0
      %463 = vmatpush1.bf16.msra.mxu0 0
      %464 = vmatprep.subr.bf16.mxu0 0
      %465 = vmatpush1.bf16.msra.mxu0 0
      %466 = vmatprep.subr.bf16.mxu0 0
      %467 = vmatpush1.bf16.msra.mxu0 0
      %468 = vmatprep.subr.bf16.mxu0 0
      %469 = vmatpush1.bf16.msra.mxu0 0
      %470 = vmatprep.subr.bf16.mxu0 0
      %471 = vmatpush1.bf16.msra.mxu0 0
      %472 = vmatprep.subr.bf16.mxu0 0
      %473 = vmatpush1.bf16.msra.mxu0 0
      %474 = vmatprep.mubr.bf16.mxu0 0
      %475 = vmatmul.mubr.bf16.gmra.mrb[0].mxu0 %v431
      %v476 = vpop.f32.mrb[0].mxu0
      %v477 = vadd.f32 %v372, %v476
      %v478 = vpop.f32.mrb[0].mxu0
      %v479 = vadd.f32 %v374, %v478
      %v480 = vpop.f32.mrb[0].mxu0
      %v481 = vpop.f32.mrb[0].mxu0
      %482 = vdwg.mxu0
      %483 = vmatprep.subr.bf16.mxu0 0
      %484 = vmatpush1.bf16.msra.mxu0 %v440
      %485 = vmatprep.subr.bf16.mxu0 0
      %486 = vmatpush1.bf16.msra.mxu0 0
      %487 = vmatprep.subr.bf16.mxu0 0
      %488 = vmatpush1.bf16.msra.mxu0 0
      %489 = vmatprep.subr.bf16.mxu0 0
      %490 = vmatpush1.bf16.msra.mxu0 0
      %491 = vmatprep.subr.bf16.mxu0 0
      %492 = vmatpush1.bf16.msra.mxu0 0
      %493 = vmatprep.subr.bf16.mxu0 0
      %494 = vmatpush1.bf16.msra.mxu0 0
      %495 = vmatprep.subr.bf16.mxu0 0
      %496 = vmatpush1.bf16.msra.mxu0 0
      %497 = vmatprep.subr.bf16.mxu0 0
      %498 = vmatpush1.bf16.msra.mxu0 0
      %499 = vmatprep.subr.bf16.mxu0 0
      %500 = vmatpush1.bf16.msra.mxu0 0
      %501 = vmatprep.subr.bf16.mxu0 0
      %502 = vmatpush1.bf16.msra.mxu0 0
      %503 = vmatprep.subr.bf16.mxu0 0
      %504 = vmatpush1.bf16.msra.mxu0 0
      %505 = vmatprep.subr.bf16.mxu0 0
      %506 = vmatpush1.bf16.msra.mxu0 0
      %507 = vmatprep.subr.bf16.mxu0 0
      %508 = vmatpush1.bf16.msra.mxu0 0
      %509 = vmatprep.subr.bf16.mxu0 0
      %510 = vmatpush1.bf16.msra.mxu0 0
      %511 = vmatprep.subr.bf16.mxu0 0
      %512 = vmatpush1.bf16.msra.mxu0 0
      %513 = vmatprep.subr.bf16.mxu0 0
      %514 = vmatpush1.bf16.msra.mxu0 0
      %515 = vmatprep.mubr.bf16.mxu0 0
      %516 = vmatmul.mubr.bf16.gmra.mrb[0].mxu0 %v431
      %v517 = vpop.f32.mrb[0].mxu0
      %v518 = vadd.f32 %v413, %v517
      %v519 = vpop.f32.mrb[0].mxu0
      %v520 = vpop.f32.mrb[0].mxu0
      %v521 = vpop.f32.mrb[0].mxu0
      %522 = vdwg.mxu0
      %s523 = scalar_lea.vmem %s2, 8
      %v524 = vld [vmem:[%s523] sm:$0xf]
      %525 = vrot.lane.b32.xlu0 %v307, 17
      %v526 = vpop.permute.xlu0 %525
      %527 = vrot.lane.b32.xlu0 %v308, 17
      %v528 = vpop.permute.xlu0 %527
      %529 = vrot.lane.b32.xlu0 %v309, 17
      %v530 = vpop.permute.xlu0 %529
      %531 = vrot.lane.b32.xlu0 %v310, 17
      %v532 = vpop.permute.xlu0 %531
      %vm533 = vcmask 138240
      %v534 = vsel %vm533, %v526, %v528
      %v535 = vsel %vm533, %v528, %v530
      %v536 = vsel %vm533, %v530, %v532
      %v538 = vsel %vm323, %v524, 0
      %v541 = vsel %vm327, %v534, 0
      %v544 = vsel %vm327, %v535, 0
      %v547 = vsel %vm327, %v536, 0
      %549 = vmatprep.subr.bf16.mxu0 %v544
      %550 = vmatpush1.bf16.msra.mxu0 %v541
      %551 = vmatprep.subr.bf16.mxu0 0
      %552 = vmatpush1.bf16.msra.mxu0 0
      %553 = vmatprep.subr.bf16.mxu0 0
      %554 = vmatpush1.bf16.msra.mxu0 0
      %555 = vmatprep.subr.bf16.mxu0 0
      %556 = vmatpush1.bf16.msra.mxu0 0
      %557 = vmatprep.subr.bf16.mxu0 0
      %558 = vmatpush1.bf16.msra.mxu0 0
      %559 = vmatprep.subr.bf16.mxu0 0
      %560 = vmatpush1.bf16.msra.mxu0 0
      %561 = vmatprep.subr.bf16.mxu0 0
      %562 = vmatpush1.bf16.msra.mxu0 0
      %563 = vmatprep.subr.bf16.mxu0 0
      %564 = vmatpush1.bf16.msra.mxu0 0
      %565 = vmatprep.subr.bf16.mxu0 0
      %566 = vmatpush1.bf16.msra.mxu0 0
      %567 = vmatprep.subr.bf16.mxu0 0
      %568 = vmatpush1.bf16.msra.mxu0 0
      %569 = vmatprep.subr.bf16.mxu0 0
      %570 = vmatpush1.bf16.msra.mxu0 0
      %571 = vmatprep.subr.bf16.mxu0 0
      %572 = vmatpush1.bf16.msra.mxu0 0
      %573 = vmatprep.subr.bf16.mxu0 0
      %574 = vmatpush1.bf16.msra.mxu0 0
      %575 = vmatprep.subr.bf16.mxu0 0
      %576 = vmatpush1.bf16.msra.mxu0 0
      %577 = vmatprep.subr.bf16.mxu0 0
      %578 = vmatpush1.bf16.msra.mxu0 0
      %579 = vmatprep.subr.bf16.mxu0 0
      %580 = vmatpush1.bf16.msra.mxu0 0
      %581 = vmatprep.mubr.bf16.mxu0 0
      %582 = vmatmul.mubr.bf16.gmra.mrb[0].mxu0 %v538
      %v583 = vpop.f32.mrb[0].mxu0
      %v584 = vadd.f32 0.0, %v583
      %v585 = vpop.f32.mrb[0].mxu0
      %v586 = vadd.f32 0.0, %v585
      %v587 = vpop.f32.mrb[0].mxu0
      %v588 = vpop.f32.mrb[0].mxu0
      %589 = vdwg.mxu0
      %590 = vmatprep.subr.bf16.mxu0 0
      %591 = vmatpush1.bf16.msra.mxu0 %v547
      %592 = vmatprep.subr.bf16.mxu0 0
      %593 = vmatpush1.bf16.msra.mxu0 0
      %594 = vmatprep.subr.bf16.mxu0 0
      %595 = vmatpush1.bf16.msra.mxu0 0
      %596 = vmatprep.subr.bf16.mxu0 0
      %597 = vmatpush1.bf16.msra.mxu0 0
      %598 = vmatprep.subr.bf16.mxu0 0
      %599 = vmatpush1.bf16.msra.mxu0 0
      %600 = vmatprep.subr.bf16.mxu0 0
      %601 = vmatpush1.bf16.msra.mxu0 0
      %602 = vmatprep.subr.bf16.mxu0 0
      %603 = vmatpush1.bf16.msra.mxu0 0
      %604 = vmatprep.subr.bf16.mxu0 0
      %605 = vmatpush1.bf16.msra.mxu0 0
      %606 = vmatprep.subr.bf16.mxu0 0
      %607 = vmatpush1.bf16.msra.mxu0 0
      %608 = vmatprep.subr.bf16.mxu0 0
      %609 = vmatpush1.bf16.msra.mxu0 0
      %610 = vmatprep.subr.bf16.mxu0 0
      %611 = vmatpush1.bf16.msra.mxu0 0
      %612 = vmatprep.subr.bf16.mxu0 0
      %613 = vmatpush1.bf16.msra.mxu0 0
      %614 = vmatprep.subr.bf16.mxu0 0
      %615 = vmatpush1.bf16.msra.mxu0 0
      %616 = vmatprep.subr.bf16.mxu0 0
      %617 = vmatpush1.bf16.msra.mxu0 0
      %618 = vmatprep.subr.bf16.mxu0 0
      %619 = vmatpush1.bf16.msra.mxu0 0
      %620 = vmatprep.subr.bf16.mxu0 0
      %621 = vmatpush1.bf16.msra.mxu0 0
      %622 = vmatprep.mubr.bf16.mxu0 0
      %623 = vmatmul.mubr.bf16.gmra.mrb[0].mxu0 %v538
      %v624 = vpop.f32.mrb[0].mxu0
      %v625 = vadd.f32 0.0, %v624
      %v626 = vpop.f32.mrb[0].mxu0
      %v627 = vpop.f32.mrb[0].mxu0
      %v628 = vpop.f32.mrb[0].mxu0
      %629 = vdwg.mxu0
      %v630 = vadd.f32 %v477, %v584
      %v631 = vadd.f32 %v479, %v586
      %v632 = vadd.f32 %v518, %v625
      %s633 = scalar_lea.vmem %s2, 12
      %v634 = vld [vmem:[%s633] sm:$0xf]
      %635 = vrot.lane.b32.xlu0 %v307, 1
      %v636 = vpop.permute.xlu0 %635
      %637 = vrot.lane.b32.xlu0 %v308, 1
      %v638 = vpop.permute.xlu0 %637
      %639 = vrot.lane.b32.xlu0 %v309, 1
      %v640 = vpop.permute.xlu0 %639
      %641 = vrot.lane.b32.xlu0 %v310, 1
      %v642 = vpop.permute.xlu0 %641
      %vm643 = vcmask 7168
      %v644 = vsel %vm643, %v636, %v638
      %v645 = vsel %vm643, %v638, %v640
      %v646 = vsel %vm643, %v640, %v642
      %v648 = vsel %vm323, %v634, 0
      %v651 = vsel %vm327, %v644, 0
      %v654 = vsel %vm327, %v645, 0
      %v657 = vsel %vm327, %v646, 0
      %659 = vmatprep.subr.bf16.mxu0 %v654
      %660 = vmatpush1.bf16.msra.mxu0 %v651
      %661 = vmatprep.subr.bf16.mxu0 0
      %662 = vmatpush1.bf16.msra.mxu0 0
      %663 = vmatprep.subr.bf16.mxu0 0
      %664 = vmatpush1.bf16.msra.mxu0 0
      %665 = vmatprep.subr.bf16.mxu0 0
      %666 = vmatpush1.bf16.msra.mxu0 0
      %667 = vmatprep.subr.bf16.mxu0 0
      %668 = vmatpush1.bf16.msra.mxu0 0
      %669 = vmatprep.subr.bf16.mxu0 0
      %670 = vmatpush1.bf16.msra.mxu0 0
      %671 = vmatprep.subr.bf16.mxu0 0
      %672 = vmatpush1.bf16.msra.mxu0 0
      %673 = vmatprep.subr.bf16.mxu0 0
      %674 = vmatpush1.bf16.msra.mxu0 0
      %675 = vmatprep.subr.bf16.mxu0 0
      %676 = vmatpush1.bf16.msra.mxu0 0
      %677 = vmatprep.subr.bf16.mxu0 0
      %678 = vmatpush1.bf16.msra.mxu0 0
      %679 = vmatprep.subr.bf16.mxu0 0
      %680 = vmatpush1.bf16.msra.mxu0 0
      %681 = vmatprep.subr.bf16.mxu0 0
      %682 = vmatpush1.bf16.msra.mxu0 0
      %683 = vmatprep.subr.bf16.mxu0 0
      %684 = vmatpush1.bf16.msra.mxu0 0
      %685 = vmatprep.subr.bf16.mxu0 0
      %686 = vmatpush1.bf16.msra.mxu0 0
      %687 = vmatprep.subr.bf16.mxu0 0
      %688 = vmatpush1.bf16.msra.mxu0 0
      %689 = vmatprep.subr.bf16.mxu0 0
      %690 = vmatpush1.bf16.msra.mxu0 0
      %691 = vmatprep.mubr.bf16.mxu0 0
      %692 = vmatmul.mubr.bf16.gmra.mrb[0].mxu0 %v648
      %v693 = vpop.f32.mrb[0].mxu0
      %v694 = vadd.f32 0.0, %v693
      %v695 = vpop.f32.mrb[0].mxu0
      %v696 = vadd.f32 0.0, %v695
      %v697 = vpop.f32.mrb[0].mxu0
      %v698 = vpop.f32.mrb[0].mxu0
      %699 = vdwg.mxu0
      %700 = vmatprep.subr.bf16.mxu0 0
      %701 = vmatpush1.bf16.msra.mxu0 %v657
      %702 = vmatprep.subr.bf16.mxu0 0
      %703 = vmatpush1.bf16.msra.mxu0 0
      %704 = vmatprep.subr.bf16.mxu0 0
      %705 = vmatpush1.bf16.msra.mxu0 0
      %706 = vmatprep.subr.bf16.mxu0 0
      %707 = vmatpush1.bf16.msra.mxu0 0
      %708 = vmatprep.subr.bf16.mxu0 0
      %709 = vmatpush1.bf16.msra.mxu0 0
      %710 = vmatprep.subr.bf16.mxu0 0
      %711 = vmatpush1.bf16.msra.mxu0 0
      %712 = vmatprep.subr.bf16.mxu0 0
      %713 = vmatpush1.bf16.msra.mxu0 0
      %714 = vmatprep.subr.bf16.mxu0 0
      %715 = vmatpush1.bf16.msra.mxu0 0
      %716 = vmatprep.subr.bf16.mxu0 0
      %717 = vmatpush1.bf16.msra.mxu0 0
      %718 = vmatprep.subr.bf16.mxu0 0
      %719 = vmatpush1.bf16.msra.mxu0 0
      %720 = vmatprep.subr.bf16.mxu0 0
      %721 = vmatpush1.bf16.msra.mxu0 0
      %722 = vmatprep.subr.bf16.mxu0 0
      %723 = vmatpush1.bf16.msra.mxu0 0
      %724 = vmatprep.subr.bf16.mxu0 0
      %725 = vmatpush1.bf16.msra.mxu0 0
      %726 = vmatprep.subr.bf16.mxu0 0
      %727 = vmatpush1.bf16.msra.mxu0 0
      %728 = vmatprep.subr.bf16.mxu0 0
      %729 = vmatpush1.bf16.msra.mxu0 0
      %730 = vmatprep.subr.bf16.mxu0 0
      %731 = vmatpush1.bf16.msra.mxu0 0
      %732 = vmatprep.mubr.bf16.mxu0 0
      %733 = vmatmul.mubr.bf16.gmra.mrb[0].mxu0 %v648
      %v734 = vpop.f32.mrb[0].mxu0
      %v735 = vadd.f32 0.0, %v734
      %v736 = vpop.f32.mrb[0].mxu0
      %v737 = vpop.f32.mrb[0].mxu0
      %v738 = vpop.f32.mrb[0].mxu0
      %739 = vdwg.mxu0
      %v740 = vadd.f32 %v630, %v694
      %v741 = vadd.f32 %v631, %v696
      %v742 = vadd.f32 %v632, %v735
      %v743 = vld [vmem:[#allocation2 + $0x4] sm:$0xff]
      %v744 = vld [vmem:[#allocation2 + $0xc] sm:$0xf]
      %s745 = scalar_lea.vmem %s2, 16
      %v746 = vld [vmem:[%s745] sm:$0xf]
      %v749 = vunpack.c.l.b16 %v743
      %v750 = vunpack.c.h.b16 %v743
      %v751 = vunpack.c.l.b16 %v744
      %v752 = vpack.c.b16 %v749, %v749
      %v753 = vpack.c.b16 %v750, %v750
      %v754 = vpack.c.b16 %v751, %v751
      %v756 = vsel %vm323, %v746, 0
      %v759 = vsel %vm327, %v752, 0
      %v762 = vsel %vm327, %v753, 0
      %v765 = vsel %vm327, %v754, 0
      %767 = vmatprep.subr.bf16.mxu0 %v762
      %768 = vmatpush1.bf16.msra.mxu0 %v759
      %769 = vmatprep.subr.bf16.mxu0 0
      %770 = vmatpush1.bf16.msra.mxu0 0
      %771 = vmatprep.subr.bf16.mxu0 0
      %772 = vmatpush1.bf16.msra.mxu0 0
      %773 = vmatprep.subr.bf16.mxu0 0
      %774 = vmatpush1.bf16.msra.mxu0 0
      %775 = vmatprep.subr.bf16.mxu0 0
      %776 = vmatpush1.bf16.msra.mxu0 0
      %777 = vmatprep.subr.bf16.mxu0 0
      %778 = vmatpush1.bf16.msra.mxu0 0
      %779 = vmatprep.subr.bf16.mxu0 0
      %780 = vmatpush1.bf16.msra.mxu0 0
      %781 = vmatprep.subr.bf16.mxu0 0
      %782 = vmatpush1.bf16.msra.mxu0 0
      %783 = vmatprep.subr.bf16.mxu0 0
      %784 = vmatpush1.bf16.msra.mxu0 0
      %785 = vmatprep.subr.bf16.mxu0 0
      %786 = vmatpush1.bf16.msra.mxu0 0
      %787 = vmatprep.subr.bf16.mxu0 0
      %788 = vmatpush1.bf16.msra.mxu0 0
      %789 = vmatprep.subr.bf16.mxu0 0
      %790 = vmatpush1.bf16.msra.mxu0 0
      %791 = vmatprep.subr.bf16.mxu0 0
      %792 = vmatpush1.bf16.msra.mxu0 0
      %793 = vmatprep.subr.bf16.mxu0 0
      %794 = vmatpush1.bf16.msra.mxu0 0
      %795 = vmatprep.subr.bf16.mxu0 0
      %796 = vmatpush1.bf16.msra.mxu0 0
      %797 = vmatprep.subr.bf16.mxu0 0
      %798 = vmatpush1.bf16.msra.mxu0 0
      %799 = vmatprep.mubr.bf16.mxu0 0
      %800 = vmatmul.mubr.bf16.gmra.mrb[0].mxu0 %v756
      %v801 = vpop.f32.mrb[0].mxu0
      %v802 = vadd.f32 0.0, %v801
      %v803 = vpop.f32.mrb[0].mxu0
      %v804 = vadd.f32 0.0, %v803
      %v805 = vpop.f32.mrb[0].mxu0
      %v806 = vpop.f32.mrb[0].mxu0
      %807 = vdwg.mxu0
      %808 = vmatprep.subr.bf16.mxu0 0
      %809 = vmatpush1.bf16.msra.mxu0 %v765
      %810 = vmatprep.subr.bf16.mxu0 0
      %811 = vmatpush1.bf16.msra.mxu0 0
      %812 = vmatprep.subr.bf16.mxu0 0
      %813 = vmatpush1.bf16.msra.mxu0 0
      %814 = vmatprep.subr.bf16.mxu0 0
      %815 = vmatpush1.bf16.msra.mxu0 0
      %816 = vmatprep.subr.bf16.mxu0 0
      %817 = vmatpush1.bf16.msra.mxu0 0
      %818 = vmatprep.subr.bf16.mxu0 0
      %819 = vmatpush1.bf16.msra.mxu0 0
      %820 = vmatprep.subr.bf16.mxu0 0
      %821 = vmatpush1.bf16.msra.mxu0 0
      %822 = vmatprep.subr.bf16.mxu0 0
      %823 = vmatpush1.bf16.msra.mxu0 0
      %824 = vmatprep.subr.bf16.mxu0 0
      %825 = vmatpush1.bf16.msra.mxu0 0
      %826 = vmatprep.subr.bf16.mxu0 0
      %827 = vmatpush1.bf16.msra.mxu0 0
      %828 = vmatprep.subr.bf16.mxu0 0
      %829 = vmatpush1.bf16.msra.mxu0 0
      %830 = vmatprep.subr.bf16.mxu0 0
      %831 = vmatpush1.bf16.msra.mxu0 0
      %832 = vmatprep.subr.bf16.mxu0 0
      %833 = vmatpush1.bf16.msra.mxu0 0
      %834 = vmatprep.subr.bf16.mxu0 0
      %835 = vmatpush1.bf16.msra.mxu0 0
      %836 = vmatprep.subr.bf16.mxu0 0
      %837 = vmatpush1.bf16.msra.mxu0 0
      %838 = vmatprep.subr.bf16.mxu0 0
      %839 = vmatpush1.bf16.msra.mxu0 0
      %840 = vmatprep.mubr.bf16.mxu0 0
      %841 = vmatmul.mubr.bf16.gmra.mrb[0].mxu0 %v756
      %v842 = vpop.f32.mrb[0].mxu0
      %v843 = vadd.f32 0.0, %v842
      %v844 = vpop.f32.mrb[0].mxu0
      %v845 = vpop.f32.mrb[0].mxu0
      %v846 = vpop.f32.mrb[0].mxu0
      %847 = vdwg.mxu0
      %v848 = vadd.f32 %v740, %v802
      %v849 = vadd.f32 %v741, %v804
      %v850 = vadd.f32 %v742, %v843
      %s851 = scalar_lea.vmem %s2, 20
      %v852 = vld [vmem:[%s851] sm:$0xf]
      %853 = vrot.lane.b32.xlu0 %v752, 127
      %v854 = vpop.permute.xlu0 %853
      %855 = vrot.lane.b32.xlu0 %v753, 127
      %v856 = vpop.permute.xlu0 %855
      %857 = vrot.lane.b32.xlu0 %v754, 127
      %v858 = vpop.permute.xlu0 %857
      %vm859 = vcmask 1039360
      %v860 = vsel %vm859, %v854, %v856
      %v861 = vsel %vm859, %v856, %v858
      %v863 = vsel %vm323, %v852, 0
      %v866 = vsel %vm327, %v860, 0
      %v869 = vsel %vm327, %v861, 0
      %v872 = vsel %vm327, %v858, 0
      %874 = vmatprep.subr.bf16.mxu0 %v869
      %875 = vmatpush1.bf16.msra.mxu0 %v866
      %876 = vmatprep.subr.bf16.mxu0 0
      %877 = vmatpush1.bf16.msra.mxu0 0
      %878 = vmatprep.subr.bf16.mxu0 0
      %879 = vmatpush1.bf16.msra.mxu0 0
      %880 = vmatprep.subr.bf16.mxu0 0
      %881 = vmatpush1.bf16.msra.mxu0 0
      %882 = vmatprep.subr.bf16.mxu0 0
      %883 = vmatpush1.bf16.msra.mxu0 0
      %884 = vmatprep.subr.bf16.mxu0 0
      %885 = vmatpush1.bf16.msra.mxu0 0
      %886 = vmatprep.subr.bf16.mxu0 0
      %887 = vmatpush1.bf16.msra.mxu0 0
      %888 = vmatprep.subr.bf16.mxu0 0
      %889 = vmatpush1.bf16.msra.mxu0 0
      %890 = vmatprep.subr.bf16.mxu0 0
      %891 = vmatpush1.bf16.msra.mxu0 0
      %892 = vmatprep.subr.bf16.mxu0 0
      %893 = vmatpush1.bf16.msra.mxu0 0
      %894 = vmatprep.subr.bf16.mxu0 0
      %895 = vmatpush1.bf16.msra.mxu0 0
      %896 = vmatprep.subr.bf16.mxu0 0
      %897 = vmatpush1.bf16.msra.mxu0 0
      %898 = vmatprep.subr.bf16.mxu0 0
      %899 = vmatpush1.bf16.msra.mxu0 0
      %900 = vmatprep.subr.bf16.mxu0 0
      %901 = vmatpush1.bf16.msra.mxu0 0
      %902 = vmatprep.subr.bf16.mxu0 0
      %903 = vmatpush1.bf16.msra.mxu0 0
      %904 = vmatprep.subr.bf16.mxu0 0
      %905 = vmatpush1.bf16.msra.mxu0 0
      %906 = vmatprep.mubr.bf16.mxu0 0
      %907 = vmatmul.mubr.bf16.gmra.mrb[0].mxu0 %v863
      %v908 = vpop.f32.mrb[0].mxu0
      %v909 = vadd.f32 0.0, %v908
      %v910 = vpop.f32.mrb[0].mxu0
      %v911 = vadd.f32 0.0, %v910
      %v912 = vpop.f32.mrb[0].mxu0
      %v913 = vpop.f32.mrb[0].mxu0
      %914 = vdwg.mxu0
      %915 = vmatprep.subr.bf16.mxu0 0
      %916 = vmatpush1.bf16.msra.mxu0 %v872
      %917 = vmatprep.subr.bf16.mxu0 0
      %918 = vmatpush1.bf16.msra.mxu0 0
      %919 = vmatprep.subr.bf16.mxu0 0
      %920 = vmatpush1.bf16.msra.mxu0 0
      %921 = vmatprep.subr.bf16.mxu0 0
      %922 = vmatpush1.bf16.msra.mxu0 0
      %923 = vmatprep.subr.bf16.mxu0 0
      %924 = vmatpush1.bf16.msra.mxu0 0
      %925 = vmatprep.subr.bf16.mxu0 0
      %926 = vmatpush1.bf16.msra.mxu0 0
      %927 = vmatprep.subr.bf16.mxu0 0
      %928 = vmatpush1.bf16.msra.mxu0 0
      %929 = vmatprep.subr.bf16.mxu0 0
      %930 = vmatpush1.bf16.msra.mxu0 0
      %931 = vmatprep.subr.bf16.mxu0 0
      %932 = vmatpush1.bf16.msra.mxu0 0
      %933 = vmatprep.subr.bf16.mxu0 0
      %934 = vmatpush1.bf16.msra.mxu0 0
      %935 = vmatprep.subr.bf16.mxu0 0
      %936 = vmatpush1.bf16.msra.mxu0 0
      %937 = vmatprep.subr.bf16.mxu0 0
      %938 = vmatpush1.bf16.msra.mxu0 0
      %939 = vmatprep.subr.bf16.mxu0 0
      %940 = vmatpush1.bf16.msra.mxu0 0
      %941 = vmatprep.subr.bf16.mxu0 0
      %942 = vmatpush1.bf16.msra.mxu0 0
      %943 = vmatprep.subr.bf16.mxu0 0
      %944 = vmatpush1.bf16.msra.mxu0 0
      %945 = vmatprep.subr.bf16.mxu0 0
      %946 = vmatpush1.bf16.msra.mxu0 0
      %947 = vmatprep.mubr.bf16.mxu0 0
      %948 = vmatmul.mubr.bf16.gmra.mrb[0].mxu0 %v863
      %v949 = vpop.f32.mrb[0].mxu0
      %v950 = vadd.f32 0.0, %v949
      %v951 = vpop.f32.mrb[0].mxu0
      %v952 = vpop.f32.mrb[0].mxu0
      %v953 = vpop.f32.mrb[0].mxu0
      %954 = vdwg.mxu0
      %v955 = vadd.f32 %v848, %v909
      %v956 = vadd.f32 %v849, %v911
      %v957 = vadd.f32 %v850, %v950
      %s958 = scalar_lea.vmem %s2, 24
      %v959 = vld [vmem:[%s958] sm:$0xf]
      %960 = vrot.lane.b32.xlu0 %v752, 111
      %v961 = vpop.permute.xlu0 %960
      %962 = vrot.lane.b32.xlu0 %v753, 111
      %v963 = vpop.permute.xlu0 %962
      %964 = vrot.lane.b32.xlu0 %v754, 111
      %v965 = vpop.permute.xlu0 %964
      %vm966 = vcmask 908288
      %v967 = vsel %vm966, %v961, %v963
      %v968 = vsel %vm966, %v963, %v965
      %v970 = vsel %vm323, %v959, 0
      %v973 = vsel %vm327, %v967, 0
      %v976 = vsel %vm327, %v968, 0
      %v979 = vsel %vm327, %v965, 0
      %981 = vmatprep.subr.bf16.mxu0 %v976
      %982 = vmatpush1.bf16.msra.mxu0 %v973
      %983 = vmatprep.subr.bf16.mxu0 0
      %984 = vmatpush1.bf16.msra.mxu0 0
      %985 = vmatprep.subr.bf16.mxu0 0
      %986 = vmatpush1.bf16.msra.mxu0 0
      %987 = vmatprep.subr.bf16.mxu0 0
      %988 = vmatpush1.bf16.msra.mxu0 0
      %989 = vmatprep.subr.bf16.mxu0 0
      %990 = vmatpush1.bf16.msra.mxu0 0
      %991 = vmatprep.subr.bf16.mxu0 0
      %992 = vmatpush1.bf16.msra.mxu0 0
      %993 = vmatprep.subr.bf16.mxu0 0
      %994 = vmatpush1.bf16.msra.mxu0 0
      %995 = vmatprep.subr.bf16.mxu0 0
      %996 = vmatpush1.bf16.msra.mxu0 0
      %997 = vmatprep.subr.bf16.mxu0 0
      %998 = vmatpush1.bf16.msra.mxu0 0
      %999 = vmatprep.subr.bf16.mxu0 0
      %1000 = vmatpush1.bf16.msra.mxu0 0
      %1001 = vmatprep.subr.bf16.mxu0 0
      %1002 = vmatpush1.bf16.msra.mxu0 0
      %1003 = vmatprep.subr.bf16.mxu0 0
      %1004 = vmatpush1.bf16.msra.mxu0 0
      %1005 = vmatprep.subr.bf16.mxu0 0
      %1006 = vmatpush1.bf16.msra.mxu0 0
      %1007 = vmatprep.subr.bf16.mxu0 0
      %1008 = vmatpush1.bf16.msra.mxu0 0
      %1009 = vmatprep.subr.bf16.mxu0 0
      %1010 = vmatpush1.bf16.msra.mxu0 0
      %1011 = vmatprep.subr.bf16.mxu0 0
      %1012 = vmatpush1.bf16.msra.mxu0 0
      %1013 = vmatprep.mubr.bf16.mxu0 0
      %1014 = vmatmul.mubr.bf16.gmra.mrb[0].mxu0 %v970
      %v1015 = vpop.f32.mrb[0].mxu0
      %v1016 = vadd.f32 0.0, %v1015
      %v1017 = vpop.f32.mrb[0].mxu0
      %v1018 = vadd.f32 0.0, %v1017
      %v1019 = vpop.f32.mrb[0].mxu0
      %v1020 = vpop.f32.mrb[0].mxu0
      %1021 = vdwg.mxu0
      %1022 = vmatprep.subr.bf16.mxu0 0
      %1023 = vmatpush1.bf16.msra.mxu0 %v979
      %1024 = vmatprep.subr.bf16.mxu0 0
      %1025 = vmatpush1.bf16.msra.mxu0 0
      %1026 = vmatprep.subr.bf16.mxu0 0
      %1027 = vmatpush1.bf16.msra.mxu0 0
      %1028 = vmatprep.subr.bf16.mxu0 0
      %1029 = vmatpush1.bf16.msra.mxu0 0
      %1030 = vmatprep.subr.bf16.mxu0 0
      %1031 = vmatpush1.bf16.msra.mxu0 0
      %1032 = vmatprep.subr.bf16.mxu0 0
      %1033 = vmatpush1.bf16.msra.mxu0 0
      %1034 = vmatprep.subr.bf16.mxu0 0
      %1035 = vmatpush1.bf16.msra.mxu0 0
      %1036 = vmatprep.subr.bf16.mxu0 0
      %1037 = vmatpush1.bf16.msra.mxu0 0
      %1038 = vmatprep.subr.bf16.mxu0 0
      %1039 = vmatpush1.bf16.msra.mxu0 0
      %1040 = vmatprep.subr.bf16.mxu0 0
      %1041 = vmatpush1.bf16.msra.mxu0 0
      %1042 = vmatprep.subr.bf16.mxu0 0
      %1043 = vmatpush1.bf16.msra.mxu0 0
      %1044 = vmatprep.subr.bf16.mxu0 0
      %1045 = vmatpush1.bf16.msra.mxu0 0
      %1046 = vmatprep.subr.bf16.mxu0 0
      %1047 = vmatpush1.bf16.msra.mxu0 0
      %1048 = vmatprep.subr.bf16.mxu0 0
      %1049 = vmatpush1.bf16.msra.mxu0 0
      %1050 = vmatprep.subr.bf16.mxu0 0
      %1051 = vmatpush1.bf16.msra.mxu0 0
      %1052 = vmatprep.subr.bf16.mxu0 0
      %1053 = vmatpush1.bf16.msra.mxu0 0
      %1054 = vmatprep.mubr.bf16.mxu0 0
      %1055 = vmatmul.mubr.bf16.gmra.mrb[0].mxu0 %v970
      %v1056 = vpop.f32.mrb[0].mxu0
      %v1057 = vadd.f32 0.0, %v1056
      %v1058 = vpop.f32.mrb[0].mxu0
      %v1059 = vpop.f32.mrb[0].mxu0
      %v1060 = vpop.f32.mrb[0].mxu0
      %1061 = vdwg.mxu0
      %v1062 = vadd.f32 %v955, %v1016
      %v1063 = vadd.f32 %v956, %v1018
      %v1064 = vadd.f32 %v957, %v1057
      %s1065 = scalar_lea.vmem %s2, 28
      %v1066 = vld [vmem:[%s1065] sm:$0xf]
      %1067 = vrot.lane.b32.xlu0 %v752, 110
      %v1068 = vpop.permute.xlu0 %1067
      %1069 = vrot.lane.b32.xlu0 %v753, 110
      %v1070 = vpop.permute.xlu0 %1069
      %1071 = vrot.lane.b32.xlu0 %v754, 110
      %v1072 = vpop.permute.xlu0 %1071
      %vm1073 = vcmask 900096
      %v1074 = vsel %vm1073, %v1068, %v1070
      %v1075 = vsel %vm1073, %v1070, %v1072
      %v1077 = vsel %vm323, %v1066, 0
      %v1080 = vsel %vm327, %v1074, 0
      %v1083 = vsel %vm327, %v1075, 0
      %v1086 = vsel %vm327, %v1072, 0
      %1088 = vmatprep.subr.bf16.mxu0 %v1083
      %1089 = vmatpush1.bf16.msra.mxu0 %v1080
      %1090 = vmatprep.subr.bf16.mxu0 0
      %1091 = vmatpush1.bf16.msra.mxu0 0
      %1092 = vmatprep.subr.bf16.mxu0 0
      %1093 = vmatpush1.bf16.msra.mxu0 0
      %1094 = vmatprep.subr.bf16.mxu0 0
      %1095 = vmatpush1.bf16.msra.mxu0 0
      %1096 = vmatprep.subr.bf16.mxu0 0
      %1097 = vmatpush1.bf16.msra.mxu0 0
      %1098 = vmatprep.subr.bf16.mxu0 0
      %1099 = vmatpush1.bf16.msra.mxu0 0
      %1100 = vmatprep.subr.bf16.mxu0 0
      %1101 = vmatpush1.bf16.msra.mxu0 0
      %1102 = vmatprep.subr.bf16.mxu0 0
      %1103 = vmatpush1.bf16.msra.mxu0 0
      %1104 = vmatprep.subr.bf16.mxu0 0
      %1105 = vmatpush1.bf16.msra.mxu0 0
      %1106 = vmatprep.subr.bf16.mxu0 0
      %1107 = vmatpush1.bf16.msra.mxu0 0
      %1108 = vmatprep.subr.bf16.mxu0 0
      %1109 = vmatpush1.bf16.msra.mxu0 0
      %1110 = vmatprep.subr.bf16.mxu0 0
      %1111 = vmatpush1.bf16.msra.mxu0 0
      %1112 = vmatprep.subr.bf16.mxu0 0
      %1113 = vmatpush1.bf16.msra.mxu0 0
      %1114 = vmatprep.subr.bf16.mxu0 0
      %1115 = vmatpush1.bf16.msra.mxu0 0
      %1116 = vmatprep.subr.bf16.mxu0 0
      %1117 = vmatpush1.bf16.msra.mxu0 0
      %1118 = vmatprep.subr.bf16.mxu0 0
      %1119 = vmatpush1.bf16.msra.mxu0 0
      %1120 = vmatprep.mubr.bf16.mxu0 0
      %1121 = vmatmul.mubr.bf16.gmra.mrb[0].mxu0 %v1077
      %v1122 = vpop.f32.mrb[0].mxu0
      %v1123 = vadd.f32 0.0, %v1122
      %v1124 = vpop.f32.mrb[0].mxu0
      %v1125 = vadd.f32 0.0, %v1124
      %v1126 = vpop.f32.mrb[0].mxu0
      %v1127 = vpop.f32.mrb[0].mxu0
      %1128 = vdwg.mxu0
      %1129 = vmatprep.subr.bf16.mxu0 0
      %1130 = vmatpush1.bf16.msra.mxu0 %v1086
      %1131 = vmatprep.subr.bf16.mxu0 0
      %1132 = vmatpush1.bf16.msra.mxu0 0
      %1133 = vmatprep.subr.bf16.mxu0 0
      %1134 = vmatpush1.bf16.msra.mxu0 0
      %1135 = vmatprep.subr.bf16.mxu0 0
      %1136 = vmatpush1.bf16.msra.mxu0 0
      %1137 = vmatprep.subr.bf16.mxu0 0
      %1138 = vmatpush1.bf16.msra.mxu0 0
      %1139 = vmatprep.subr.bf16.mxu0 0
      %1140 = vmatpush1.bf16.msra.mxu0 0
      %1141 = vmatprep.subr.bf16.mxu0 0
      %1142 = vmatpush1.bf16.msra.mxu0 0
      %1143 = vmatprep.subr.bf16.mxu0 0
      %1144 = vmatpush1.bf16.msra.mxu0 0
      %1145 = vmatprep.subr.bf16.mxu0 0
      %1146 = vmatpush1.bf16.msra.mxu0 0
      %1147 = vmatprep.subr.bf16.mxu0 0
      %1148 = vmatpush1.bf16.msra.mxu0 0
      %1149 = vmatprep.subr.bf16.mxu0 0
      %1150 = vmatpush1.bf16.msra.mxu0 0
      %1151 = vmatprep.subr.bf16.mxu0 0
      %1152 = vmatpush1.bf16.msra.mxu0 0
      %1153 = vmatprep.subr.bf16.mxu0 0
      %1154 = vmatpush1.bf16.msra.mxu0 0
      %1155 = vmatprep.subr.bf16.mxu0 0
      %1156 = vmatpush1.bf16.msra.mxu0 0
      %1157 = vmatprep.subr.bf16.mxu0 0
      %1158 = vmatpush1.bf16.msra.mxu0 0
      %1159 = vmatprep.subr.bf16.mxu0 0
      %1160 = vmatpush1.bf16.msra.mxu0 0
      %1161 = vmatprep.mubr.bf16.mxu0 0
      %1162 = vmatmul.mubr.bf16.gmra.mrb[0].mxu0 %v1077
      %v1163 = vpop.f32.mrb[0].mxu0
      %v1164 = vadd.f32 0.0, %v1163
      %v1165 = vpop.f32.mrb[0].mxu0
      %v1166 = vpop.f32.mrb[0].mxu0
      %v1167 = vpop.f32.mrb[0].mxu0
      %1168 = vdwg.mxu0
      %v1169 = vadd.f32 %v1062, %v1123
      %v1170 = vadd.f32 %v1063, %v1125
      %v1171 = vadd.f32 %v1064, %v1164
      %s1172 = scalar_lea.vmem %s2, 32
      %v1173 = vld [vmem:[%s1172] sm:$0xf]
      %1174 = vrot.lane.b32.xlu0 %v752, 109
      %v1175 = vpop.permute.xlu0 %1174
      %1176 = vrot.lane.b32.xlu0 %v753, 109
      %v1177 = vpop.permute.xlu0 %1176
      %1178 = vrot.lane.b32.xlu0 %v754, 109
      %v1179 = vpop.permute.xlu0 %1178
      %vm1180 = vcmask 891904
      %v1181 = vsel %vm1180, %v1175, %v1177
      %v1182 = vsel %vm1180, %v1177, %v1179
      %v1184 = vsel %vm323, %v1173, 0
      %v1187 = vsel %vm327, %v1181, 0
      %v1190 = vsel %vm327, %v1182, 0
      %v1193 = vsel %vm327, %v1179, 0
      %1195 = vmatprep.subr.bf16.mxu0 %v1190
      %1196 = vmatpush1.bf16.msra.mxu0 %v1187
      %1197 = vmatprep.subr.bf16.mxu0 0
      %1198 = vmatpush1.bf16.msra.mxu0 0
      %1199 = vmatprep.subr.bf16.mxu0 0
      %1200 = vmatpush1.bf16.msra.mxu0 0
      %1201 = vmatprep.subr.bf16.mxu0 0
      %1202 = vmatpush1.bf16.msra.mxu0 0
      %1203 = vmatprep.subr.bf16.mxu0 0
      %1204 = vmatpush1.bf16.msra.mxu0 0
      %1205 = vmatprep.subr.bf16.mxu0 0
      %1206 = vmatpush1.bf16.msra.mxu0 0
      %1207 = vmatprep.subr.bf16.mxu0 0
      %1208 = vmatpush1.bf16.msra.mxu0 0
      %1209 = vmatprep.subr.bf16.mxu0 0
      %1210 = vmatpush1.bf16.msra.mxu0 0
      %1211 = vmatprep.subr.bf16.mxu0 0
      %1212 = vmatpush1.bf16.msra.mxu0 0
      %1213 = vmatprep.subr.bf16.mxu0 0
      %1214 = vmatpush1.bf16.msra.mxu0 0
      %1215 = vmatprep.subr.bf16.mxu0 0
      %1216 = vmatpush1.bf16.msra.mxu0 0
      %1217 = vmatprep.subr.bf16.mxu0 0
      %1218 = vmatpush1.bf16.msra.mxu0 0
      %1219 = vmatprep.subr.bf16.mxu0 0
      %1220 = vmatpush1.bf16.msra.mxu0 0
      %1221 = vmatprep.subr.bf16.mxu0 0
      %1222 = vmatpush1.bf16.msra.mxu0 0
      %1223 = vmatprep.subr.bf16.mxu0 0
      %1224 = vmatpush1.bf16.msra.mxu0 0
      %1225 = vmatprep.subr.bf16.mxu0 0
      %1226 = vmatpush1.bf16.msra.mxu0 0
      %1227 = vmatprep.mubr.bf16.mxu0 0
      %1228 = vmatmul.mubr.bf16.gmra.mrb[0].mxu0 %v1184
      %v1229 = vpop.f32.mrb[0].mxu0
      %v1230 = vadd.f32 0.0, %v1229
      %v1231 = vpop.f32.mrb[0].mxu0
      %v1232 = vadd.f32 0.0, %v1231
      %v1233 = vpop.f32.mrb[0].mxu0
      %v1234 = vpop.f32.mrb[0].mxu0
      %1235 = vdwg.mxu0
      %1236 = vmatprep.subr.bf16.mxu0 0
      %1237 = vmatpush1.bf16.msra.mxu0 %v1193
      %1238 = vmatprep.subr.bf16.mxu0 0
      %1239 = vmatpush1.bf16.msra.mxu0 0
      %1240 = vmatprep.subr.bf16.mxu0 0
      %1241 = vmatpush1.bf16.msra.mxu0 0
      %1242 = vmatprep.subr.bf16.mxu0 0
      %1243 = vmatpush1.bf16.msra.mxu0 0
      %1244 = vmatprep.subr.bf16.mxu0 0
      %1245 = vmatpush1.bf16.msra.mxu0 0
      %1246 = vmatprep.subr.bf16.mxu0 0
      %1247 = vmatpush1.bf16.msra.mxu0 0
      %1248 = vmatprep.subr.bf16.mxu0 0
      %1249 = vmatpush1.bf16.msra.mxu0 0
      %1250 = vmatprep.subr.bf16.mxu0 0
      %1251 = vmatpush1.bf16.msra.mxu0 0
      %1252 = vmatprep.subr.bf16.mxu0 0
      %1253 = vmatpush1.bf16.msra.mxu0 0
      %1254 = vmatprep.subr.bf16.mxu0 0
      %1255 = vmatpush1.bf16.msra.mxu0 0
      %1256 = vmatprep.subr.bf16.mxu0 0
      %1257 = vmatpush1.bf16.msra.mxu0 0
      %1258 = vmatprep.subr.bf16.mxu0 0
      %1259 = vmatpush1.bf16.msra.mxu0 0
      %1260 = vmatprep.subr.bf16.mxu0 0
      %1261 = vmatpush1.bf16.msra.mxu0 0
      %1262 = vmatprep.subr.bf16.mxu0 0
      %1263 = vmatpush1.bf16.msra.mxu0 0
      %1264 = vmatprep.subr.bf16.mxu0 0
      %1265 = vmatpush1.bf16.msra.mxu0 0
      %1266 = vmatprep.subr.bf16.mxu0 0
      %1267 = vmatpush1.bf16.msra.mxu0 0
      %1268 = vmatprep.mubr.bf16.mxu0 0
      %1269 = vmatmul.mubr.bf16.gmra.mrb[0].mxu0 %v1184
      %v1270 = vpop.f32.mrb[0].mxu0
      %v1271 = vadd.f32 0.0, %v1270
      %v1272 = vpop.f32.mrb[0].mxu0
      %v1273 = vpop.f32.mrb[0].mxu0
      %v1274 = vpop.f32.mrb[0].mxu0
      %1275 = vdwg.mxu0
      %v1276 = vadd.f32 %v1169, %v1230
      %v1277 = vadd.f32 %v1170, %v1232
      %v1278 = vadd.f32 %v1171, %v1271
      %v1279 = vld [vmem:[%s3] sm:$0xff]
      %1281 = vset.pattern.permute.xlu0 0
      %1282 = vperm.xlu0 %1281, %v1279
      %v1283 = vpop.permute.xlu0 %1282
      %v1285 = vadd.f32 %v1276, %v1283
      %v1286 = vadd.f32 %v1277, %v1283
      %v1287 = vadd.f32 %v1278, %v1283
      %v1288 = vsub.f32 0.0, %v1285
      %v1289 = vsub.f32 0.0, %v1286
      %v1290 = vsub.f32 0.0, %v1287
      %v1291 = vmul.f32 %v1288, 1.442695
      %v1292 = vpow.pop %v1291
      %v1293 = vmul.f32 %v1289, 1.442695
      %v1294 = vpow.pop %v1293
      %v1295 = vmul.f32 %v1290, 1.442695
      %v1296 = vpow.pop %v1295
      %v1297 = vadd.f32 %v1292, 1.0
      %v1298 = vadd.f32 %v1294, 1.0
      %v1299 = vadd.f32 %v1296, 1.0
      %v1300 = vrcp.pop %v1297
      %v1301 = vmul.f32 1.0, %v1300
      %v1302 = vrcp.pop %v1298
      %v1303 = vmul.f32 1.0, %v1302
      %v1304 = vrcp.pop %v1299
      %v1305 = vmul.f32 1.0, %v1304
      %v1306 = vmul.f32 %v1285, %v1301
      %v1307 = vmul.f32 %v1286, %v1303
      %v1308 = vmul.f32 %v1287, %v1305
      %v1309 = vmul.f32 %v1306, %v265
      %v1310 = vmul.f32 %v1307, %v269
      %v1311 = vmul.f32 %v1308, %v273
      %v1312 = vpack.c.bf16 %v1309, %v1309
      %v1313 = vpack.c.bf16 %v1310, %v1310
      %v1314 = vpack.c.bf16 %v1311, %v1311
      %v1318 = vunpack.c.l.b16 %v1312
      %v1319 = vunpack.c.l.b16 %v1313
      %v1320 = vunpack.c.l.b16 %v1314
      %v1321 = vpack.c.b16 %v1319, %v1318
      %v1322 = vpack.c.b16 %v1320, %v1320
      %1325 = vst [vmem:[#allocation2 + $0x4] sm:$0xff] %v1321
      %1326 = vst.msk [vmem:[#allocation2 + $0xc] sm:$0xf] %vm294, %v1322
      %v1327 = vld [vmem:[#allocation2] sm:$0xff]
      %v1328 = vld [vmem:[#allocation2 + $0x8] sm:$0xff]
      %v1329 = vld [vmem:[%s4] sm:$0xf]
      %s1330 = scalar_lea.vmem %s4, 4
      %v1331 = vld [vmem:[%s1330] sm:$0xf]
      %v1334 = vunpack.c.l.b16 %v1327
      %v1335 = vunpack.c.h.b16 %v1327
      %v1336 = vunpack.c.l.b16 %v1328
      %v1337 = vunpack.c.h.b16 %v1328
      %v1338 = vpack.c.b16 %v1334, %v1334
      %v1339 = vpack.c.b16 %v1335, %v1335
      %v1340 = vpack.c.b16 %v1336, %v1336
      %v1341 = vpack.c.b16 %v1337, %v1337
      %1342 = vrot.lane.b32.xlu0 %v1338, 18
      %v1343 = vpop.permute.xlu0 %1342
      %1344 = vrot.lane.b32.xlu0 %v1339, 18
      %v1345 = vpop.permute.xlu0 %1344
      %1346 = vrot.lane.b32.xlu0 %v1340, 18
      %v1347 = vpop.permute.xlu0 %1346
      %1348 = vrot.lane.b32.xlu0 %v1341, 18
      %v1349 = vpop.permute.xlu0 %1348
      %v1350 = vsel %vm319, %v1343, %v1345
      %v1351 = vsel %vm319, %v1345, %v1347
      %v1352 = vsel %vm319, %v1347, %v1349
      %v1354 = vsel %vm323, %v1331, 0
      %v1357 = vsel %vm327, %v1350, 0
      %v1360 = vsel %vm327, %v1351, 0
      %v1363 = vsel %vm327, %v1352, 0
      %1365 = vmatprep.subr.bf16.mxu0 %v1360
      %1366 = vmatpush1.bf16.msra.mxu0 %v1357
      %1367 = vmatprep.subr.bf16.mxu0 0
      %1368 = vmatpush1.bf16.msra.mxu0 0
      %1369 = vmatprep.subr.bf16.mxu0 0
      %1370 = vmatpush1.bf16.msra.mxu0 0
      %1371 = vmatprep.subr.bf16.mxu0 0
      %1372 = vmatpush1.bf16.msra.mxu0 0
      %1373 = vmatprep.subr.bf16.mxu0 0
      %1374 = vmatpush1.bf16.msra.mxu0 0
      %1375 = vmatprep.subr.bf16.mxu0 0
      %1376 = vmatpush1.bf16.msra.mxu0 0
      %1377 = vmatprep.subr.bf16.mxu0 0
      %1378 = vmatpush1.bf16.msra.mxu0 0
      %1379 = vmatprep.subr.bf16.mxu0 0
      %1380 = vmatpush1.bf16.msra.mxu0 0
      %1381 = vmatprep.subr.bf16.mxu0 0
      %1382 = vmatpush1.bf16.msra.mxu0 0
      %1383 = vmatprep.subr.bf16.mxu0 0
      %1384 = vmatpush1.bf16.msra.mxu0 0
      %1385 = vmatprep.subr.bf16.mxu0 0
      %1386 = vmatpush1.bf16.msra.mxu0 0
      %1387 = vmatprep.subr.bf16.mxu0 0
      %1388 = vmatpush1.bf16.msra.mxu0 0
      %1389 = vmatprep.subr.bf16.mxu0 0
      %1390 = vmatpush1.bf16.msra.mxu0 0
      %1391 = vmatprep.subr.bf16.mxu0 0
      %1392 = vmatpush1.bf16.msra.mxu0 0
      %1393 = vmatprep.subr.bf16.mxu0 0
      %1394 = vmatpush1.bf16.msra.mxu0 0
      %1395 = vmatprep.subr.bf16.mxu0 0
      %1396 = vmatpush1.bf16.msra.mxu0 0
      %1397 = vmatprep.mubr.bf16.mxu0 0
      %1398 = vmatmul.mubr.bf16.gmra.mrb[0].mxu0 %v1354
      %v1399 = vpop.f32.mrb[0].mxu0
      %v1400 = vadd.f32 0.0, %v1399
      %v1401 = vpop.f32.mrb[0].mxu0
      %v1402 = vadd.f32 0.0, %v1401
      %v1403 = vpop.f32.mrb[0].mxu0
      %v1404 = vpop.f32.mrb[0].mxu0
      %1405 = vdwg.mxu0
      %1406 = vmatprep.subr.bf16.mxu0 0
      %1407 = vmatpush1.bf16.msra.mxu0 %v1363
      %1408 = vmatprep.subr.bf16.mxu0 0
      %1409 = vmatpush1.bf16.msra.mxu0 0
      %1410 = vmatprep.subr.bf16.mxu0 0
      %1411 = vmatpush1.bf16.msra.mxu0 0
      %1412 = vmatprep.subr.bf16.mxu0 0
      %1413 = vmatpush1.bf16.msra.mxu0 0
      %1414 = vmatprep.subr.bf16.mxu0 0
      %1415 = vmatpush1.bf16.msra.mxu0 0
      %1416 = vmatprep.subr.bf16.mxu0 0
      %1417 = vmatpush1.bf16.msra.mxu0 0
      %1418 = vmatprep.subr.bf16.mxu0 0
      %1419 = vmatpush1.bf16.msra.mxu0 0
      %1420 = vmatprep.subr.bf16.mxu0 0
      %1421 = vmatpush1.bf16.msra.mxu0 0
      %1422 = vmatprep.subr.bf16.mxu0 0
      %1423 = vmatpush1.bf16.msra.mxu0 0
      %1424 = vmatprep.subr.bf16.mxu0 0
      %1425 = vmatpush1.bf16.msra.mxu0 0
      %1426 = vmatprep.subr.bf16.mxu0 0
      %1427 = vmatpush1.bf16.msra.mxu0 0
      %1428 = vmatprep.subr.bf16.mxu0 0
      %1429 = vmatpush1.bf16.msra.mxu0 0
      %1430 = vmatprep.subr.bf16.mxu0 0
      %1431 = vmatpush1.bf16.msra.mxu0 0
      %1432 = vmatprep.subr.bf16.mxu0 0
      %1433 = vmatpush1.bf16.msra.mxu0 0
      %1434 = vmatprep.subr.bf16.mxu0 0
      %1435 = vmatpush1.bf16.msra.mxu0 0
      %1436 = vmatprep.subr.bf16.mxu0 0
      %1437 = vmatpush1.bf16.msra.mxu0 0
      %1438 = vmatprep.mubr.bf16.mxu0 0
      %1439 = vmatmul.mubr.bf16.gmra.mrb[0].mxu0 %v1354
      %v1440 = vpop.f32.mrb[0].mxu0
      %v1441 = vadd.f32 0.0, %v1440
      %v1442 = vpop.f32.mrb[0].mxu0
      %v1443 = vpop.f32.mrb[0].mxu0
      %v1444 = vpop.f32.mrb[0].mxu0
      %1445 = vdwg.mxu0
      %1446 = vrot.lane.b32.xlu0 %v1338, 19
      %v1447 = vpop.permute.xlu0 %1446
      %1448 = vrot.lane.b32.xlu0 %v1339, 19
      %v1449 = vpop.permute.xlu0 %1448
      %1450 = vrot.lane.b32.xlu0 %v1340, 19
      %v1451 = vpop.permute.xlu0 %1450
      %1452 = vrot.lane.b32.xlu0 %v1341, 19
      %v1453 = vpop.permute.xlu0 %1452
      %v1454 = vsel %vm426, %v1447, %v1449
      %v1455 = vsel %vm426, %v1449, %v1451
      %v1456 = vsel %vm426, %v1451, %v1453
      %v1458 = vsel %vm323, %v1329, 0
      %v1461 = vsel %vm327, %v1454, 0
      %v1464 = vsel %vm327, %v1455, 0
      %v1467 = vsel %vm327, %v1456, 0
      %1469 = vmatprep.subr.bf16.mxu0 %v1464
      %1470 = vmatpush1.bf16.msra.mxu0 %v1461
      %1471 = vmatprep.subr.bf16.mxu0 0
      %1472 = vmatpush1.bf16.msra.mxu0 0
      %1473 = vmatprep.subr.bf16.mxu0 0
      %1474 = vmatpush1.bf16.msra.mxu0 0
      %1475 = vmatprep.subr.bf16.mxu0 0
      %1476 = vmatpush1.bf16.msra.mxu0 0
      %1477 = vmatprep.subr.bf16.mxu0 0
      %1478 = vmatpush1.bf16.msra.mxu0 0
      %1479 = vmatprep.subr.bf16.mxu0 0
      %1480 = vmatpush1.bf16.msra.mxu0 0
      %1481 = vmatprep.subr.bf16.mxu0 0
      %1482 = vmatpush1.bf16.msra.mxu0 0
      %1483 = vmatprep.subr.bf16.mxu0 0
      %1484 = vmatpush1.bf16.msra.mxu0 0
      %1485 = vmatprep.subr.bf16.mxu0 0
      %1486 = vmatpush1.bf16.msra.mxu0 0
      %1487 = vmatprep.subr.bf16.mxu0 0
      %1488 = vmatpush1.bf16.msra.mxu0 0
      %1489 = vmatprep.subr.bf16.mxu0 0
      %1490 = vmatpush1.bf16.msra.mxu0 0
      %1491 = vmatprep.subr.bf16.mxu0 0
      %1492 = vmatpush1.bf16.msra.mxu0 0
      %1493 = vmatprep.subr.bf16.mxu0 0
      %1494 = vmatpush1.bf16.msra.mxu0 0
      %1495 = vmatprep.subr.bf16.mxu0 0
      %1496 = vmatpush1.bf16.msra.mxu0 0
      %1497 = vmatprep.subr.bf16.mxu0 0
      %1498 = vmatpush1.bf16.msra.mxu0 0
      %1499 = vmatprep.subr.bf16.mxu0 0
      %1500 = vmatpush1.bf16.msra.mxu0 0
      %1501 = vmatprep.mubr.bf16.mxu0 0
      %1502 = vmatmul.mubr.bf16.gmra.mrb[0].mxu0 %v1458
      %v1503 = vpop.f32.mrb[0].mxu0
      %v1504 = vadd.f32 %v1400, %v1503
      %v1505 = vpop.f32.mrb[0].mxu0
      %v1506 = vadd.f32 %v1402, %v1505
      %v1507 = vpop.f32.mrb[0].mxu0
      %v1508 = vpop.f32.mrb[0].mxu0
      %1509 = vdwg.mxu0
      %1510 = vmatprep.subr.bf16.mxu0 0
      %1511 = vmatpush1.bf16.msra.mxu0 %v1467
      %1512 = vmatprep.subr.bf16.mxu0 0
      %1513 = vmatpush1.bf16.msra.mxu0 0
      %1514 = vmatprep.subr.bf16.mxu0 0
      %1515 = vmatpush1.bf16.msra.mxu0 0
      %1516 = vmatprep.subr.bf16.mxu0 0
      %1517 = vmatpush1.bf16.msra.mxu0 0
      %1518 = vmatprep.subr.bf16.mxu0 0
      %1519 = vmatpush1.bf16.msra.mxu0 0
      %1520 = vmatprep.subr.bf16.mxu0 0
      %1521 = vmatpush1.bf16.msra.mxu0 0
      %1522 = vmatprep.subr.bf16.mxu0 0
      %1523 = vmatpush1.bf16.msra.mxu0 0
      %1524 = vmatprep.subr.bf16.mxu0 0
      %1525 = vmatpush1.bf16.msra.mxu0 0
      %1526 = vmatprep.subr.bf16.mxu0 0
      %1527 = vmatpush1.bf16.msra.mxu0 0
      %1528 = vmatprep.subr.bf16.mxu0 0
      %1529 = vmatpush1.bf16.msra.mxu0 0
      %1530 = vmatprep.subr.bf16.mxu0 0
      %1531 = vmatpush1.bf16.msra.mxu0 0
      %1532 = vmatprep.subr.bf16.mxu0 0
      %1533 = vmatpush1.bf16.msra.mxu0 0
      %1534 = vmatprep.subr.bf16.mxu0 0
      %1535 = vmatpush1.bf16.msra.mxu0 0
      %1536 = vmatprep.subr.bf16.mxu0 0
      %1537 = vmatpush1.bf16.msra.mxu0 0
      %1538 = vmatprep.subr.bf16.mxu0 0
      %1539 = vmatpush1.bf16.msra.mxu0 0
      %1540 = vmatprep.subr.bf16.mxu0 0
      %1541 = vmatpush1.bf16.msra.mxu0 0
      %1542 = vmatprep.mubr.bf16.mxu0 0
      %1543 = vmatmul.mubr.bf16.gmra.mrb[0].mxu0 %v1458
      %v1544 = vpop.f32.mrb[0].mxu0
      %v1545 = vadd.f32 %v1441, %v1544
      %v1546 = vpop.f32.mrb[0].mxu0
      %v1547 = vpop.f32.mrb[0].mxu0
      %v1548 = vpop.f32.mrb[0].mxu0
      %1549 = vdwg.mxu0
      %s1550 = scalar_lea.vmem %s4, 8
      %v1551 = vld [vmem:[%s1550] sm:$0xf]
      %1552 = vrot.lane.b32.xlu0 %v1338, 17
      %v1553 = vpop.permute.xlu0 %1552
      %1554 = vrot.lane.b32.xlu0 %v1339, 17
      %v1555 = vpop.permute.xlu0 %1554
      %1556 = vrot.lane.b32.xlu0 %v1340, 17
      %v1557 = vpop.permute.xlu0 %1556
      %1558 = vrot.lane.b32.xlu0 %v1341, 17
      %v1559 = vpop.permute.xlu0 %1558
      %v1560 = vsel %vm533, %v1553, %v1555
      %v1561 = vsel %vm533, %v1555, %v1557
      %v1562 = vsel %vm533, %v1557, %v1559
      %v1564 = vsel %vm323, %v1551, 0
      %v1567 = vsel %vm327, %v1560, 0
      %v1570 = vsel %vm327, %v1561, 0
      %v1573 = vsel %vm327, %v1562, 0
      %1575 = vmatprep.subr.bf16.mxu0 %v1570
      %1576 = vmatpush1.bf16.msra.mxu0 %v1567
      %1577 = vmatprep.subr.bf16.mxu0 0
      %1578 = vmatpush1.bf16.msra.mxu0 0
      %1579 = vmatprep.subr.bf16.mxu0 0
      %1580 = vmatpush1.bf16.msra.mxu0 0
      %1581 = vmatprep.subr.bf16.mxu0 0
      %1582 = vmatpush1.bf16.msra.mxu0 0
      %1583 = vmatprep.subr.bf16.mxu0 0
      %1584 = vmatpush1.bf16.msra.mxu0 0
      %1585 = vmatprep.subr.bf16.mxu0 0
      %1586 = vmatpush1.bf16.msra.mxu0 0
      %1587 = vmatprep.subr.bf16.mxu0 0
      %1588 = vmatpush1.bf16.msra.mxu0 0
      %1589 = vmatprep.subr.bf16.mxu0 0
      %1590 = vmatpush1.bf16.msra.mxu0 0
      %1591 = vmatprep.subr.bf16.mxu0 0
      %1592 = vmatpush1.bf16.msra.mxu0 0
      %1593 = vmatprep.subr.bf16.mxu0 0
      %1594 = vmatpush1.bf16.msra.mxu0 0
      %1595 = vmatprep.subr.bf16.mxu0 0
      %1596 = vmatpush1.bf16.msra.mxu0 0
      %1597 = vmatprep.subr.bf16.mxu0 0
      %1598 = vmatpush1.bf16.msra.mxu0 0
      %1599 = vmatprep.subr.bf16.mxu0 0
      %1600 = vmatpush1.bf16.msra.mxu0 0
      %1601 = vmatprep.subr.bf16.mxu0 0
      %1602 = vmatpush1.bf16.msra.mxu0 0
      %1603 = vmatprep.subr.bf16.mxu0 0
      %1604 = vmatpush1.bf16.msra.mxu0 0
      %1605 = vmatprep.subr.bf16.mxu0 0
      %1606 = vmatpush1.bf16.msra.mxu0 0
      %1607 = vmatprep.mubr.bf16.mxu0 0
      %1608 = vmatmul.mubr.bf16.gmra.mrb[0].mxu0 %v1564
      %v1609 = vpop.f32.mrb[0].mxu0
      %v1610 = vadd.f32 0.0, %v1609
      %v1611 = vpop.f32.mrb[0].mxu0
      %v1612 = vadd.f32 0.0, %v1611
      %v1613 = vpop.f32.mrb[0].mxu0
      %v1614 = vpop.f32.mrb[0].mxu0
      %1615 = vdwg.mxu0
      %1616 = vmatprep.subr.bf16.mxu0 0
      %1617 = vmatpush1.bf16.msra.mxu0 %v1573
      %1618 = vmatprep.subr.bf16.mxu0 0
      %1619 = vmatpush1.bf16.msra.mxu0 0
      %1620 = vmatprep.subr.bf16.mxu0 0
      %1621 = vmatpush1.bf16.msra.mxu0 0
      %1622 = vmatprep.subr.bf16.mxu0 0
      %1623 = vmatpush1.bf16.msra.mxu0 0
      %1624 = vmatprep.subr.bf16.mxu0 0
      %1625 = vmatpush1.bf16.msra.mxu0 0
      %1626 = vmatprep.subr.bf16.mxu0 0
      %1627 = vmatpush1.bf16.msra.mxu0 0
      %1628 = vmatprep.subr.bf16.mxu0 0
      %1629 = vmatpush1.bf16.msra.mxu0 0
      %1630 = vmatprep.subr.bf16.mxu0 0
      %1631 = vmatpush1.bf16.msra.mxu0 0
      %1632 = vmatprep.subr.bf16.mxu0 0
      %1633 = vmatpush1.bf16.msra.mxu0 0
      %1634 = vmatprep.subr.bf16.mxu0 0
      %1635 = vmatpush1.bf16.msra.mxu0 0
      %1636 = vmatprep.subr.bf16.mxu0 0
      %1637 = vmatpush1.bf16.msra.mxu0 0
      %1638 = vmatprep.subr.bf16.mxu0 0
      %1639 = vmatpush1.bf16.msra.mxu0 0
      %1640 = vmatprep.subr.bf16.mxu0 0
      %1641 = vmatpush1.bf16.msra.mxu0 0
      %1642 = vmatprep.subr.bf16.mxu0 0
      %1643 = vmatpush1.bf16.msra.mxu0 0
      %1644 = vmatprep.subr.bf16.mxu0 0
      %1645 = vmatpush1.bf16.msra.mxu0 0
      %1646 = vmatprep.subr.bf16.mxu0 0
      %1647 = vmatpush1.bf16.msra.mxu0 0
      %1648 = vmatprep.mubr.bf16.mxu0 0
      %1649 = vmatmul.mubr.bf16.gmra.mrb[0].mxu0 %v1564
      %v1650 = vpop.f32.mrb[0].mxu0
      %v1651 = vadd.f32 0.0, %v1650
      %v1652 = vpop.f32.mrb[0].mxu0
      %v1653 = vpop.f32.mrb[0].mxu0
      %v1654 = vpop.f32.mrb[0].mxu0
      %1655 = vdwg.mxu0
      %v1656 = vadd.f32 %v1504, %v1610
      %v1657 = vadd.f32 %v1506, %v1612
      %v1658 = vadd.f32 %v1545, %v1651
      %s1659 = scalar_lea.vmem %s4, 12
      %v1660 = vld [vmem:[%s1659] sm:$0xf]
      %1661 = vrot.lane.b32.xlu0 %v1338, 1
      %v1662 = vpop.permute.xlu0 %1661
      %1663 = vrot.lane.b32.xlu0 %v1339, 1
      %v1664 = vpop.permute.xlu0 %1663
      %1665 = vrot.lane.b32.xlu0 %v1340, 1
      %v1666 = vpop.permute.xlu0 %1665
      %1667 = vrot.lane.b32.xlu0 %v1341, 1
      %v1668 = vpop.permute.xlu0 %1667
      %v1669 = vsel %vm643, %v1662, %v1664
      %v1670 = vsel %vm643, %v1664, %v1666
      %v1671 = vsel %vm643, %v1666, %v1668
      %v1673 = vsel %vm323, %v1660, 0
      %v1676 = vsel %vm327, %v1669, 0
      %v1679 = vsel %vm327, %v1670, 0
      %v1682 = vsel %vm327, %v1671, 0
      %1684 = vmatprep.subr.bf16.mxu0 %v1679
      %1685 = vmatpush1.bf16.msra.mxu0 %v1676
      %1686 = vmatprep.subr.bf16.mxu0 0
      %1687 = vmatpush1.bf16.msra.mxu0 0
      %1688 = vmatprep.subr.bf16.mxu0 0
      %1689 = vmatpush1.bf16.msra.mxu0 0
      %1690 = vmatprep.subr.bf16.mxu0 0
      %1691 = vmatpush1.bf16.msra.mxu0 0
      %1692 = vmatprep.subr.bf16.mxu0 0
      %1693 = vmatpush1.bf16.msra.mxu0 0
      %1694 = vmatprep.subr.bf16.mxu0 0
      %1695 = vmatpush1.bf16.msra.mxu0 0
      %1696 = vmatprep.subr.bf16.mxu0 0
      %1697 = vmatpush1.bf16.msra.mxu0 0
      %1698 = vmatprep.subr.bf16.mxu0 0
      %1699 = vmatpush1.bf16.msra.mxu0 0
      %1700 = vmatprep.subr.bf16.mxu0 0
      %1701 = vmatpush1.bf16.msra.mxu0 0
      %1702 = vmatprep.subr.bf16.mxu0 0
      %1703 = vmatpush1.bf16.msra.mxu0 0
      %1704 = vmatprep.subr.bf16.mxu0 0
      %1705 = vmatpush1.bf16.msra.mxu0 0
      %1706 = vmatprep.subr.bf16.mxu0 0
      %1707 = vmatpush1.bf16.msra.mxu0 0
      %1708 = vmatprep.subr.bf16.mxu0 0
      %1709 = vmatpush1.bf16.msra.mxu0 0
      %1710 = vmatprep.subr.bf16.mxu0 0
      %1711 = vmatpush1.bf16.msra.mxu0 0
      %1712 = vmatprep.subr.bf16.mxu0 0
      %1713 = vmatpush1.bf16.msra.mxu0 0
      %1714 = vmatprep.subr.bf16.mxu0 0
      %1715 = vmatpush1.bf16.msra.mxu0 0
      %1716 = vmatprep.mubr.bf16.mxu0 0
      %1717 = vmatmul.mubr.bf16.gmra.mrb[0].mxu0 %v1673
      %v1718 = vpop.f32.mrb[0].mxu0
      %v1719 = vadd.f32 0.0, %v1718
      %v1720 = vpop.f32.mrb[0].mxu0
      %v1721 = vadd.f32 0.0, %v1720
      %v1722 = vpop.f32.mrb[0].mxu0
      %v1723 = vpop.f32.mrb[0].mxu0
      %1724 = vdwg.mxu0
      %1725 = vmatprep.subr.bf16.mxu0 0
      %1726 = vmatpush1.bf16.msra.mxu0 %v1682
      %1727 = vmatprep.subr.bf16.mxu0 0
      %1728 = vmatpush1.bf16.msra.mxu0 0
      %1729 = vmatprep.subr.bf16.mxu0 0
      %1730 = vmatpush1.bf16.msra.mxu0 0
      %1731 = vmatprep.subr.bf16.mxu0 0
      %1732 = vmatpush1.bf16.msra.mxu0 0
      %1733 = vmatprep.subr.bf16.mxu0 0
      %1734 = vmatpush1.bf16.msra.mxu0 0
      %1735 = vmatprep.subr.bf16.mxu0 0
      %1736 = vmatpush1.bf16.msra.mxu0 0
      %1737 = vmatprep.subr.bf16.mxu0 0
      %1738 = vmatpush1.bf16.msra.mxu0 0
      %1739 = vmatprep.subr.bf16.mxu0 0
      %1740 = vmatpush1.bf16.msra.mxu0 0
      %1741 = vmatprep.subr.bf16.mxu0 0
      %1742 = vmatpush1.bf16.msra.mxu0 0
      %1743 = vmatprep.subr.bf16.mxu0 0
      %1744 = vmatpush1.bf16.msra.mxu0 0
      %1745 = vmatprep.subr.bf16.mxu0 0
      %1746 = vmatpush1.bf16.msra.mxu0 0
      %1747 = vmatprep.subr.bf16.mxu0 0
      %1748 = vmatpush1.bf16.msra.mxu0 0
      %1749 = vmatprep.subr.bf16.mxu0 0
      %1750 = vmatpush1.bf16.msra.mxu0 0
      %1751 = vmatprep.subr.bf16.mxu0 0
      %1752 = vmatpush1.bf16.msra.mxu0 0
      %1753 = vmatprep.subr.bf16.mxu0 0
      %1754 = vmatpush1.bf16.msra.mxu0 0
      %1755 = vmatprep.subr.bf16.mxu0 0
      %1756 = vmatpush1.bf16.msra.mxu0 0
      %1757 = vmatprep.mubr.bf16.mxu0 0
      %1758 = vmatmul.mubr.bf16.gmra.mrb[0].mxu0 %v1673
      %v1759 = vpop.f32.mrb[0].mxu0
      %v1760 = vadd.f32 0.0, %v1759
      %v1761 = vpop.f32.mrb[0].mxu0
      %v1762 = vpop.f32.mrb[0].mxu0
      %v1763 = vpop.f32.mrb[0].mxu0
      %1764 = vdwg.mxu0
      %v1765 = vadd.f32 %v1656, %v1719
      %v1766 = vadd.f32 %v1657, %v1721
      %v1767 = vadd.f32 %v1658, %v1760
      %v1768 = vld [vmem:[#allocation2 + $0x4] sm:$0xff]
      %v1769 = vld [vmem:[#allocation2 + $0xc] sm:$0xf]
      %s1770 = scalar_lea.vmem %s4, 16
      %v1771 = vld [vmem:[%s1770] sm:$0xf]
      %v1774 = vunpack.c.l.b16 %v1768
      %v1775 = vunpack.c.h.b16 %v1768
      %v1776 = vunpack.c.l.b16 %v1769
      %v1777 = vpack.c.b16 %v1774, %v1774
      %v1778 = vpack.c.b16 %v1775, %v1775
      %v1779 = vpack.c.b16 %v1776, %v1776
      %v1781 = vsel %vm323, %v1771, 0
      %v1784 = vsel %vm327, %v1777, 0
      %v1787 = vsel %vm327, %v1778, 0
      %v1790 = vsel %vm327, %v1779, 0
      %1792 = vmatprep.subr.bf16.mxu0 %v1787
      %1793 = vmatpush1.bf16.msra.mxu0 %v1784
      %1794 = vmatprep.subr.bf16.mxu0 0
      %1795 = vmatpush1.bf16.msra.mxu0 0
      %1796 = vmatprep.subr.bf16.mxu0 0
      %1797 = vmatpush1.bf16.msra.mxu0 0
      %1798 = vmatprep.subr.bf16.mxu0 0
      %1799 = vmatpush1.bf16.msra.mxu0 0
      %1800 = vmatprep.subr.bf16.mxu0 0
      %1801 = vmatpush1.bf16.msra.mxu0 0
      %1802 = vmatprep.subr.bf16.mxu0 0
      %1803 = vmatpush1.bf16.msra.mxu0 0
      %1804 = vmatprep.subr.bf16.mxu0 0
      %1805 = vmatpush1.bf16.msra.mxu0 0
      %1806 = vmatprep.subr.bf16.mxu0 0
      %1807 = vmatpush1.bf16.msra.mxu0 0
      %1808 = vmatprep.subr.bf16.mxu0 0
      %1809 = vmatpush1.bf16.msra.mxu0 0
      %1810 = vmatprep.subr.bf16.mxu0 0
      %1811 = vmatpush1.bf16.msra.mxu0 0
      %1812 = vmatprep.subr.bf16.mxu0 0
      %1813 = vmatpush1.bf16.msra.mxu0 0
      %1814 = vmatprep.subr.bf16.mxu0 0
      %1815 = vmatpush1.bf16.msra.mxu0 0
      %1816 = vmatprep.subr.bf16.mxu0 0
      %1817 = vmatpush1.bf16.msra.mxu0 0
      %1818 = vmatprep.subr.bf16.mxu0 0
      %1819 = vmatpush1.bf16.msra.mxu0 0
      %1820 = vmatprep.subr.bf16.mxu0 0
      %1821 = vmatpush1.bf16.msra.mxu0 0
      %1822 = vmatprep.subr.bf16.mxu0 0
      %1823 = vmatpush1.bf16.msra.mxu0 0
      %1824 = vmatprep.mubr.bf16.mxu0 0
      %1825 = vmatmul.mubr.bf16.gmra.mrb[0].mxu0 %v1781
      %v1826 = vpop.f32.mrb[0].mxu0
      %v1827 = vadd.f32 0.0, %v1826
      %v1828 = vpop.f32.mrb[0].mxu0
      %v1829 = vadd.f32 0.0, %v1828
      %v1830 = vpop.f32.mrb[0].mxu0
      %v1831 = vpop.f32.mrb[0].mxu0
      %1832 = vdwg.mxu0
      %1833 = vmatprep.subr.bf16.mxu0 0
      %1834 = vmatpush1.bf16.msra.mxu0 %v1790
      %1835 = vmatprep.subr.bf16.mxu0 0
      %1836 = vmatpush1.bf16.msra.mxu0 0
      %1837 = vmatprep.subr.bf16.mxu0 0
      %1838 = vmatpush1.bf16.msra.mxu0 0
      %1839 = vmatprep.subr.bf16.mxu0 0
      %1840 = vmatpush1.bf16.msra.mxu0 0
      %1841 = vmatprep.subr.bf16.mxu0 0
      %1842 = vmatpush1.bf16.msra.mxu0 0
      %1843 = vmatprep.subr.bf16.mxu0 0
      %1844 = vmatpush1.bf16.msra.mxu0 0
      %1845 = vmatprep.subr.bf16.mxu0 0
      %1846 = vmatpush1.bf16.msra.mxu0 0
      %1847 = vmatprep.subr.bf16.mxu0 0
      %1848 = vmatpush1.bf16.msra.mxu0 0
      %1849 = vmatprep.subr.bf16.mxu0 0
      %1850 = vmatpush1.bf16.msra.mxu0 0
      %1851 = vmatprep.subr.bf16.mxu0 0
      %1852 = vmatpush1.bf16.msra.mxu0 0
      %1853 = vmatprep.subr.bf16.mxu0 0
      %1854 = vmatpush1.bf16.msra.mxu0 0
      %1855 = vmatprep.subr.bf16.mxu0 0
      %1856 = vmatpush1.bf16.msra.mxu0 0
      %1857 = vmatprep.subr.bf16.mxu0 0
      %1858 = vmatpush1.bf16.msra.mxu0 0
      %1859 = vmatprep.subr.bf16.mxu0 0
      %1860 = vmatpush1.bf16.msra.mxu0 0
      %1861 = vmatprep.subr.bf16.mxu0 0
      %1862 = vmatpush1.bf16.msra.mxu0 0
      %1863 = vmatprep.subr.bf16.mxu0 0
      %1864 = vmatpush1.bf16.msra.mxu0 0
      %1865 = vmatprep.mubr.bf16.mxu0 0
      %1866 = vmatmul.mubr.bf16.gmra.mrb[0].mxu0 %v1781
      %v1867 = vpop.f32.mrb[0].mxu0
      %v1868 = vadd.f32 0.0, %v1867
      %v1869 = vpop.f32.mrb[0].mxu0
      %v1870 = vpop.f32.mrb[0].mxu0
      %v1871 = vpop.f32.mrb[0].mxu0
      %1872 = vdwg.mxu0
      %v1873 = vadd.f32 %v1765, %v1827
      %v1874 = vadd.f32 %v1766, %v1829
      %v1875 = vadd.f32 %v1767, %v1868
      %s1876 = scalar_lea.vmem %s4, 20
      %v1877 = vld [vmem:[%s1876] sm:$0xf]
      %1878 = vrot.lane.b32.xlu0 %v1777, 127
      %v1879 = vpop.permute.xlu0 %1878
      %1880 = vrot.lane.b32.xlu0 %v1778, 127
      %v1881 = vpop.permute.xlu0 %1880
      %1882 = vrot.lane.b32.xlu0 %v1779, 127
      %v1883 = vpop.permute.xlu0 %1882
      %v1884 = vsel %vm859, %v1879, %v1881
      %v1885 = vsel %vm859, %v1881, %v1883
      %v1887 = vsel %vm323, %v1877, 0
      %v1890 = vsel %vm327, %v1884, 0
      %v1893 = vsel %vm327, %v1885, 0
      %v1896 = vsel %vm327, %v1883, 0
      %1898 = vmatprep.subr.bf16.mxu0 %v1893
      %1899 = vmatpush1.bf16.msra.mxu0 %v1890
      %1900 = vmatprep.subr.bf16.mxu0 0
      %1901 = vmatpush1.bf16.msra.mxu0 0
      %1902 = vmatprep.subr.bf16.mxu0 0
      %1903 = vmatpush1.bf16.msra.mxu0 0
      %1904 = vmatprep.subr.bf16.mxu0 0
      %1905 = vmatpush1.bf16.msra.mxu0 0
      %1906 = vmatprep.subr.bf16.mxu0 0
      %1907 = vmatpush1.bf16.msra.mxu0 0
      %1908 = vmatprep.subr.bf16.mxu0 0
      %1909 = vmatpush1.bf16.msra.mxu0 0
      %1910 = vmatprep.subr.bf16.mxu0 0
      %1911 = vmatpush1.bf16.msra.mxu0 0
      %1912 = vmatprep.subr.bf16.mxu0 0
      %1913 = vmatpush1.bf16.msra.mxu0 0
      %1914 = vmatprep.subr.bf16.mxu0 0
      %1915 = vmatpush1.bf16.msra.mxu0 0
      %1916 = vmatprep.subr.bf16.mxu0 0
      %1917 = vmatpush1.bf16.msra.mxu0 0
      %1918 = vmatprep.subr.bf16.mxu0 0
      %1919 = vmatpush1.bf16.msra.mxu0 0
      %1920 = vmatprep.subr.bf16.mxu0 0
      %1921 = vmatpush1.bf16.msra.mxu0 0
      %1922 = vmatprep.subr.bf16.mxu0 0
      %1923 = vmatpush1.bf16.msra.mxu0 0
      %1924 = vmatprep.subr.bf16.mxu0 0
      %1925 = vmatpush1.bf16.msra.mxu0 0
      %1926 = vmatprep.subr.bf16.mxu0 0
      %1927 = vmatpush1.bf16.msra.mxu0 0
      %1928 = vmatprep.subr.bf16.mxu0 0
      %1929 = vmatpush1.bf16.msra.mxu0 0
      %1930 = vmatprep.mubr.bf16.mxu0 0
      %1931 = vmatmul.mubr.bf16.gmra.mrb[0].mxu0 %v1887
      %v1932 = vpop.f32.mrb[0].mxu0
      %v1933 = vadd.f32 0.0, %v1932
      %v1934 = vpop.f32.mrb[0].mxu0
      %v1935 = vadd.f32 0.0, %v1934
      %v1936 = vpop.f32.mrb[0].mxu0
      %v1937 = vpop.f32.mrb[0].mxu0
      %1938 = vdwg.mxu0
      %1939 = vmatprep.subr.bf16.mxu0 0
      %1940 = vmatpush1.bf16.msra.mxu0 %v1896
      %1941 = vmatprep.subr.bf16.mxu0 0
      %1942 = vmatpush1.bf16.msra.mxu0 0
      %1943 = vmatprep.subr.bf16.mxu0 0
      %1944 = vmatpush1.bf16.msra.mxu0 0
      %1945 = vmatprep.subr.bf16.mxu0 0
      %1946 = vmatpush1.bf16.msra.mxu0 0
      %1947 = vmatprep.subr.bf16.mxu0 0
      %1948 = vmatpush1.bf16.msra.mxu0 0
      %1949 = vmatprep.subr.bf16.mxu0 0
      %1950 = vmatpush1.bf16.msra.mxu0 0
      %1951 = vmatprep.subr.bf16.mxu0 0
      %1952 = vmatpush1.bf16.msra.mxu0 0
      %1953 = vmatprep.subr.bf16.mxu0 0
      %1954 = vmatpush1.bf16.msra.mxu0 0
      %1955 = vmatprep.subr.bf16.mxu0 0
      %1956 = vmatpush1.bf16.msra.mxu0 0
      %1957 = vmatprep.subr.bf16.mxu0 0
      %1958 = vmatpush1.bf16.msra.mxu0 0
      %1959 = vmatprep.subr.bf16.mxu0 0
      %1960 = vmatpush1.bf16.msra.mxu0 0
      %1961 = vmatprep.subr.bf16.mxu0 0
      %1962 = vmatpush1.bf16.msra.mxu0 0
      %1963 = vmatprep.subr.bf16.mxu0 0
      %1964 = vmatpush1.bf16.msra.mxu0 0
      %1965 = vmatprep.subr.bf16.mxu0 0
      %1966 = vmatpush1.bf16.msra.mxu0 0
      %1967 = vmatprep.subr.bf16.mxu0 0
      %1968 = vmatpush1.bf16.msra.mxu0 0
      %1969 = vmatprep.subr.bf16.mxu0 0
      %1970 = vmatpush1.bf16.msra.mxu0 0
      %1971 = vmatprep.mubr.bf16.mxu0 0
      %1972 = vmatmul.mubr.bf16.gmra.mrb[0].mxu0 %v1887
      %v1973 = vpop.f32.mrb[0].mxu0
      %v1974 = vadd.f32 0.0, %v1973
      %v1975 = vpop.f32.mrb[0].mxu0
      %v1976 = vpop.f32.mrb[0].mxu0
      %v1977 = vpop.f32.mrb[0].mxu0
      %1978 = vdwg.mxu0
      %v1979 = vadd.f32 %v1873, %v1933
      %v1980 = vadd.f32 %v1874, %v1935
      %v1981 = vadd.f32 %v1875, %v1974
      %s1982 = scalar_lea.vmem %s4, 24
      %v1983 = vld [vmem:[%s1982] sm:$0xf]
      %1984 = vrot.lane.b32.xlu0 %v1777, 111
      %v1985 = vpop.permute.xlu0 %1984
      %1986 = vrot.lane.b32.xlu0 %v1778, 111
      %v1987 = vpop.permute.xlu0 %1986
      %1988 = vrot.lane.b32.xlu0 %v1779, 111
      %v1989 = vpop.permute.xlu0 %1988
      %v1990 = vsel %vm966, %v1985, %v1987
      %v1991 = vsel %vm966, %v1987, %v1989
      %v1993 = vsel %vm323, %v1983, 0
      %v1996 = vsel %vm327, %v1990, 0
      %v1999 = vsel %vm327, %v1991, 0
      %v2002 = vsel %vm327, %v1989, 0
      %2004 = vmatprep.subr.bf16.mxu0 %v1999
      %2005 = vmatpush1.bf16.msra.mxu0 %v1996
      %2006 = vmatprep.subr.bf16.mxu0 0
      %2007 = vmatpush1.bf16.msra.mxu0 0
      %2008 = vmatprep.subr.bf16.mxu0 0
      %2009 = vmatpush1.bf16.msra.mxu0 0
      %2010 = vmatprep.subr.bf16.mxu0 0
      %2011 = vmatpush1.bf16.msra.mxu0 0
      %2012 = vmatprep.subr.bf16.mxu0 0
      %2013 = vmatpush1.bf16.msra.mxu0 0
      %2014 = vmatprep.subr.bf16.mxu0 0
      %2015 = vmatpush1.bf16.msra.mxu0 0
      %2016 = vmatprep.subr.bf16.mxu0 0
      %2017 = vmatpush1.bf16.msra.mxu0 0
      %2018 = vmatprep.subr.bf16.mxu0 0
      %2019 = vmatpush1.bf16.msra.mxu0 0
      %2020 = vmatprep.subr.bf16.mxu0 0
      %2021 = vmatpush1.bf16.msra.mxu0 0
      %2022 = vmatprep.subr.bf16.mxu0 0
      %2023 = vmatpush1.bf16.msra.mxu0 0
      %2024 = vmatprep.subr.bf16.mxu0 0
      %2025 = vmatpush1.bf16.msra.mxu0 0
      %2026 = vmatprep.subr.bf16.mxu0 0
      %2027 = vmatpush1.bf16.msra.mxu0 0
      %2028 = vmatprep.subr.bf16.mxu0 0
      %2029 = vmatpush1.bf16.msra.mxu0 0
      %2030 = vmatprep.subr.bf16.mxu0 0
      %2031 = vmatpush1.bf16.msra.mxu0 0
      %2032 = vmatprep.subr.bf16.mxu0 0
      %2033 = vmatpush1.bf16.msra.mxu0 0
      %2034 = vmatprep.subr.bf16.mxu0 0
      %2035 = vmatpush1.bf16.msra.mxu0 0
      %2036 = vmatprep.mubr.bf16.mxu0 0
      %2037 = vmatmul.mubr.bf16.gmra.mrb[0].mxu0 %v1993
      %v2038 = vpop.f32.mrb[0].mxu0
      %v2039 = vadd.f32 0.0, %v2038
      %v2040 = vpop.f32.mrb[0].mxu0
      %v2041 = vadd.f32 0.0, %v2040
      %v2042 = vpop.f32.mrb[0].mxu0
      %v2043 = vpop.f32.mrb[0].mxu0
      %2044 = vdwg.mxu0
      %2045 = vmatprep.subr.bf16.mxu0 0
      %2046 = vmatpush1.bf16.msra.mxu0 %v2002
      %2047 = vmatprep.subr.bf16.mxu0 0
      %2048 = vmatpush1.bf16.msra.mxu0 0
      %2049 = vmatprep.subr.bf16.mxu0 0
      %2050 = vmatpush1.bf16.msra.mxu0 0
      %2051 = vmatprep.subr.bf16.mxu0 0
      %2052 = vmatpush1.bf16.msra.mxu0 0
      %2053 = vmatprep.subr.bf16.mxu0 0
      %2054 = vmatpush1.bf16.msra.mxu0 0
      %2055 = vmatprep.subr.bf16.mxu0 0
      %2056 = vmatpush1.bf16.msra.mxu0 0
      %2057 = vmatprep.subr.bf16.mxu0 0
      %2058 = vmatpush1.bf16.msra.mxu0 0
      %2059 = vmatprep.subr.bf16.mxu0 0
      %2060 = vmatpush1.bf16.msra.mxu0 0
      %2061 = vmatprep.subr.bf16.mxu0 0
      %2062 = vmatpush1.bf16.msra.mxu0 0
      %2063 = vmatprep.subr.bf16.mxu0 0
      %2064 = vmatpush1.bf16.msra.mxu0 0
      %2065 = vmatprep.subr.bf16.mxu0 0
      %2066 = vmatpush1.bf16.msra.mxu0 0
      %2067 = vmatprep.subr.bf16.mxu0 0
      %2068 = vmatpush1.bf16.msra.mxu0 0
      %2069 = vmatprep.subr.bf16.mxu0 0
      %2070 = vmatpush1.bf16.msra.mxu0 0
      %2071 = vmatprep.subr.bf16.mxu0 0
      %2072 = vmatpush1.bf16.msra.mxu0 0
      %2073 = vmatprep.subr.bf16.mxu0 0
      %2074 = vmatpush1.bf16.msra.mxu0 0
      %2075 = vmatprep.subr.bf16.mxu0 0
      %2076 = vmatpush1.bf16.msra.mxu0 0
      %2077 = vmatprep.mubr.bf16.mxu0 0
      %2078 = vmatmul.mubr.bf16.gmra.mrb[0].mxu0 %v1993
      %v2079 = vpop.f32.mrb[0].mxu0
      %v2080 = vadd.f32 0.0, %v2079
      %v2081 = vpop.f32.mrb[0].mxu0
      %v2082 = vpop.f32.mrb[0].mxu0
      %v2083 = vpop.f32.mrb[0].mxu0
      %2084 = vdwg.mxu0
      %v2085 = vadd.f32 %v1979, %v2039
      %v2086 = vadd.f32 %v1980, %v2041
      %v2087 = vadd.f32 %v1981, %v2080
      %s2088 = scalar_lea.vmem %s4, 28
      %v2089 = vld [vmem:[%s2088] sm:$0xf]
      %2090 = vrot.lane.b32.xlu0 %v1777, 110
      %v2091 = vpop.permute.xlu0 %2090
      %2092 = vrot.lane.b32.xlu0 %v1778, 110
      %v2093 = vpop.permute.xlu0 %2092
      %2094 = vrot.lane.b32.xlu0 %v1779, 110
      %v2095 = vpop.permute.xlu0 %2094
      %v2096 = vsel %vm1073, %v2091, %v2093
      %v2097 = vsel %vm1073, %v2093, %v2095
      %v2099 = vsel %vm323, %v2089, 0
      %v2102 = vsel %vm327, %v2096, 0
      %v2105 = vsel %vm327, %v2097, 0
      %v2108 = vsel %vm327, %v2095, 0
      %2110 = vmatprep.subr.bf16.mxu0 %v2105
      %2111 = vmatpush1.bf16.msra.mxu0 %v2102
      %2112 = vmatprep.subr.bf16.mxu0 0
      %2113 = vmatpush1.bf16.msra.mxu0 0
      %2114 = vmatprep.subr.bf16.mxu0 0
      %2115 = vmatpush1.bf16.msra.mxu0 0
      %2116 = vmatprep.subr.bf16.mxu0 0
      %2117 = vmatpush1.bf16.msra.mxu0 0
      %2118 = vmatprep.subr.bf16.mxu0 0
      %2119 = vmatpush1.bf16.msra.mxu0 0
      %2120 = vmatprep.subr.bf16.mxu0 0
      %2121 = vmatpush1.bf16.msra.mxu0 0
      %2122 = vmatprep.subr.bf16.mxu0 0
      %2123 = vmatpush1.bf16.msra.mxu0 0
      %2124 = vmatprep.subr.bf16.mxu0 0
      %2125 = vmatpush1.bf16.msra.mxu0 0
      %2126 = vmatprep.subr.bf16.mxu0 0
      %2127 = vmatpush1.bf16.msra.mxu0 0
      %2128 = vmatprep.subr.bf16.mxu0 0
      %2129 = vmatpush1.bf16.msra.mxu0 0
      %2130 = vmatprep.subr.bf16.mxu0 0
      %2131 = vmatpush1.bf16.msra.mxu0 0
      %2132 = vmatprep.subr.bf16.mxu0 0
      %2133 = vmatpush1.bf16.msra.mxu0 0
      %2134 = vmatprep.subr.bf16.mxu0 0
      %2135 = vmatpush1.bf16.msra.mxu0 0
      %2136 = vmatprep.subr.bf16.mxu0 0
      %2137 = vmatpush1.bf16.msra.mxu0 0
      %2138 = vmatprep.subr.bf16.mxu0 0
      %2139 = vmatpush1.bf16.msra.mxu0 0
      %2140 = vmatprep.subr.bf16.mxu0 0
      %2141 = vmatpush1.bf16.msra.mxu0 0
      %2142 = vmatprep.mubr.bf16.mxu0 0
      %2143 = vmatmul.mubr.bf16.gmra.mrb[0].mxu0 %v2099
      %v2144 = vpop.f32.mrb[0].mxu0
      %v2145 = vadd.f32 0.0, %v2144
      %v2146 = vpop.f32.mrb[0].mxu0
      %v2147 = vadd.f32 0.0, %v2146
      %v2148 = vpop.f32.mrb[0].mxu0
      %v2149 = vpop.f32.mrb[0].mxu0
      %2150 = vdwg.mxu0
      %2151 = vmatprep.subr.bf16.mxu0 0
      %2152 = vmatpush1.bf16.msra.mxu0 %v2108
      %2153 = vmatprep.subr.bf16.mxu0 0
      %2154 = vmatpush1.bf16.msra.mxu0 0
      %2155 = vmatprep.subr.bf16.mxu0 0
      %2156 = vmatpush1.bf16.msra.mxu0 0
      %2157 = vmatprep.subr.bf16.mxu0 0
      %2158 = vmatpush1.bf16.msra.mxu0 0
      %2159 = vmatprep.subr.bf16.mxu0 0
      %2160 = vmatpush1.bf16.msra.mxu0 0
      %2161 = vmatprep.subr.bf16.mxu0 0
      %2162 = vmatpush1.bf16.msra.mxu0 0
      %2163 = vmatprep.subr.bf16.mxu0 0
      %2164 = vmatpush1.bf16.msra.mxu0 0
      %2165 = vmatprep.subr.bf16.mxu0 0
      %2166 = vmatpush1.bf16.msra.mxu0 0
      %2167 = vmatprep.subr.bf16.mxu0 0
      %2168 = vmatpush1.bf16.msra.mxu0 0
      %2169 = vmatprep.subr.bf16.mxu0 0
      %2170 = vmatpush1.bf16.msra.mxu0 0
      %2171 = vmatprep.subr.bf16.mxu0 0
      %2172 = vmatpush1.bf16.msra.mxu0 0
      %2173 = vmatprep.subr.bf16.mxu0 0
      %2174 = vmatpush1.bf16.msra.mxu0 0
      %2175 = vmatprep.subr.bf16.mxu0 0
      %2176 = vmatpush1.bf16.msra.mxu0 0
      %2177 = vmatprep.subr.bf16.mxu0 0
      %2178 = vmatpush1.bf16.msra.mxu0 0
      %2179 = vmatprep.subr.bf16.mxu0 0
      %2180 = vmatpush1.bf16.msra.mxu0 0
      %2181 = vmatprep.subr.bf16.mxu0 0
      %2182 = vmatpush1.bf16.msra.mxu0 0
      %2183 = vmatprep.mubr.bf16.mxu0 0
      %2184 = vmatmul.mubr.bf16.gmra.mrb[0].mxu0 %v2099
      %v2185 = vpop.f32.mrb[0].mxu0
      %v2186 = vadd.f32 0.0, %v2185
      %v2187 = vpop.f32.mrb[0].mxu0
      %v2188 = vpop.f32.mrb[0].mxu0
      %v2189 = vpop.f32.mrb[0].mxu0
      %2190 = vdwg.mxu0
      %v2191 = vadd.f32 %v2085, %v2145
      %v2192 = vadd.f32 %v2086, %v2147
      %v2193 = vadd.f32 %v2087, %v2186
      %s2194 = scalar_lea.vmem %s4, 32
      %v2195 = vld [vmem:[%s2194] sm:$0xf]
      %2196 = vrot.lane.b32.xlu0 %v1777, 109
      %v2197 = vpop.permute.xlu0 %2196
      %2198 = vrot.lane.b32.xlu0 %v1778, 109
      %v2199 = vpop.permute.xlu0 %2198
      %2200 = vrot.lane.b32.xlu0 %v1779, 109
      %v2201 = vpop.permute.xlu0 %2200
      %v2202 = vsel %vm1180, %v2197, %v2199
      %v2203 = vsel %vm1180, %v2199, %v2201
      %v2205 = vsel %vm323, %v2195, 0
      %v2208 = vsel %vm327, %v2202, 0
      %v2211 = vsel %vm327, %v2203, 0
      %v2214 = vsel %vm327, %v2201, 0
      %2216 = vmatprep.subr.bf16.mxu0 %v2211
      %2217 = vmatpush1.bf16.msra.mxu0 %v2208
      %2218 = vmatprep.subr.bf16.mxu0 0
      %2219 = vmatpush1.bf16.msra.mxu0 0
      %2220 = vmatprep.subr.bf16.mxu0 0
      %2221 = vmatpush1.bf16.msra.mxu0 0
      %2222 = vmatprep.subr.bf16.mxu0 0
      %2223 = vmatpush1.bf16.msra.mxu0 0
      %2224 = vmatprep.subr.bf16.mxu0 0
      %2225 = vmatpush1.bf16.msra.mxu0 0
      %2226 = vmatprep.subr.bf16.mxu0 0
      %2227 = vmatpush1.bf16.msra.mxu0 0
      %2228 = vmatprep.subr.bf16.mxu0 0
      %2229 = vmatpush1.bf16.msra.mxu0 0
      %2230 = vmatprep.subr.bf16.mxu0 0
      %2231 = vmatpush1.bf16.msra.mxu0 0
      %2232 = vmatprep.subr.bf16.mxu0 0
      %2233 = vmatpush1.bf16.msra.mxu0 0
      %2234 = vmatprep.subr.bf16.mxu0 0
      %2235 = vmatpush1.bf16.msra.mxu0 0
      %2236 = vmatprep.subr.bf16.mxu0 0
      %2237 = vmatpush1.bf16.msra.mxu0 0
      %2238 = vmatprep.subr.bf16.mxu0 0
      %2239 = vmatpush1.bf16.msra.mxu0 0
      %2240 = vmatprep.subr.bf16.mxu0 0
      %2241 = vmatpush1.bf16.msra.mxu0 0
      %2242 = vmatprep.subr.bf16.mxu0 0
      %2243 = vmatpush1.bf16.msra.mxu0 0
      %2244 = vmatprep.subr.bf16.mxu0 0
      %2245 = vmatpush1.bf16.msra.mxu0 0
      %2246 = vmatprep.subr.bf16.mxu0 0
      %2247 = vmatpush1.bf16.msra.mxu0 0
      %2248 = vmatprep.mubr.bf16.mxu0 0
      %2249 = vmatmul.mubr.bf16.gmra.mrb[0].mxu0 %v2205
      %v2250 = vpop.f32.mrb[0].mxu0
      %v2251 = vadd.f32 0.0, %v2250
      %v2252 = vpop.f32.mrb[0].mxu0
      %v2253 = vadd.f32 0.0, %v2252
      %v2254 = vpop.f32.mrb[0].mxu0
      %v2255 = vpop.f32.mrb[0].mxu0
      %2256 = vdwg.mxu0
      %2257 = vmatprep.subr.bf16.mxu0 0
      %2258 = vmatpush1.bf16.msra.mxu0 %v2214
      %2259 = vmatprep.subr.bf16.mxu0 0
      %2260 = vmatpush1.bf16.msra.mxu0 0
      %2261 = vmatprep.subr.bf16.mxu0 0
      %2262 = vmatpush1.bf16.msra.mxu0 0
      %2263 = vmatprep.subr.bf16.mxu0 0
      %2264 = vmatpush1.bf16.msra.mxu0 0
      %2265 = vmatprep.subr.bf16.mxu0 0
      %2266 = vmatpush1.bf16.msra.mxu0 0
      %2267 = vmatprep.subr.bf16.mxu0 0
      %2268 = vmatpush1.bf16.msra.mxu0 0
      %2269 = vmatprep.subr.bf16.mxu0 0
      %2270 = vmatpush1.bf16.msra.mxu0 0
      %2271 = vmatprep.subr.bf16.mxu0 0
      %2272 = vmatpush1.bf16.msra.mxu0 0
      %2273 = vmatprep.subr.bf16.mxu0 0
      %2274 = vmatpush1.bf16.msra.mxu0 0
      %2275 = vmatprep.subr.bf16.mxu0 0
      %2276 = vmatpush1.bf16.msra.mxu0 0
      %2277 = vmatprep.subr.bf16.mxu0 0
      %2278 = vmatpush1.bf16.msra.mxu0 0
      %2279 = vmatprep.subr.bf16.mxu0 0
      %2280 = vmatpush1.bf16.msra.mxu0 0
      %2281 = vmatprep.subr.bf16.mxu0 0
      %2282 = vmatpush1.bf16.msra.mxu0 0
      %2283 = vmatprep.subr.bf16.mxu0 0
      %2284 = vmatpush1.bf16.msra.mxu0 0
      %2285 = vmatprep.subr.bf16.mxu0 0
      %2286 = vmatpush1.bf16.msra.mxu0 0
      %2287 = vmatprep.subr.bf16.mxu0 0
      %2288 = vmatpush1.bf16.msra.mxu0 0
      %2289 = vmatprep.mubr.bf16.mxu0 0
      %2290 = vmatmul.mubr.bf16.gmra.mrb[0].mxu0 %v2205
      %v2291 = vpop.f32.mrb[0].mxu0
      %v2292 = vadd.f32 0.0, %v2291
      %v2293 = vpop.f32.mrb[0].mxu0
      %v2294 = vpop.f32.mrb[0].mxu0
      %v2295 = vpop.f32.mrb[0].mxu0
      %2296 = vdwg.mxu0
      %v2297 = vadd.f32 %v2191, %v2251
      %v2298 = vadd.f32 %v2192, %v2253
      %v2299 = vadd.f32 %v2193, %v2292
      %v2300 = vld [vmem:[%s5] sm:$0xff]
      %2302 = vset.pattern.permute.xlu0 0
      %2303 = vperm.xlu0 %2302, %v2300
      %v2304 = vpop.permute.xlu0 %2303
      %v2306 = vadd.f32 %v2297, %v2304
      %v2307 = vadd.f32 %v2298, %v2304
      %v2308 = vadd.f32 %v2299, %v2304
      %v2309 = vsub.f32 0.0, %v2306
      %v2310 = vsub.f32 0.0, %v2307
      %v2311 = vsub.f32 0.0, %v2308
      %v2312 = vmul.f32 %v2309, 1.442695
      %v2313 = vpow.pop %v2312
      %v2314 = vmul.f32 %v2310, 1.442695
      %v2315 = vpow.pop %v2314
      %v2316 = vmul.f32 %v2311, 1.442695
      %v2317 = vpow.pop %v2316
      %v2318 = vadd.f32 %v2313, 1.0
      %v2319 = vadd.f32 %v2315, 1.0
      %v2320 = vadd.f32 %v2317, 1.0
      %v2321 = vrcp.pop %v2318
      %v2322 = vmul.f32 1.0, %v2321
      %v2323 = vrcp.pop %v2319
      %v2324 = vmul.f32 1.0, %v2323
      %v2325 = vrcp.pop %v2320
      %v2326 = vmul.f32 1.0, %v2325
      %v2327 = vmul.f32 %v2306, %v2322
      %v2328 = vmul.f32 %v2307, %v2324
      %v2329 = vmul.f32 %v2308, %v2326
      %v2330 = vadd.f32 %v256, %v2327
      %v2331 = vadd.f32 %v257, %v2328
      %v2332 = vadd.f32 %v258, %v2329
      %v2333 = vpack.c.bf16 %v2330, %v2330
      %v2334 = vpack.c.bf16 %v2331, %v2331
      %v2335 = vpack.c.bf16 %v2332, %v2332
      %v2339 = vunpack.c.l.b16 %v2333
      %v2340 = vunpack.c.l.b16 %v2334
      %v2341 = vunpack.c.l.b16 %v2335
      %v2342 = vpack.c.b16 %v2340, %v2339
      %v2343 = vpack.c.b16 %v2341, %v2341
      %2346 = vst [vmem:[%s251] sm:$0xff] %v2342
      %2347 = vst.msk [vmem:[%s251 + $0x8] sm:$0xf] %vm294, %v2343
      %p2348 = scmp.lt.s32.totalorder %s17, 1
      %s2349 = scalar_select %p2348, %s17, 1
      %s2350 = smul.addr %s2349, 3
      %s2351 = smul.addr %s2350, 4
      %s2352 = scalar_lea.vmem %s6, %s2351
      // Predicated region
      $region45: #{c2_forward.4} parent=43 // pred_check
        %p2353 = pneg %p166
      $region46: #{c2_forward.4} parent=43 // pred_check_branch
        %2355 = sbr.rel (%p2353) target = $region48
      $region47: #{c2_forward.4} parent=43 // pred_region
        _
      $region48: #{c2_forward.4} parent=43 // pred_fallthru
        _
    $region44: #{c2_forward.4} parent=5 // pred_fallthru
      _
    %p2356 = scmp.le.s32.totalorder 2, %s12
    // Predicated region
    $region49: #{c2_forward.4} parent=5 // pred_check
      %p2357 = pneg %p2356
    $region50: #{c2_forward.4} parent=5 // pred_check_branch
      %2359 = sbr.rel (%p2357) target = $region52
    $region51: #{c2_forward.4} parent=5 // pred_region
      %s2360 = ssub.s32 %s12, 2
      // Predicated region
      $region53: #{c2_forward.4} parent=51 // pred_check
        %p2361 = pneg %p172
      $region54: #{c2_forward.4} parent=51 // pred_check_branch
        %2363 = sbr.rel (%p2361) target = $region56
      $region55: #{c2_forward.4} parent=51 // pred_region
        %p2364 = scmp.lt.s32.totalorder %s18, 1
        %s2365 = scalar_select %p2364, %s18, 1
        %s2366 = smul.addr %s2365, 3
        %s2367 = smul.addr %s2366, 4
        %s2368 = scalar_lea.vmem %s6, %s2367
      $region56: #{c2_forward.4} parent=51 // pred_fallthru
        _
    $region52: #{c2_forward.4} parent=5 // pred_fallthru
      _
  $region6: #{c2_forward.4} parent=0 // loop_footer
    %s16 = sadd.s32 1, %s12
  $region7: #{c2_forward.4} parent=0 // loop_footer_branch
    %11 = sbr.rel target = $region3
  $region8: #{c2_forward.4} parent=0 // loop_exit
    _

</llo_original>
